<compile_context>
chip_gen: v6e
topology: v6e:2x2x1
jax: 0.10.0
libtpu: 0.0.40
codegen_flags: <defaults>
</compile_context>

<pallas_src>
import functools

import jax
import jax.numpy as jnp
from jax import lax
from jax.experimental import pallas as pl
from jax.experimental.pallas import tpu as pltpu

# Small, self-consistent hyper-parameters (module allows Block(n_embed, n_head))
N_EMBED = 128
N_HEAD = 4
HEAD_SIZE = N_EMBED // N_HEAD
SEQ_LEN = 64          # T (<= block_size, so tril[:T,:T] == full causal mask)
BATCH = 2
LN_EPS = 1e-5


def _layernorm(x, g, b):
    mu = jnp.mean(x, axis=-1, keepdims=True)
    var = jnp.mean((x - mu) ** 2, axis=-1, keepdims=True)   # biased, like PyTorch
    return (x - mu) * lax.rsqrt(var + LN_EPS) * g + b


def block_kernel(x_ref, mask_ref,
                 ln1_g_ref, ln1_b_ref,
                 wqkv_ref, wp_ref, bp_ref,
                 ln2_g_ref, ln2_b_ref,
                 w1_ref, b1_ref, w2_ref, b2_ref,
                 o_ref, *, n_head):
    Bb, T, C = x_ref.shape          # batch slab handled by this grid step
    H = n_head
    D = C // H
    N = Bb * T

    x = x_ref[...].reshape(N, C)                                   # (N, C) f32

    # ---- x + sa(ln1(x)) ----
    h = _layernorm(x, ln1_g_ref[...], ln1_b_ref[...]).astype(jnp.bfloat16)

    # Fused QKV: one lane-dense MXU matmul, bf16 in / f32 accumulate.
    qkv = jnp.dot(h, wqkv_ref[...],
                  preferred_element_type=jnp.float32)              # (N, 3C) f32

    scale = jnp.float32(C) ** -0.5   # reference quirk: n_embed**-0.5
    q = (qkv[:, :C] * scale).astype(jnp.bfloat16)                  # scale folded into q
    k = qkv[:, C:2 * C].astype(jnp.bfloat16)
    v = qkv[:, 2 * C:].astype(jnp.bfloat16)

    # Split heads into a combined (batch*head) leading batch dim: (Z, T, D),
    # z = h*Bb + b.  This is layout plumbing only — all matmuls below are single
    # batched einsums (no per-head / per-batch matmul loop).
    def to_heads(t):
        return jnp.concatenate(
            [t[:, i * D:(i + 1) * D].reshape(Bb, T, D) for i in range(H)],
            axis=0)                                                # (H*Bb, T, D)

    qh, kh, vh = to_heads(q), to_heads(k), to_heads(v)

    s = jnp.einsum('ztd,zsd->zts', qh, kh,
                   preferred_element_type=jnp.float32)             # (Z, T, T) f32
    s = s + mask_ref[...][None]                                    # additive causal bias
    s = s - jnp.max(s, axis=-1, keepdims=True)
    p = jnp.exp(s)
    p = p * pl.reciprocal(jnp.sum(p, axis=-1, keepdims=True), approx=False)
    attn = jnp.einsum('zts,zsd->ztd', p.astype(jnp.bfloat16), vh,
                      preferred_element_type=jnp.float32)          # (Z, T, D)

    # Re-pack heads to a lane-dense (N, C) slab; output projection is one
    # full-K MXU matmul (no (H, N, C) intermediate, no head-sum on the VPU).
    attn_nc = jnp.concatenate(
        [attn[i * Bb:(i + 1) * Bb].reshape(N, D) for i in range(H)],
        axis=1).astype(jnp.bfloat16)                               # (N, C)
    sa = jnp.dot(attn_nc, wp_ref[...],
                 preferred_element_type=jnp.float32) + bp_ref[...]
    x1 = x + sa

    # ---- x + ffwd(ln2(x)) ----
    h2 = _layernorm(x1, ln2_g_ref[...], ln2_b_ref[...]).astype(jnp.bfloat16)
    f = jnp.dot(h2, w1_ref[...], preferred_element_type=jnp.float32) + b1_ref[...]
    f = jnp.maximum(f, 0.0).astype(jnp.bfloat16)
    f = jnp.dot(f, w2_ref[...], preferred_element_type=jnp.float32) + b2_ref[...]

    o_ref[...] = (x1 + f).reshape(Bb, T, C).astype(o_ref.dtype)


def pack_params(params):
    """One-time wrapper-side layout plumbing: fused bf16 QKV weight + bf16 MXU
    operands.  Call once; do NOT redo this per step."""
    (ln1_g, ln1_b, wq, wk, wv, wp, bp, ln2_g, ln2_b, w1, b1, w2, b2) = params
    wqkv = jnp.concatenate([wq, wk, wv], axis=1).astype(jnp.bfloat16)   # (C, 3C)
    return [ln1_g, ln1_b, wqkv, wp.astype(jnp.bfloat16), bp,
            ln2_g, ln2_b, w1.astype(jnp.bfloat16), b1,
            w2.astype(jnp.bfloat16), b2]


def transformer_block(x, packed_params, *, n_head=N_HEAD, batch_block=None):
    """batch_block=None -> whole batch per grid step (single-TC v5e/v6e: best
    MXU fill, no per-step overhead).  On dual-TC v7x pass batch_block=B//2 so
    the 'parallel' grid axis puts half the batch on each TensorCore (keep
    batch_block*T >= 128)."""
    B, T, C = x.shape
    if batch_block is None:
        batch_block = B
    assert B % batch_block == 0
    grid = (B // batch_block,)

    # Additive causal bias built once outside the kernel and passed as a tiny
    # VMEM input (no per-step iota/where work).
    tril = jnp.tril(jnp.ones((T, T), dtype=bool))
    mask_bias = jnp.where(tril, 0.0, -jnp.inf).astype(jnp.float32)

    args = [x, mask_bias] + list(packed_params)

    def fixed(a):                    # whole array, constant index_map
        z = (0,) * a.ndim
        return pl.BlockSpec(a.shape, lambda i, _z=z: _z)

    in_specs = [pl.BlockSpec((batch_block, T, C), lambda i: (i, 0, 0))] + \
               [fixed(a) for a in args[1:]]

    kernel = functools.partial(block_kernel, n_head=n_head)

    return pl.pallas_call(
        kernel,
        out_shape=jax.ShapeDtypeStruct((B, T, C), x.dtype),
        grid=grid,
        in_specs=in_specs,
        out_specs=pl.BlockSpec((batch_block, T, C), lambda i: (i, 0, 0)),
        compiler_params=pltpu.CompilerParams(dimension_semantics=("parallel",)),
    )(*args)


def init_params(key, C, H):
    """Deterministic synthetic parameters (weights stored as (in, out))."""
    ks = jax.random.split(key, 8)
    s = 0.02
    ln1_g = jnp.ones((1, C), jnp.float32)
    ln1_b = jnp.zeros((1, C), jnp.float32)
    wq = jax.random.normal(ks[0], (C, C), jnp.float32) * s
    wk = jax.random.normal(ks[1], (C, C), jnp.float32) * s
    wv = jax.random.normal(ks[2], (C, C), jnp.float32) * s
    wp = jax.random.normal(ks[3], (C, C), jnp.float32) * s
    bp = jax.random.normal(ks[4], (1, C), jnp.float32) * s
    ln2_g = jnp.ones((1, C), jnp.float32)
    ln2_b = jnp.zeros((1, C), jnp.float32)
    w1 = jax.random.normal(ks[5], (C, H), jnp.float32) * s
    b1 = jax.random.normal(ks[6], (1, H), jnp.float32) * s
    w2 = jax.random.normal(ks[7], (H, C), jnp.float32) * s
    b2 = jnp.zeros((1, C), jnp.float32)
    return [ln1_g, ln1_b, wq, wk, wv, wp, bp, ln2_g, ln2_b, w1, b1, w2, b2]


def reference_block(x, params):
    """Pure-JAX f32 reference mirroring the PyTorch forward pass."""
    (ln1_g, ln1_b, wq, wk, wv, wp, bp, ln2_g, ln2_b, w1, b1, w2, b2) = params
    B, T, C = x.shape

    def ln(v, g, b):
        mu = jnp.mean(v, axis=-1, keepdims=True)
        var = jnp.mean((v - mu) ** 2, axis=-1, keepdims=True)
        return (v - mu) / jnp.sqrt(var + LN_EPS) * g[0] + b[0]

    h = ln(x, ln1_g, ln1_b)
    q = (h @ wq).reshape(B, T, N_HEAD, HEAD_SIZE)
    k = (h @ wk).reshape(B, T, N_HEAD, HEAD_SIZE)
    v = (h @ wv).reshape(B, T, N_HEAD, HEAD_SIZE)
    wei = jnp.einsum("bthd,bshd->bhts", q, k) * C ** (-0.5)
    mask = jnp.tril(jnp.ones((T, T), bool))
    wei = jnp.where(mask, wei, -jnp.inf)
    wei = jax.nn.softmax(wei, axis=-1)
    out = jnp.einsum("bhts,bshd->bthd", wei, v).reshape(B, T, C)
    sa = out @ wp + bp[0]
    x1 = x + sa
    h2 = ln(x1, ln2_g, ln2_b)
    f = jnp.maximum(h2 @ w1 + b1[0], 0.0) @ w2 + b2[0]
    return x1 + f


if __name__ == "__main__":
    key = jax.random.PRNGKey(0)
    kx, kp = jax.random.split(key)
    x = jax.random.normal(kx, (BATCH, SEQ_LEN, N_EMBED), jnp.float32)
    params = init_params(kp, N_EMBED, 4 * N_EMBED)
    packed = pack_params(params)     # one-time weight packing (fused bf16 QKV)

    out = transformer_block(x, packed)
    out = jax.block_until_ready(out)

    ref = reference_block(x, params)
    assert out.shape == ref.shape == (BATCH, SEQ_LEN, N_EMBED)
    # Kernel feeds the MXU bf16 operands (f32 accumulation); reference is pure f32.
    assert jnp.allclose(out, ref, rtol=2e-3, atol=2e-3), "mismatch vs JAX reference"

    print("KERNEL_OK")
</pallas_src>

<mosaic_0001>
module attributes {stable_mosaic.version = 11 : i64} {
  func.func @block_kernel(%arg0: i32, %arg1: memref<2x64x128xf32, #tpu.memory_space<vmem>>, %arg2: memref<64x64xf32, #tpu.memory_space<vmem>>, %arg3: memref<1x128xf32, #tpu.memory_space<vmem>>, %arg4: memref<1x128xf32, #tpu.memory_space<vmem>>, %arg5: memref<128x384xbf16, #tpu.memory_space<vmem>>, %arg6: memref<128x128xbf16, #tpu.memory_space<vmem>>, %arg7: memref<1x128xf32, #tpu.memory_space<vmem>>, %arg8: memref<1x128xf32, #tpu.memory_space<vmem>>, %arg9: memref<1x128xf32, #tpu.memory_space<vmem>>, %arg10: memref<128x512xbf16, #tpu.memory_space<vmem>>, %arg11: memref<1x512xf32, #tpu.memory_space<vmem>>, %arg12: memref<512x128xbf16, #tpu.memory_space<vmem>>, %arg13: memref<1x128xf32, #tpu.memory_space<vmem>>, %arg14: memref<2x64x128xf32, #tpu.memory_space<vmem>>) attributes {dimension_semantics = [#tpu.dimension_semantics<parallel>], iteration_bounds = array<i64: 1>, scalar_prefetch = 0 : i64, scratch_operands = 0 : i64, tpu.core_type = #tpu.core_type<tc>, window_params = [{transform_indices = @transform_0, window_bounds = array<i64: 2, 64, 128>}, {pipeline_mode = #tpu.pipeline_mode<synchronous>, transform_indices = @transform_1, window_bounds = array<i64: 64, 64>}, {pipeline_mode = #tpu.pipeline_mode<synchronous>, transform_indices = @transform_2, window_bounds = array<i64: 1, 128>}, {pipeline_mode = #tpu.pipeline_mode<synchronous>, transform_indices = @transform_3, window_bounds = array<i64: 1, 128>}, {pipeline_mode = #tpu.pipeline_mode<synchronous>, transform_indices = @transform_4, window_bounds = array<i64: 128, 384>}, {pipeline_mode = #tpu.pipeline_mode<synchronous>, transform_indices = @transform_5, window_bounds = array<i64: 128, 128>}, {pipeline_mode = #tpu.pipeline_mode<synchronous>, transform_indices = @transform_6, window_bounds = array<i64: 1, 128>}, {pipeline_mode = #tpu.pipeline_mode<synchronous>, transform_indices = @transform_7, window_bounds = array<i64: 1, 128>}, {pipeline_mode = #tpu.pipeline_mode<synchronous>, transform_indices = @transform_8, window_bounds = array<i64: 1, 128>}, {pipeline_mode = #tpu.pipeline_mode<synchronous>, transform_indices = @transform_9, window_bounds = array<i64: 128, 512>}, {pipeline_mode = #tpu.pipeline_mode<synchronous>, transform_indices = @transform_10, window_bounds = array<i64: 1, 512>}, {pipeline_mode = #tpu.pipeline_mode<synchronous>, transform_indices = @transform_11, window_bounds = array<i64: 512, 128>}, {pipeline_mode = #tpu.pipeline_mode<synchronous>, transform_indices = @transform_12, window_bounds = array<i64: 1, 128>}, {transform_indices = @transform_13, window_bounds = array<i64: 2, 64, 128>}]} {
    %c0 = arith.constant 0 : index
    %c0_0 = arith.constant 0 : index
    %c0_1 = arith.constant 0 : index
    %0 = vector.load %arg1[%c0, %c0_0, %c0_1] : memref<2x64x128xf32, #tpu.memory_space<vmem>>, vector<2x64x128xf32>
    %1 = vector.shape_cast %0 : vector<2x64x128xf32> to vector<128x128xf32>
    %c0_2 = arith.constant 0 : index
    %c0_3 = arith.constant 0 : index
    %2 = vector.load %arg3[%c0_2, %c0_3] : memref<1x128xf32, #tpu.memory_space<vmem>>, vector<1x128xf32>
    %c0_4 = arith.constant 0 : index
    %c0_5 = arith.constant 0 : index
    %3 = vector.load %arg4[%c0_4, %c0_5] : memref<1x128xf32, #tpu.memory_space<vmem>>, vector<1x128xf32>
    %cst = arith.constant dense<0.000000e+00> : vector<128xf32>
    %4 = vector.multi_reduction <add>, %1, %cst [1] : vector<128x128xf32> to vector<128xf32>
    %5 = vector.shape_cast %4 : vector<128xf32> to vector<128x1xf32>
    %cst_6 = arith.constant 1.280000e+02 : f32
    %6 = vector.broadcast %cst_6 : f32 to vector<128x1xf32>
    %7 = arith.divf %5, %6 : vector<128x1xf32>
    %8 = vector.broadcast %7 : vector<128x1xf32> to vector<128x128xf32>
    %9 = arith.subf %1, %8 : vector<128x128xf32>
    %10 = arith.mulf %9, %9 : vector<128x128xf32>
    %cst_7 = arith.constant dense<0.000000e+00> : vector<128xf32>
    %11 = vector.multi_reduction <add>, %10, %cst_7 [1] : vector<128x128xf32> to vector<128xf32>
    %12 = vector.shape_cast %11 : vector<128xf32> to vector<128x1xf32>
    %cst_8 = arith.constant 1.280000e+02 : f32
    %13 = vector.broadcast %cst_8 : f32 to vector<128x1xf32>
    %14 = arith.divf %12, %13 : vector<128x1xf32>
    %15 = vector.broadcast %7 : vector<128x1xf32> to vector<128x128xf32>
    %16 = arith.subf %1, %15 : vector<128x128xf32>
    %cst_9 = arith.constant 9.99999974E-6 : f32
    %17 = vector.broadcast %cst_9 : f32 to vector<128x1xf32>
    %18 = arith.addf %14, %17 : vector<128x1xf32>
    %19 = math.rsqrt %18 : vector<128x1xf32>
    %20 = vector.broadcast %19 : vector<128x1xf32> to vector<128x128xf32>
    %21 = arith.mulf %16, %20 : vector<128x128xf32>
    %22 = vector.broadcast %2 : vector<1x128xf32> to vector<128x128xf32>
    %23 = arith.mulf %21, %22 : vector<128x128xf32>
    %24 = vector.broadcast %3 : vector<1x128xf32> to vector<128x128xf32>
    %25 = arith.addf %23, %24 : vector<128x128xf32>
    %26 = arith.truncf %25 : vector<128x128xf32> to vector<128x128xbf16>
    %c0_10 = arith.constant 0 : index
    %c0_11 = arith.constant 0 : index
    %27 = vector.load %arg5[%c0_10, %c0_11] : memref<128x384xbf16, #tpu.memory_space<vmem>>, vector<128x384xbf16>
    %cst_12 = arith.constant dense<0.000000e+00> : vector<128x384xf32>
    %28 = tpu.matmul %26, %27, %cst_12 {dimension_numbers = #tpu.dot_dimension_numbers<[1], [0], [0], [1], [0, 0, 1, 1], [], []>} : vector<128x128xbf16>, vector<128x384xbf16>, vector<128x384xf32> -> vector<128x384xf32>
    %cst_13 = arith.constant 1.280000e+02 : f32
    %cst_14 = arith.constant -5.000000e-01 : f32
    %29 = math.powf %cst_13, %cst_14 : f32
    %30 = vector.extract_strided_slice %28 {offsets = [0, 0], sizes = [128, 128], strides = [1, 1]} : vector<128x384xf32> to vector<128x128xf32>
    %31 = vector.broadcast %29 : f32 to vector<128x128xf32>
    %32 = arith.mulf %30, %31 : vector<128x128xf32>
    %33 = arith.truncf %32 : vector<128x128xf32> to vector<128x128xbf16>
    %34 = vector.extract_strided_slice %28 {offsets = [0, 128], sizes = [128, 128], strides = [1, 1]} : vector<128x384xf32> to vector<128x128xf32>
    %35 = arith.truncf %34 : vector<128x128xf32> to vector<128x128xbf16>
    %36 = vector.extract_strided_slice %28 {offsets = [0, 256], sizes = [128, 128], strides = [1, 1]} : vector<128x384xf32> to vector<128x128xf32>
    %37 = arith.truncf %36 : vector<128x128xf32> to vector<128x128xbf16>
    %38 = vector.extract_strided_slice %33 {offsets = [0, 0], sizes = [128, 32], strides = [1, 1]} : vector<128x128xbf16> to vector<128x32xbf16>
    %39 = vector.shape_cast %38 : vector<128x32xbf16> to vector<2x64x32xbf16>
    %40 = vector.extract_strided_slice %33 {offsets = [0, 32], sizes = [128, 32], strides = [1, 1]} : vector<128x128xbf16> to vector<128x32xbf16>
    %41 = vector.shape_cast %40 : vector<128x32xbf16> to vector<2x64x32xbf16>
    %42 = vector.extract_strided_slice %33 {offsets = [0, 64], sizes = [128, 32], strides = [1, 1]} : vector<128x128xbf16> to vector<128x32xbf16>
    %43 = vector.shape_cast %42 : vector<128x32xbf16> to vector<2x64x32xbf16>
    %44 = vector.extract_strided_slice %33 {offsets = [0, 96], sizes = [128, 32], strides = [1, 1]} : vector<128x128xbf16> to vector<128x32xbf16>
    %45 = vector.shape_cast %44 : vector<128x32xbf16> to vector<2x64x32xbf16>
    %46 = tpu.concatenate %39, %41, %43, %45 in 0 : vector<2x64x32xbf16>, vector<2x64x32xbf16>, vector<2x64x32xbf16>, vector<2x64x32xbf16> -> vector<8x64x32xbf16>
    %47 = vector.extract_strided_slice %35 {offsets = [0, 0], sizes = [128, 32], strides = [1, 1]} : vector<128x128xbf16> to vector<128x32xbf16>
    %48 = vector.shape_cast %47 : vector<128x32xbf16> to vector<2x64x32xbf16>
    %49 = vector.extract_strided_slice %35 {offsets = [0, 32], sizes = [128, 32], strides = [1, 1]} : vector<128x128xbf16> to vector<128x32xbf16>
    %50 = vector.shape_cast %49 : vector<128x32xbf16> to vector<2x64x32xbf16>
    %51 = vector.extract_strided_slice %35 {offsets = [0, 64], sizes = [128, 32], strides = [1, 1]} : vector<128x128xbf16> to vector<128x32xbf16>
    %52 = vector.shape_cast %51 : vector<128x32xbf16> to vector<2x64x32xbf16>
    %53 = vector.extract_strided_slice %35 {offsets = [0, 96], sizes = [128, 32], strides = [1, 1]} : vector<128x128xbf16> to vector<128x32xbf16>
    %54 = vector.shape_cast %53 : vector<128x32xbf16> to vector<2x64x32xbf16>
    %55 = tpu.concatenate %48, %50, %52, %54 in 0 : vector<2x64x32xbf16>, vector<2x64x32xbf16>, vector<2x64x32xbf16>, vector<2x64x32xbf16> -> vector<8x64x32xbf16>
    %56 = vector.extract_strided_slice %37 {offsets = [0, 0], sizes = [128, 32], strides = [1, 1]} : vector<128x128xbf16> to vector<128x32xbf16>
    %57 = vector.shape_cast %56 : vector<128x32xbf16> to vector<2x64x32xbf16>
    %58 = vector.extract_strided_slice %37 {offsets = [0, 32], sizes = [128, 32], strides = [1, 1]} : vector<128x128xbf16> to vector<128x32xbf16>
    %59 = vector.shape_cast %58 : vector<128x32xbf16> to vector<2x64x32xbf16>
    %60 = vector.extract_strided_slice %37 {offsets = [0, 64], sizes = [128, 32], strides = [1, 1]} : vector<128x128xbf16> to vector<128x32xbf16>
    %61 = vector.shape_cast %60 : vector<128x32xbf16> to vector<2x64x32xbf16>
    %62 = vector.extract_strided_slice %37 {offsets = [0, 96], sizes = [128, 32], strides = [1, 1]} : vector<128x128xbf16> to vector<128x32xbf16>
    %63 = vector.shape_cast %62 : vector<128x32xbf16> to vector<2x64x32xbf16>
    %64 = tpu.concatenate %57, %59, %61, %63 in 0 : vector<2x64x32xbf16>, vector<2x64x32xbf16>, vector<2x64x32xbf16>, vector<2x64x32xbf16> -> vector<8x64x32xbf16>
    "tpu.trace_start"() <{level = 10 : i32, message = "ztd,zsd->zts"}> : () -> ()
    %cst_15 = arith.constant dense<0.000000e+00> : vector<8x64x64xf32>
    %65 = tpu.matmul %46, %55, %cst_15 {dimension_numbers = #tpu.dot_dimension_numbers<[2], [2], [1], [1], [0, 0, 0, 1, 1, 1], [0], [0]>} : vector<8x64x32xbf16>, vector<8x64x32xbf16>, vector<8x64x64xf32> -> vector<8x64x64xf32>
    "tpu.trace_stop"() : () -> ()
    %c0_16 = arith.constant 0 : index
    %c0_17 = arith.constant 0 : index
    %66 = vector.load %arg2[%c0_16, %c0_17] : memref<64x64xf32, #tpu.memory_space<vmem>>, vector<64x64xf32>
    %67 = vector.shape_cast %66 : vector<64x64xf32> to vector<1x64x64xf32>
    %68 = vector.broadcast %67 : vector<1x64x64xf32> to vector<8x64x64xf32>
    %69 = arith.addf %65, %68 : vector<8x64x64xf32>
    %cst_18 = arith.constant dense<0xFF800000> : vector<8x64xf32>
    %70 = vector.multi_reduction <maximumf>, %69, %cst_18 [2] : vector<8x64x64xf32> to vector<8x64xf32>
    %71 = vector.shape_cast %70 : vector<8x64xf32> to vector<8x64x1xf32>
    %72 = vector.broadcast %71 : vector<8x64x1xf32> to vector<8x64x64xf32>
    %73 = arith.subf %69, %72 : vector<8x64x64xf32>
    %74 = math.exp %73 : vector<8x64x64xf32>
    %cst_19 = arith.constant dense<0.000000e+00> : vector<8x64xf32>
    %75 = vector.multi_reduction <add>, %74, %cst_19 [2] : vector<8x64x64xf32> to vector<8x64xf32>
    %76 = vector.shape_cast %75 : vector<8x64xf32> to vector<8x64x1xf32>
    %77 = tpu.reciprocal %76 : vector<8x64x1xf32> -> vector<8x64x1xf32>
    %78 = vector.broadcast %77 : vector<8x64x1xf32> to vector<8x64x64xf32>
    %79 = arith.mulf %74, %78 : vector<8x64x64xf32>
    %80 = arith.truncf %79 : vector<8x64x64xf32> to vector<8x64x64xbf16>
    "tpu.trace_start"() <{level = 10 : i32, message = "zts,zsd->ztd"}> : () -> ()
    %cst_20 = arith.constant dense<0.000000e+00> : vector<8x64x32xf32>
    %81 = tpu.matmul %80, %64, %cst_20 {dimension_numbers = #tpu.dot_dimension_numbers<[2], [1], [1], [2], [0, 0, 0, 1, 1, 2], [0], [0]>} : vector<8x64x64xbf16>, vector<8x64x32xbf16>, vector<8x64x32xf32> -> vector<8x64x32xf32>
    "tpu.trace_stop"() : () -> ()
    %82 = vector.extract_strided_slice %81 {offsets = [0, 0, 0], sizes = [2, 64, 32], strides = [1, 1, 1]} : vector<8x64x32xf32> to vector<2x64x32xf32>
    %83 = vector.shape_cast %82 : vector<2x64x32xf32> to vector<128x32xf32>
    %84 = vector.extract_strided_slice %81 {offsets = [2, 0, 0], sizes = [2, 64, 32], strides = [1, 1, 1]} : vector<8x64x32xf32> to vector<2x64x32xf32>
    %85 = vector.shape_cast %84 : vector<2x64x32xf32> to vector<128x32xf32>
    %86 = vector.extract_strided_slice %81 {offsets = [4, 0, 0], sizes = [2, 64, 32], strides = [1, 1, 1]} : vector<8x64x32xf32> to vector<2x64x32xf32>
    %87 = vector.shape_cast %86 : vector<2x64x32xf32> to vector<128x32xf32>
    %88 = vector.extract_strided_slice %81 {offsets = [6, 0, 0], sizes = [2, 64, 32], strides = [1, 1, 1]} : vector<8x64x32xf32> to vector<2x64x32xf32>
    %89 = vector.shape_cast %88 : vector<2x64x32xf32> to vector<128x32xf32>
    %90 = tpu.concatenate %83, %85, %87, %89 in 1 : vector<128x32xf32>, vector<128x32xf32>, vector<128x32xf32>, vector<128x32xf32> -> vector<128x128xf32>
    %91 = arith.truncf %90 : vector<128x128xf32> to vector<128x128xbf16>
    %c0_21 = arith.constant 0 : index
    %c0_22 = arith.constant 0 : index
    %92 = vector.load %arg6[%c0_21, %c0_22] : memref<128x128xbf16, #tpu.memory_space<vmem>>, vector<128x128xbf16>
    %cst_23 = arith.constant dense<0.000000e+00> : vector<128x128xf32>
    %93 = tpu.matmul %91, %92, %cst_23 {dimension_numbers = #tpu.dot_dimension_numbers<[1], [0], [0], [1], [0, 0, 1, 1], [], []>} : vector<128x128xbf16>, vector<128x128xbf16>, vector<128x128xf32> -> vector<128x128xf32>
    %c0_24 = arith.constant 0 : index
    %c0_25 = arith.constant 0 : index
    %94 = vector.load %arg7[%c0_24, %c0_25] : memref<1x128xf32, #tpu.memory_space<vmem>>, vector<1x128xf32>
    %95 = vector.broadcast %94 : vector<1x128xf32> to vector<128x128xf32>
    %96 = arith.addf %93, %95 : vector<128x128xf32>
    %97 = arith.addf %1, %96 : vector<128x128xf32>
    %c0_26 = arith.constant 0 : index
    %c0_27 = arith.constant 0 : index
    %98 = vector.load %arg8[%c0_26, %c0_27] : memref<1x128xf32, #tpu.memory_space<vmem>>, vector<1x128xf32>
    %c0_28 = arith.constant 0 : index
    %c0_29 = arith.constant 0 : index
    %99 = vector.load %arg9[%c0_28, %c0_29] : memref<1x128xf32, #tpu.memory_space<vmem>>, vector<1x128xf32>
    %cst_30 = arith.constant dense<0.000000e+00> : vector<128xf32>
    %100 = vector.multi_reduction <add>, %97, %cst_30 [1] : vector<128x128xf32> to vector<128xf32>
    %101 = vector.shape_cast %100 : vector<128xf32> to vector<128x1xf32>
    %cst_31 = arith.constant 1.280000e+02 : f32
    %102 = vector.broadcast %cst_31 : f32 to vector<128x1xf32>
    %103 = arith.divf %101, %102 : vector<128x1xf32>
    %104 = vector.broadcast %103 : vector<128x1xf32> to vector<128x128xf32>
    %105 = arith.subf %97, %104 : vector<128x128xf32>
    %106 = arith.mulf %105, %105 : vector<128x128xf32>
    %cst_32 = arith.constant dense<0.000000e+00> : vector<128xf32>
    %107 = vector.multi_reduction <add>, %106, %cst_32 [1] : vector<128x128xf32> to vector<128xf32>
    %108 = vector.shape_cast %107 : vector<128xf32> to vector<128x1xf32>
    %cst_33 = arith.constant 1.280000e+02 : f32
    %109 = vector.broadcast %cst_33 : f32 to vector<128x1xf32>
    %110 = arith.divf %108, %109 : vector<128x1xf32>
    %111 = vector.broadcast %103 : vector<128x1xf32> to vector<128x128xf32>
    %112 = arith.subf %97, %111 : vector<128x128xf32>
    %cst_34 = arith.constant 9.99999974E-6 : f32
    %113 = vector.broadcast %cst_34 : f32 to vector<128x1xf32>
    %114 = arith.addf %110, %113 : vector<128x1xf32>
    %115 = math.rsqrt %114 : vector<128x1xf32>
    %116 = vector.broadcast %115 : vector<128x1xf32> to vector<128x128xf32>
    %117 = arith.mulf %112, %116 : vector<128x128xf32>
    %118 = vector.broadcast %98 : vector<1x128xf32> to vector<128x128xf32>
    %119 = arith.mulf %117, %118 : vector<128x128xf32>
    %120 = vector.broadcast %99 : vector<1x128xf32> to vector<128x128xf32>
    %121 = arith.addf %119, %120 : vector<128x128xf32>
    %122 = arith.truncf %121 : vector<128x128xf32> to vector<128x128xbf16>
    %c0_35 = arith.constant 0 : index
    %c0_36 = arith.constant 0 : index
    %123 = vector.load %arg10[%c0_35, %c0_36] : memref<128x512xbf16, #tpu.memory_space<vmem>>, vector<128x512xbf16>
    %cst_37 = arith.constant dense<0.000000e+00> : vector<128x512xf32>
    %124 = tpu.matmul %122, %123, %cst_37 {dimension_numbers = #tpu.dot_dimension_numbers<[1], [0], [0], [1], [0, 0, 1, 1], [], []>} : vector<128x128xbf16>, vector<128x512xbf16>, vector<128x512xf32> -> vector<128x512xf32>
    %c0_38 = arith.constant 0 : index
    %c0_39 = arith.constant 0 : index
    %125 = vector.load %arg11[%c0_38, %c0_39] : memref<1x512xf32, #tpu.memory_space<vmem>>, vector<1x512xf32>
    %126 = vector.broadcast %125 : vector<1x512xf32> to vector<128x512xf32>
    %127 = arith.addf %124, %126 : vector<128x512xf32>
    %cst_40 = arith.constant 0.000000e+00 : f32
    %128 = vector.broadcast %cst_40 : f32 to vector<128x512xf32>
    %129 = arith.maximumf %127, %128 : vector<128x512xf32>
    %130 = arith.truncf %129 : vector<128x512xf32> to vector<128x512xbf16>
    %c0_41 = arith.constant 0 : index
    %c0_42 = arith.constant 0 : index
    %131 = vector.load %arg12[%c0_41, %c0_42] : memref<512x128xbf16, #tpu.memory_space<vmem>>, vector<512x128xbf16>
    %cst_43 = arith.constant dense<0.000000e+00> : vector<128x128xf32>
    %132 = tpu.matmul %130, %131, %cst_43 {dimension_numbers = #tpu.dot_dimension_numbers<[1], [0], [0], [1], [0, 0, 1, 1], [], []>} : vector<128x512xbf16>, vector<512x128xbf16>, vector<128x128xf32> -> vector<128x128xf32>
    %c0_44 = arith.constant 0 : index
    %c0_45 = arith.constant 0 : index
    %133 = vector.load %arg13[%c0_44, %c0_45] : memref<1x128xf32, #tpu.memory_space<vmem>>, vector<1x128xf32>
    %134 = vector.broadcast %133 : vector<1x128xf32> to vector<128x128xf32>
    %135 = arith.addf %132, %134 : vector<128x128xf32>
    %136 = arith.addf %97, %135 : vector<128x128xf32>
    %137 = vector.shape_cast %136 : vector<128x128xf32> to vector<2x64x128xf32>
    %c0_46 = arith.constant 0 : index
    %c0_47 = arith.constant 0 : index
    %c0_48 = arith.constant 0 : index
    %138 = vector.load %arg14[%c0_46, %c0_47, %c0_48] : memref<2x64x128xf32, #tpu.memory_space<vmem>>, vector<2x64x128xf32>
    tpu.vector_store %arg14[%c0_46, %c0_47, %c0_48], %137 {strides = array<i32>} : memref<2x64x128xf32, #tpu.memory_space<vmem>>, vector<2x64x128xf32>,
    return
  }
  func.func @transform_0(%arg0: i32) -> (i32, i32, i32) {
    %c0_i32 = arith.constant 0 : i32
    %c0_i32_0 = arith.constant 0 : i32
    %c0_i32_1 = arith.constant 0 : i32
    return %arg0, %c0_i32, %c0_i32_0 : i32, i32, i32
  }
  func.func @transform_1(%arg0: i32) -> (i32, i32) {
    %c0_i32 = arith.constant 0 : i32
    %c0_i32_0 = arith.constant 0 : i32
    %c0_i32_1 = arith.constant 0 : i32
    return %c0_i32, %c0_i32_0 : i32, i32
  }
  func.func @transform_2(%arg0: i32) -> (i32, i32) {
    %c0_i32 = arith.constant 0 : i32
    %c0_i32_0 = arith.constant 0 : i32
    %c0_i32_1 = arith.constant 0 : i32
    return %c0_i32, %c0_i32_0 : i32, i32
  }
  func.func @transform_3(%arg0: i32) -> (i32, i32) {
    %c0_i32 = arith.constant 0 : i32
    %c0_i32_0 = arith.constant 0 : i32
    %c0_i32_1 = arith.constant 0 : i32
    return %c0_i32, %c0_i32_0 : i32, i32
  }
  func.func @transform_4(%arg0: i32) -> (i32, i32) {
    %c0_i32 = arith.constant 0 : i32
    %c0_i32_0 = arith.constant 0 : i32
    %c0_i32_1 = arith.constant 0 : i32
    return %c0_i32, %c0_i32_0 : i32, i32
  }
  func.func @transform_5(%arg0: i32) -> (i32, i32) {
    %c0_i32 = arith.constant 0 : i32
    %c0_i32_0 = arith.constant 0 : i32
    %c0_i32_1 = arith.constant 0 : i32
    return %c0_i32, %c0_i32_0 : i32, i32
  }
  func.func @transform_6(%arg0: i32) -> (i32, i32) {
    %c0_i32 = arith.constant 0 : i32
    %c0_i32_0 = arith.constant 0 : i32
    %c0_i32_1 = arith.constant 0 : i32
    return %c0_i32, %c0_i32_0 : i32, i32
  }
  func.func @transform_7(%arg0: i32) -> (i32, i32) {
    %c0_i32 = arith.constant 0 : i32
    %c0_i32_0 = arith.constant 0 : i32
    %c0_i32_1 = arith.constant 0 : i32
    return %c0_i32, %c0_i32_0 : i32, i32
  }
  func.func @transform_8(%arg0: i32) -> (i32, i32) {
    %c0_i32 = arith.constant 0 : i32
    %c0_i32_0 = arith.constant 0 : i32
    %c0_i32_1 = arith.constant 0 : i32
    return %c0_i32, %c0_i32_0 : i32, i32
  }
  func.func @transform_9(%arg0: i32) -> (i32, i32) {
    %c0_i32 = arith.constant 0 : i32
    %c0_i32_0 = arith.constant 0 : i32
    %c0_i32_1 = arith.constant 0 : i32
    return %c0_i32, %c0_i32_0 : i32, i32
  }
  func.func @transform_10(%arg0: i32) -> (i32, i32) {
    %c0_i32 = arith.constant 0 : i32
    %c0_i32_0 = arith.constant 0 : i32
    %c0_i32_1 = arith.constant 0 : i32
    return %c0_i32, %c0_i32_0 : i32, i32
  }
  func.func @transform_11(%arg0: i32) -> (i32, i32) {
    %c0_i32 = arith.constant 0 : i32
    %c0_i32_0 = arith.constant 0 : i32
    %c0_i32_1 = arith.constant 0 : i32
    return %c0_i32, %c0_i32_0 : i32, i32
  }
  func.func @transform_12(%arg0: i32) -> (i32, i32) {
    %c0_i32 = arith.constant 0 : i32
    %c0_i32_0 = arith.constant 0 : i32
    %c0_i32_1 = arith.constant 0 : i32
    return %c0_i32, %c0_i32_0 : i32, i32
  }
  func.func @transform_13(%arg0: i32) -> (i32, i32, i32) {
    %c0_i32 = arith.constant 0 : i32
    %c0_i32_0 = arith.constant 0 : i32
    %c0_i32_1 = arith.constant 0 : i32
    return %arg0, %c0_i32, %c0_i32_0 : i32, i32, i32
  }
}

</mosaic_0001>

<llo_original>
// kernel: tpu_custom_call.1
$region0: #{tpu_custom_call.1}
  #allocation0 [shape = 'u32[]', space=smem, size = 0x4, offset = 0x4, fixed_abs, tag = 'smem constant byte address 0x4 - core index']
  #allocation1 [shape = 'u32[144,128]{1,0:T(1,128)}', space=vmem, size = 0x12000, scoped, tag = 'internal scratch']
  %s0 = inlined_call_operand.hbm [shape: f32[2,64,128], index: 0, kind: input, shape index: {}]
  %s1 = inlined_call_operand.hbm [shape: f32[64,64], index: 1, kind: input, shape index: {}]
  %s2 = inlined_call_operand.vmem [shape: f32[1,128], index: 2, kind: input, shape index: {}]
  %s3 = inlined_call_operand.vmem [shape: f32[1,128], index: 3, kind: input, shape index: {}]
  %s4 = inlined_call_operand.hbm [shape: bf16[128,384], index: 4, kind: input, shape index: {}]
  %s5 = inlined_call_operand.hbm [shape: bf16[128,128], index: 5, kind: input, shape index: {}]
  %s6 = inlined_call_operand.vmem [shape: f32[1,128], index: 6, kind: input, shape index: {}]
  %s7 = inlined_call_operand.vmem [shape: f32[1,128], index: 7, kind: input, shape index: {}]
  %s8 = inlined_call_operand.vmem [shape: f32[1,128], index: 8, kind: input, shape index: {}]
  %s9 = inlined_call_operand.hbm [shape: bf16[128,512], index: 9, kind: input, shape index: {}]
  %s10 = inlined_call_operand.vmem [shape: f32[1,512], index: 10, kind: input, shape index: {}]
  %s11 = inlined_call_operand.hbm [shape: bf16[512,128], index: 11, kind: input, shape index: {}]
  %s12 = inlined_call_operand.vmem [shape: f32[1,128], index: 12, kind: input, shape index: {}]
  %s13 = inlined_call_operand.hbm [shape: f32[2,64,128], index: 13, kind: output, shape index: {}]
  %s14 = sld [smem:[#allocation0]]
  $region86: #{tpu_custom_call.1} parent=0
    _
  %s16 = ssub.s32 1, %s14
  %s17 = scalar_select 0, %s16, %s14
  $region1: #{tpu_custom_call.1} parent=0
    #allocation2 [shape = 'u8[65536]{0}', space=vmem, size = 0x10000, scoped, tag = 'input window, operand 0, single buffered']
    #allocation3 [shape = 's32[1]{0}', space=sflag, size = 0x4, scoped, tag = 'scoped memory for tpu_custom_call.1']
    #allocation4 [shape = 's32[1]{0}', space=sflag, size = 0x4, scoped, tag = 'scoped memory for tpu_custom_call.1']
    #allocation5 [shape = 'u8[32768]{0}', space=vmem, size = 0x8000, scoped, tag = 'input window, operand 1, single buffered']
    #allocation6 [shape = 's32[1]{0}', space=sflag, size = 0x4, scoped, tag = 'scoped memory for tpu_custom_call.1']
    #allocation7 [shape = 'u8[98304]{0}', space=vmem, size = 0x18000, scoped, tag = 'input window, operand 4, single buffered']
    #allocation8 [shape = 'u8[32768]{0}', space=vmem, size = 0x8000, scoped, tag = 'input window, operand 5, single buffered']
    #allocation9 [shape = 's32[1]{0}', space=sflag, size = 0x4, scoped, tag = 'scoped memory for tpu_custom_call.1']
    #allocation10 [shape = 'u8[131072]{0}', space=vmem, size = 0x20000, scoped, tag = 'input window, operand 9, single buffered']
    #allocation11 [shape = 'u8[131072]{0}', space=vmem, size = 0x20000, scoped, tag = 'input window, operand 11, single buffered']
    #allocation12 [shape = 's32[1]{0}', space=sflag, size = 0x4, scoped, tag = 'scoped memory for tpu_custom_call.1']
    #allocation13 [shape = 'u8[65536]{0}', space=vmem, size = 0x10000, scoped, tag = 'output window, operand 0, single buffered']
    %18 = vsyncpa [#allocation3], 0
    %19 = vsyncpa [#allocation6], 0
    %20 = vsyncpa [#allocation9], 0
    %21 = vsyncpa [#allocation12], 0
    %22 = vsyncpa [#allocation4], 0
    // Predicated region
    $region2: #{tpu_custom_call.1} parent=1 // pred_check
      _
    $region3: #{tpu_custom_call.1} parent=1 // pred_check_branch
      %24 = sbr.rel (0) target = $region5
    $region4: #{tpu_custom_call.1} parent=1 // pred_region
      %s26 = ssub.s32 2048, 2048
      %27 = vsyncadd [#allocation3], %s26
      %s28 = sshll.u32 [#allocation2], 4
      %s29 = int_to_ptr.vmem [resolvable:$true] %s28
      %34 = dma.hbm_to_vmem [thread:$0]  %s0, 2048, %s29, [#allocation3], 128, 128, 8
    $region5: #{tpu_custom_call.1} parent=1 // pred_fallthru
      _
    // Predicated region
    $region6: #{tpu_custom_call.1} parent=1 // pred_check
      _
    $region7: #{tpu_custom_call.1} parent=1 // pred_check_branch
      %36 = sbr.rel (0) target = $region9
    $region8: #{tpu_custom_call.1} parent=1 // pred_region
      %s38 = ssub.s32 1024, 1024
      %39 = vsyncadd [#allocation6], %s38
      %s40 = sshll.u32 [#allocation5], 4
      %s41 = int_to_ptr.vmem [resolvable:$true] %s40
      %46 = dma.hbm_to_vmem [thread:$0]  %s1, 1024, %s41, [#allocation6], 128, 128, 8
    $region9: #{tpu_custom_call.1} parent=1 // pred_fallthru
      _
    // Predicated region
    $region10: #{tpu_custom_call.1} parent=1 // pred_check
      _
    $region11: #{tpu_custom_call.1} parent=1 // pred_check_branch
      %48 = sbr.rel (0) target = $region13
    $region12: #{tpu_custom_call.1} parent=1 // pred_region
      _
    $region13: #{tpu_custom_call.1} parent=1 // pred_fallthru
      _
    // Predicated region
    $region14: #{tpu_custom_call.1} parent=1 // pred_check
      _
    $region15: #{tpu_custom_call.1} parent=1 // pred_check_branch
      %50 = sbr.rel (0) target = $region17
    $region16: #{tpu_custom_call.1} parent=1 // pred_region
      _
    $region17: #{tpu_custom_call.1} parent=1 // pred_fallthru
      _
    // Predicated region
    $region18: #{tpu_custom_call.1} parent=1 // pred_check
      _
    $region19: #{tpu_custom_call.1} parent=1 // pred_check_branch
      %52 = sbr.rel (0) target = $region21
    $region20: #{tpu_custom_call.1} parent=1 // pred_region
      %s54 = ssub.s32 3072, 3072
      %55 = vsyncadd [#allocation6], %s54
      %s56 = sshll.u32 [#allocation7], 4
      %s57 = int_to_ptr.vmem [resolvable:$true] %s56
      %62 = dma.hbm_to_vmem [thread:$0]  %s4, 3072, %s57, [#allocation6], 192, 192, 12
    $region21: #{tpu_custom_call.1} parent=1 // pred_fallthru
      _
    // Predicated region
    $region22: #{tpu_custom_call.1} parent=1 // pred_check
      _
    $region23: #{tpu_custom_call.1} parent=1 // pred_check_branch
      %64 = sbr.rel (0) target = $region25
    $region24: #{tpu_custom_call.1} parent=1 // pred_region
      %s66 = ssub.s32 1024, 1024
      %67 = vsyncadd [#allocation9], %s66
      %s68 = sshll.u32 [#allocation8], 4
      %s69 = int_to_ptr.vmem [resolvable:$true] %s68
      %74 = dma.hbm_to_vmem [thread:$0]  %s5, 1024, %s69, [#allocation9], 64, 64, 4
    $region25: #{tpu_custom_call.1} parent=1 // pred_fallthru
      _
    // Predicated region
    $region26: #{tpu_custom_call.1} parent=1 // pred_check
      _
    $region27: #{tpu_custom_call.1} parent=1 // pred_check_branch
      %76 = sbr.rel (0) target = $region29
    $region28: #{tpu_custom_call.1} parent=1 // pred_region
      _
    $region29: #{tpu_custom_call.1} parent=1 // pred_fallthru
      _
    // Predicated region
    $region30: #{tpu_custom_call.1} parent=1 // pred_check
      _
    $region31: #{tpu_custom_call.1} parent=1 // pred_check_branch
      %78 = sbr.rel (0) target = $region33
    $region32: #{tpu_custom_call.1} parent=1 // pred_region
      _
    $region33: #{tpu_custom_call.1} parent=1 // pred_fallthru
      _
    // Predicated region
    $region34: #{tpu_custom_call.1} parent=1 // pred_check
      _
    $region35: #{tpu_custom_call.1} parent=1 // pred_check_branch
      %80 = sbr.rel (0) target = $region37
    $region36: #{tpu_custom_call.1} parent=1 // pred_region
      _
    $region37: #{tpu_custom_call.1} parent=1 // pred_fallthru
      _
    // Predicated region
    $region38: #{tpu_custom_call.1} parent=1 // pred_check
      _
    $region39: #{tpu_custom_call.1} parent=1 // pred_check_branch
      %82 = sbr.rel (0) target = $region41
    $region40: #{tpu_custom_call.1} parent=1 // pred_region
      %s84 = ssub.s32 4096, 4096
      %85 = vsyncadd [#allocation9], %s84
      %s86 = sshll.u32 [#allocation10], 4
      %s87 = int_to_ptr.vmem [resolvable:$true] %s86
      %92 = dma.hbm_to_vmem [thread:$0]  %s9, 4096, %s87, [#allocation9], 256, 256, 16
    $region41: #{tpu_custom_call.1} parent=1 // pred_fallthru
      _
    // Predicated region
    $region42: #{tpu_custom_call.1} parent=1 // pred_check
      _
    $region43: #{tpu_custom_call.1} parent=1 // pred_check_branch
      %94 = sbr.rel (0) target = $region45
    $region44: #{tpu_custom_call.1} parent=1 // pred_region
      _
    $region45: #{tpu_custom_call.1} parent=1 // pred_fallthru
      _
    // Predicated region
    $region46: #{tpu_custom_call.1} parent=1 // pred_check
      _
    $region47: #{tpu_custom_call.1} parent=1 // pred_check_branch
      %96 = sbr.rel (0) target = $region49
    $region48: #{tpu_custom_call.1} parent=1 // pred_region
      %s98 = ssub.s32 4096, 4096
      %99 = vsyncadd [#allocation12], %s98
      %s100 = sshll.u32 [#allocation11], 4
      %s101 = int_to_ptr.vmem [resolvable:$true] %s100
      %106 = dma.hbm_to_vmem [thread:$0]  %s11, 4096, %s101, [#allocation12], 64, 64, 4
    $region49: #{tpu_custom_call.1} parent=1 // pred_fallthru
      _
    // Predicated region
    $region50: #{tpu_custom_call.1} parent=1 // pred_check
      _
    $region51: #{tpu_custom_call.1} parent=1 // pred_check_branch
      %108 = sbr.rel (0) target = $region53
    $region52: #{tpu_custom_call.1} parent=1 // pred_region
      _
    $region53: #{tpu_custom_call.1} parent=1 // pred_fallthru
      _
    // Predicated region
    $region54: #{tpu_custom_call.1} parent=1 // pred_check
      _
    $region55: #{tpu_custom_call.1} parent=1 // pred_check_branch
      %110 = sbr.rel (0) target = $region57
    $region56: #{tpu_custom_call.1} parent=1 // pred_region
      %111 = dma.done [#allocation3], 2048
    $region57: #{tpu_custom_call.1} parent=1 // pred_fallthru
      _
    // Predicated region
    $region58: #{tpu_custom_call.1} parent=1 // pred_check
      _
    $region59: #{tpu_custom_call.1} parent=1 // pred_check_branch
      %113 = sbr.rel (0) target = $region61
    $region60: #{tpu_custom_call.1} parent=1 // pred_region
      %114 = dma.done [#allocation6], 1024
    $region61: #{tpu_custom_call.1} parent=1 // pred_fallthru
      _
    // Predicated region
    $region62: #{tpu_custom_call.1} parent=1 // pred_check
      _
    $region63: #{tpu_custom_call.1} parent=1 // pred_check_branch
      %116 = sbr.rel (0) target = $region65
    $region64: #{tpu_custom_call.1} parent=1 // pred_region
      %117 = dma.done [#allocation6], 3072
    $region65: #{tpu_custom_call.1} parent=1 // pred_fallthru
      _
    // Predicated region
    $region66: #{tpu_custom_call.1} parent=1 // pred_check
      _
    $region67: #{tpu_custom_call.1} parent=1 // pred_check_branch
      %119 = sbr.rel (0) target = $region69
    $region68: #{tpu_custom_call.1} parent=1 // pred_region
      %120 = dma.done [#allocation9], 1024
    $region69: #{tpu_custom_call.1} parent=1 // pred_fallthru
      _
    // Predicated region
    $region70: #{tpu_custom_call.1} parent=1 // pred_check
      _
    $region71: #{tpu_custom_call.1} parent=1 // pred_check_branch
      %122 = sbr.rel (0) target = $region73
    $region72: #{tpu_custom_call.1} parent=1 // pred_region
      %123 = dma.done [#allocation9], 4096
    $region73: #{tpu_custom_call.1} parent=1 // pred_fallthru
      _
    // Predicated region
    $region74: #{tpu_custom_call.1} parent=1 // pred_check
      _
    $region75: #{tpu_custom_call.1} parent=1 // pred_check_branch
      %125 = sbr.rel (0) target = $region77
    $region76: #{tpu_custom_call.1} parent=1 // pred_region
      %126 = dma.done [#allocation12], 4096
    $region77: #{tpu_custom_call.1} parent=1 // pred_fallthru
      _
    %v128 = vld [vmem:[#allocation2] sm:$0xff]
    %v129 = vld [vmem:[#allocation2 + $0x8] sm:$0xff]
    %v130 = vld [vmem:[#allocation2 + $0x10] sm:$0xff]
    %v131 = vld [vmem:[#allocation2 + $0x18] sm:$0xff]
    %v132 = vld [vmem:[#allocation2 + $0x20] sm:$0xff]
    %v133 = vld [vmem:[#allocation2 + $0x28] sm:$0xff]
    %v134 = vld [vmem:[#allocation2 + $0x30] sm:$0xff]
    %v135 = vld [vmem:[#allocation2 + $0x38] sm:$0xff]
    %v136 = vld [vmem:[#allocation2 + $0x40] sm:$0xff]
    %v137 = vld [vmem:[#allocation2 + $0x48] sm:$0xff]
    %v138 = vld [vmem:[#allocation2 + $0x50] sm:$0xff]
    %v139 = vld [vmem:[#allocation2 + $0x58] sm:$0xff]
    %v140 = vld [vmem:[#allocation2 + $0x60] sm:$0xff]
    %v141 = vld [vmem:[#allocation2 + $0x68] sm:$0xff]
    %v142 = vld [vmem:[#allocation2 + $0x70] sm:$0xff]
    %v143 = vld [vmem:[#allocation2 + $0x78] sm:$0xff]
    %v144 = vld [vmem:[%s2] sm:$0x1]
    %v145 = vld [vmem:[%s3] sm:$0x1]
    %146 = vadd.xlane.f32.xlu0 %v128
    %v147 = vpop.xlane.xlu0 %146
    %148 = vadd.xlane.f32.xlu0 %v129
    %v149 = vpop.xlane.xlu0 %148
    %150 = vadd.xlane.f32.xlu0 %v130
    %v151 = vpop.xlane.xlu0 %150
    %152 = vadd.xlane.f32.xlu0 %v131
    %v153 = vpop.xlane.xlu0 %152
    %154 = vadd.xlane.f32.xlu0 %v132
    %v155 = vpop.xlane.xlu0 %154
    %156 = vadd.xlane.f32.xlu0 %v133
    %v157 = vpop.xlane.xlu0 %156
    %158 = vadd.xlane.f32.xlu0 %v134
    %v159 = vpop.xlane.xlu0 %158
    %160 = vadd.xlane.f32.xlu0 %v135
    %v161 = vpop.xlane.xlu0 %160
    %162 = vadd.xlane.f32.xlu0 %v136
    %v163 = vpop.xlane.xlu0 %162
    %164 = vadd.xlane.f32.xlu0 %v137
    %v165 = vpop.xlane.xlu0 %164
    %166 = vadd.xlane.f32.xlu0 %v138
    %v167 = vpop.xlane.xlu0 %166
    %168 = vadd.xlane.f32.xlu0 %v139
    %v169 = vpop.xlane.xlu0 %168
    %170 = vadd.xlane.f32.xlu0 %v140
    %v171 = vpop.xlane.xlu0 %170
    %172 = vadd.xlane.f32.xlu0 %v141
    %v173 = vpop.xlane.xlu0 %172
    %174 = vadd.xlane.f32.xlu0 %v142
    %v175 = vpop.xlane.xlu0 %174
    %176 = vadd.xlane.f32.xlu0 %v143
    %v177 = vpop.xlane.xlu0 %176
    %v178 = vrcp.pop 128.0
    %v179 = vmul.f32 %v147, %v178
    %v180 = vmul.f32 %v149, %v178
    %v181 = vmul.f32 %v151, %v178
    %v182 = vmul.f32 %v153, %v178
    %v183 = vmul.f32 %v155, %v178
    %v184 = vmul.f32 %v157, %v178
    %v185 = vmul.f32 %v159, %v178
    %v186 = vmul.f32 %v161, %v178
    %v187 = vmul.f32 %v163, %v178
    %v188 = vmul.f32 %v165, %v178
    %v189 = vmul.f32 %v167, %v178
    %v190 = vmul.f32 %v169, %v178
    %v191 = vmul.f32 %v171, %v178
    %v192 = vmul.f32 %v173, %v178
    %v193 = vmul.f32 %v175, %v178
    %v194 = vmul.f32 %v177, %v178
    %v195 = vsub.f32 %v128, %v179
    %v196 = vsub.f32 %v129, %v180
    %v197 = vsub.f32 %v130, %v181
    %v198 = vsub.f32 %v131, %v182
    %v199 = vsub.f32 %v132, %v183
    %v200 = vsub.f32 %v133, %v184
    %v201 = vsub.f32 %v134, %v185
    %v202 = vsub.f32 %v135, %v186
    %v203 = vsub.f32 %v136, %v187
    %v204 = vsub.f32 %v137, %v188
    %v205 = vsub.f32 %v138, %v189
    %v206 = vsub.f32 %v139, %v190
    %v207 = vsub.f32 %v140, %v191
    %v208 = vsub.f32 %v141, %v192
    %v209 = vsub.f32 %v142, %v193
    %v210 = vsub.f32 %v143, %v194
    %v211 = vmul.f32 %v195, %v195
    %v212 = vmul.f32 %v196, %v196
    %v213 = vmul.f32 %v197, %v197
    %v214 = vmul.f32 %v198, %v198
    %v215 = vmul.f32 %v199, %v199
    %v216 = vmul.f32 %v200, %v200
    %v217 = vmul.f32 %v201, %v201
    %v218 = vmul.f32 %v202, %v202
    %v219 = vmul.f32 %v203, %v203
    %v220 = vmul.f32 %v204, %v204
    %v221 = vmul.f32 %v205, %v205
    %v222 = vmul.f32 %v206, %v206
    %v223 = vmul.f32 %v207, %v207
    %v224 = vmul.f32 %v208, %v208
    %v225 = vmul.f32 %v209, %v209
    %v226 = vmul.f32 %v210, %v210
    %227 = vadd.xlane.f32.xlu0 %v211
    %v228 = vpop.xlane.xlu0 %227
    %229 = vadd.xlane.f32.xlu0 %v212
    %v230 = vpop.xlane.xlu0 %229
    %231 = vadd.xlane.f32.xlu0 %v213
    %v232 = vpop.xlane.xlu0 %231
    %233 = vadd.xlane.f32.xlu0 %v214
    %v234 = vpop.xlane.xlu0 %233
    %235 = vadd.xlane.f32.xlu0 %v215
    %v236 = vpop.xlane.xlu0 %235
    %237 = vadd.xlane.f32.xlu0 %v216
    %v238 = vpop.xlane.xlu0 %237
    %239 = vadd.xlane.f32.xlu0 %v217
    %v240 = vpop.xlane.xlu0 %239
    %241 = vadd.xlane.f32.xlu0 %v218
    %v242 = vpop.xlane.xlu0 %241
    %243 = vadd.xlane.f32.xlu0 %v219
    %v244 = vpop.xlane.xlu0 %243
    %245 = vadd.xlane.f32.xlu0 %v220
    %v246 = vpop.xlane.xlu0 %245
    %247 = vadd.xlane.f32.xlu0 %v221
    %v248 = vpop.xlane.xlu0 %247
    %249 = vadd.xlane.f32.xlu0 %v222
    %v250 = vpop.xlane.xlu0 %249
    %251 = vadd.xlane.f32.xlu0 %v223
    %v252 = vpop.xlane.xlu0 %251
    %253 = vadd.xlane.f32.xlu0 %v224
    %v254 = vpop.xlane.xlu0 %253
    %255 = vadd.xlane.f32.xlu0 %v225
    %v256 = vpop.xlane.xlu0 %255
    %257 = vadd.xlane.f32.xlu0 %v226
    %v258 = vpop.xlane.xlu0 %257
    %v259 = vmul.f32 %v228, %v178
    %v260 = vmul.f32 %v230, %v178
    %v261 = vmul.f32 %v232, %v178
    %v262 = vmul.f32 %v234, %v178
    %v263 = vmul.f32 %v236, %v178
    %v264 = vmul.f32 %v238, %v178
    %v265 = vmul.f32 %v240, %v178
    %v266 = vmul.f32 %v242, %v178
    %v267 = vmul.f32 %v244, %v178
    %v268 = vmul.f32 %v246, %v178
    %v269 = vmul.f32 %v248, %v178
    %v270 = vmul.f32 %v250, %v178
    %v271 = vmul.f32 %v252, %v178
    %v272 = vmul.f32 %v254, %v178
    %v273 = vmul.f32 %v256, %v178
    %v274 = vmul.f32 %v258, %v178
    %v275 = vadd.f32 %v259, 1e-05
    %v276 = vadd.f32 %v260, 1e-05
    %v277 = vadd.f32 %v261, 1e-05
    %v278 = vadd.f32 %v262, 1e-05
    %v279 = vadd.f32 %v263, 1e-05
    %v280 = vadd.f32 %v264, 1e-05
    %v281 = vadd.f32 %v265, 1e-05
    %v282 = vadd.f32 %v266, 1e-05
    %v283 = vadd.f32 %v267, 1e-05
    %v284 = vadd.f32 %v268, 1e-05
    %v285 = vadd.f32 %v269, 1e-05
    %v286 = vadd.f32 %v270, 1e-05
    %v287 = vadd.f32 %v271, 1e-05
    %v288 = vadd.f32 %v272, 1e-05
    %v289 = vadd.f32 %v273, 1e-05
    %v290 = vadd.f32 %v274, 1e-05
    %v291 = vrsqrt.pop %v275
    %v292 = vrsqrt.pop %v276
    %v293 = vrsqrt.pop %v277
    %v294 = vrsqrt.pop %v278
    %v295 = vrsqrt.pop %v279
    %v296 = vrsqrt.pop %v280
    %v297 = vrsqrt.pop %v281
    %v298 = vrsqrt.pop %v282
    %v299 = vrsqrt.pop %v283
    %v300 = vrsqrt.pop %v284
    %v301 = vrsqrt.pop %v285
    %v302 = vrsqrt.pop %v286
    %v303 = vrsqrt.pop %v287
    %v304 = vrsqrt.pop %v288
    %v305 = vrsqrt.pop %v289
    %v306 = vrsqrt.pop %v290
    %v307 = vmul.f32 %v195, %v291
    %v308 = vmul.f32 %v196, %v292
    %v309 = vmul.f32 %v197, %v293
    %v310 = vmul.f32 %v198, %v294
    %v311 = vmul.f32 %v199, %v295
    %v312 = vmul.f32 %v200, %v296
    %v313 = vmul.f32 %v201, %v297
    %v314 = vmul.f32 %v202, %v298
    %v315 = vmul.f32 %v203, %v299
    %v316 = vmul.f32 %v204, %v300
    %v317 = vmul.f32 %v205, %v301
    %v318 = vmul.f32 %v206, %v302
    %v319 = vmul.f32 %v207, %v303
    %v320 = vmul.f32 %v208, %v304
    %v321 = vmul.f32 %v209, %v305
    %v322 = vmul.f32 %v210, %v306
    %v324 = vlaneseq
    %v325 = vshrl.u32 %v324, 7
    %v326 = vsub.s32 0, %v325
    %v327 = vrot.slane %v144, %v326
    %v329 = vmul.f32 %v307, %v327
    %v330 = vmul.f32 %v308, %v327
    %v331 = vmul.f32 %v309, %v327
    %v332 = vmul.f32 %v310, %v327
    %v333 = vmul.f32 %v311, %v327
    %v334 = vmul.f32 %v312, %v327
    %v335 = vmul.f32 %v313, %v327
    %v336 = vmul.f32 %v314, %v327
    %v337 = vmul.f32 %v315, %v327
    %v338 = vmul.f32 %v316, %v327
    %v339 = vmul.f32 %v317, %v327
    %v340 = vmul.f32 %v318, %v327
    %v341 = vmul.f32 %v319, %v327
    %v342 = vmul.f32 %v320, %v327
    %v343 = vmul.f32 %v321, %v327
    %v344 = vmul.f32 %v322, %v327
    %v346 = vlaneseq
    %v347 = vshrl.u32 %v346, 7
    %v348 = vsub.s32 0, %v347
    %v349 = vrot.slane %v145, %v348
    %v351 = vadd.f32 %v329, %v349
    %v352 = vadd.f32 %v330, %v349
    %v353 = vadd.f32 %v331, %v349
    %v354 = vadd.f32 %v332, %v349
    %v355 = vadd.f32 %v333, %v349
    %v356 = vadd.f32 %v334, %v349
    %v357 = vadd.f32 %v335, %v349
    %v358 = vadd.f32 %v336, %v349
    %v359 = vadd.f32 %v337, %v349
    %v360 = vadd.f32 %v338, %v349
    %v361 = vadd.f32 %v339, %v349
    %v362 = vadd.f32 %v340, %v349
    %v363 = vadd.f32 %v341, %v349
    %v364 = vadd.f32 %v342, %v349
    %v365 = vadd.f32 %v343, %v349
    %v366 = vadd.f32 %v344, %v349
    %v367 = vpack.c.bf16 %v352, %v351
    %v368 = vpack.c.bf16 %v354, %v353
    %v369 = vpack.c.bf16 %v356, %v355
    %v370 = vpack.c.bf16 %v358, %v357
    %v371 = vpack.c.bf16 %v360, %v359
    %v372 = vpack.c.bf16 %v362, %v361
    %v373 = vpack.c.bf16 %v364, %v363
    %v374 = vpack.c.bf16 %v366, %v365
    %v375 = vld [vmem:[#allocation7] sm:$0xff]
    %v376 = vld [vmem:[#allocation7 + $0x8] sm:$0xf]
    %v377 = vld [vmem:[#allocation7 + $0xc] sm:$0xff]
    %v378 = vld [vmem:[#allocation7 + $0x14] sm:$0xf]
    %v379 = vld [vmem:[#allocation7 + $0x18] sm:$0xff]
    %v380 = vld [vmem:[#allocation7 + $0x20] sm:$0xf]
    %v381 = vld [vmem:[#allocation7 + $0x24] sm:$0xff]
    %v382 = vld [vmem:[#allocation7 + $0x2c] sm:$0xf]
    %v383 = vld [vmem:[#allocation7 + $0x30] sm:$0xff]
    %v384 = vld [vmem:[#allocation7 + $0x38] sm:$0xf]
    %v385 = vld [vmem:[#allocation7 + $0x3c] sm:$0xff]
    %v386 = vld [vmem:[#allocation7 + $0x44] sm:$0xf]
    %v387 = vld [vmem:[#allocation7 + $0x48] sm:$0xff]
    %v388 = vld [vmem:[#allocation7 + $0x50] sm:$0xf]
    %v389 = vld [vmem:[#allocation7 + $0x54] sm:$0xff]
    %v390 = vld [vmem:[#allocation7 + $0x5c] sm:$0xf]
    %v391 = vld [vmem:[#allocation7 + $0x60] sm:$0xff]
    %v392 = vld [vmem:[#allocation7 + $0x68] sm:$0xf]
    %v393 = vld [vmem:[#allocation7 + $0x6c] sm:$0xff]
    %v394 = vld [vmem:[#allocation7 + $0x74] sm:$0xf]
    %v395 = vld [vmem:[#allocation7 + $0x78] sm:$0xff]
    %v396 = vld [vmem:[#allocation7 + $0x80] sm:$0xf]
    %v397 = vld [vmem:[#allocation7 + $0x84] sm:$0xff]
    %v398 = vld [vmem:[#allocation7 + $0x8c] sm:$0xf]
    %v399 = vld [vmem:[#allocation7 + $0x90] sm:$0xff]
    %v400 = vld [vmem:[#allocation7 + $0x98] sm:$0xf]
    %v401 = vld [vmem:[#allocation7 + $0x9c] sm:$0xff]
    %v402 = vld [vmem:[#allocation7 + $0xa4] sm:$0xf]
    %v403 = vld [vmem:[#allocation7 + $0xa8] sm:$0xff]
    %v404 = vld [vmem:[#allocation7 + $0xb0] sm:$0xf]
    %v405 = vld [vmem:[#allocation7 + $0xb4] sm:$0xff]
    %v406 = vld [vmem:[#allocation7 + $0xbc] sm:$0xf]
    %v439 = vunpack.c.l.b16 %v375
    %v440 = vunpack.c.h.b16 %v375
    %v441 = vunpack.c.l.b16 %v376
    %v442 = vunpack.c.l.b16 %v377
    %v443 = vunpack.c.h.b16 %v377
    %v444 = vunpack.c.l.b16 %v378
    %v445 = vunpack.c.l.b16 %v379
    %v446 = vunpack.c.h.b16 %v379
    %v447 = vunpack.c.l.b16 %v380
    %v448 = vunpack.c.l.b16 %v381
    %v449 = vunpack.c.h.b16 %v381
    %v450 = vunpack.c.l.b16 %v382
    %v451 = vunpack.c.l.b16 %v383
    %v452 = vunpack.c.h.b16 %v383
    %v453 = vunpack.c.l.b16 %v384
    %v454 = vunpack.c.l.b16 %v385
    %v455 = vunpack.c.h.b16 %v385
    %v456 = vunpack.c.l.b16 %v386
    %v457 = vunpack.c.l.b16 %v387
    %v458 = vunpack.c.h.b16 %v387
    %v459 = vunpack.c.l.b16 %v388
    %v460 = vunpack.c.l.b16 %v389
    %v461 = vunpack.c.h.b16 %v389
    %v462 = vunpack.c.l.b16 %v390
    %v463 = vunpack.c.l.b16 %v391
    %v464 = vunpack.c.h.b16 %v391
    %v465 = vunpack.c.l.b16 %v392
    %v466 = vunpack.c.l.b16 %v393
    %v467 = vunpack.c.h.b16 %v393
    %v468 = vunpack.c.l.b16 %v394
    %v469 = vunpack.c.l.b16 %v395
    %v470 = vunpack.c.h.b16 %v395
    %v471 = vunpack.c.l.b16 %v396
    %v472 = vunpack.c.l.b16 %v397
    %v473 = vunpack.c.h.b16 %v397
    %v474 = vunpack.c.l.b16 %v398
    %v475 = vunpack.c.l.b16 %v399
    %v476 = vunpack.c.h.b16 %v399
    %v477 = vunpack.c.l.b16 %v400
    %v478 = vunpack.c.l.b16 %v401
    %v479 = vunpack.c.h.b16 %v401
    %v480 = vunpack.c.l.b16 %v402
    %v481 = vunpack.c.l.b16 %v403
    %v482 = vunpack.c.h.b16 %v403
    %v483 = vunpack.c.l.b16 %v404
    %v484 = vunpack.c.l.b16 %v405
    %v485 = vunpack.c.h.b16 %v405
    %v486 = vunpack.c.l.b16 %v406
    %v487 = vpack.c.b16 %v442, %v439
    %v488 = vpack.c.b16 %v443, %v440
    %v489 = vpack.c.b16 %v444, %v441
    %v490 = vpack.c.b16 %v448, %v445
    %v491 = vpack.c.b16 %v449, %v446
    %v492 = vpack.c.b16 %v450, %v447
    %v493 = vpack.c.b16 %v454, %v451
    %v494 = vpack.c.b16 %v455, %v452
    %v495 = vpack.c.b16 %v456, %v453
    %v496 = vpack.c.b16 %v460, %v457
    %v497 = vpack.c.b16 %v461, %v458
    %v498 = vpack.c.b16 %v462, %v459
    %v499 = vpack.c.b16 %v466, %v463
    %v500 = vpack.c.b16 %v467, %v464
    %v501 = vpack.c.b16 %v468, %v465
    %v502 = vpack.c.b16 %v472, %v469
    %v503 = vpack.c.b16 %v473, %v470
    %v504 = vpack.c.b16 %v474, %v471
    %v505 = vpack.c.b16 %v478, %v475
    %v506 = vpack.c.b16 %v479, %v476
    %v507 = vpack.c.b16 %v480, %v477
    %v508 = vpack.c.b16 %v484, %v481
    %v509 = vpack.c.b16 %v485, %v482
    %v510 = vpack.c.b16 %v486, %v483
    %535 = vmatprep.subr.bf16.mxu0 %v509
    %536 = vmatpush1.bf16.msra.mxu0 %v508
    %537 = vmatprep.subr.bf16.mxu0 %v506
    %538 = vmatpush1.bf16.msra.mxu0 %v505
    %539 = vmatprep.subr.bf16.mxu0 %v503
    %540 = vmatpush1.bf16.msra.mxu0 %v502
    %541 = vmatprep.subr.bf16.mxu0 %v500
    %542 = vmatpush1.bf16.msra.mxu0 %v499
    %543 = vmatprep.subr.bf16.mxu0 %v497
    %544 = vmatpush1.bf16.msra.mxu0 %v496
    %545 = vmatprep.subr.bf16.mxu0 %v494
    %546 = vmatpush1.bf16.msra.mxu0 %v493
    %547 = vmatprep.subr.bf16.mxu0 %v491
    %548 = vmatpush1.bf16.msra.mxu0 %v490
    %549 = vmatprep.subr.bf16.mxu0 %v488
    %550 = vmatpush1.bf16.msra.mxu0 %v487
    %551 = vmatprep.subr.bf16.mxu0 0
    %552 = vmatpush2.bf16.msra.mxu0 0
    %553 = vmatprep.subr.bf16.mxu0 0
    %554 = vmatpush2.bf16.msra.mxu0 0
    %555 = vmatprep.subr.bf16.mxu0 0
    %556 = vmatpush2.bf16.msra.mxu0 0
    %557 = vmatprep.subr.bf16.mxu0 0
    %558 = vmatpush2.bf16.msra.mxu0 0
    %559 = vmatprep.subr.bf16.mxu0 0
    %560 = vmatpush2.bf16.msra.mxu0 0
    %561 = vmatprep.subr.bf16.mxu0 0
    %562 = vmatpush2.bf16.msra.mxu0 0
    %563 = vmatprep.subr.bf16.mxu0 0
    %564 = vmatpush2.bf16.msra.mxu0 0
    %565 = vmatprep.subr.bf16.mxu0 0
    %566 = vmatpush2.bf16.msra.mxu0 0
    %567 = vmatprep.mubr.bf16.mxu0 0
    %568 = vmatmul.mubr.bf16.gmra.mxu0 %v367
    %v569 = vpop.f32.mrf.mxu0
    %v570 = vadd.f32 0.0, %v569
    %v571 = vpop.f32.mrf.mxu0
    %v572 = vadd.f32 0.0, %v571
    %v573 = vpop.f32.mrf.mxu0
    %v574 = vadd.f32 0.0, %v573
    %v575 = vpop.f32.mrf.mxu0
    %v576 = vadd.f32 0.0, %v575
    %577 = vmatprep.mubr.bf16.mxu0 0
    %578 = vmatmul.mubr.bf16.gmra.mxu0 %v368
    %v579 = vpop.f32.mrf.mxu0
    %v580 = vadd.f32 0.0, %v579
    %v581 = vpop.f32.mrf.mxu0
    %v582 = vadd.f32 0.0, %v581
    %v583 = vpop.f32.mrf.mxu0
    %v584 = vadd.f32 0.0, %v583
    %v585 = vpop.f32.mrf.mxu0
    %v586 = vadd.f32 0.0, %v585
    %587 = vmatprep.mubr.bf16.mxu0 0
    %588 = vmatmul.mubr.bf16.gmra.mxu0 %v369
    %v589 = vpop.f32.mrf.mxu0
    %v590 = vadd.f32 0.0, %v589
    %v591 = vpop.f32.mrf.mxu0
    %v592 = vadd.f32 0.0, %v591
    %v593 = vpop.f32.mrf.mxu0
    %v594 = vadd.f32 0.0, %v593
    %v595 = vpop.f32.mrf.mxu0
    %v596 = vadd.f32 0.0, %v595
    %597 = vmatprep.mubr.bf16.mxu0 0
    %598 = vmatmul.mubr.bf16.gmra.mxu0 %v370
    %v599 = vpop.f32.mrf.mxu0
    %v600 = vadd.f32 0.0, %v599
    %v601 = vpop.f32.mrf.mxu0
    %v602 = vadd.f32 0.0, %v601
    %v603 = vpop.f32.mrf.mxu0
    %v604 = vadd.f32 0.0, %v603
    %v605 = vpop.f32.mrf.mxu0
    %v606 = vadd.f32 0.0, %v605
    %607 = vmatprep.mubr.bf16.mxu0 0
    %608 = vmatmul.mubr.bf16.gmra.mxu0 %v371
    %v609 = vpop.f32.mrf.mxu0
    %v610 = vadd.f32 0.0, %v609
    %v611 = vpop.f32.mrf.mxu0
    %v612 = vadd.f32 0.0, %v611
    %v613 = vpop.f32.mrf.mxu0
    %v614 = vadd.f32 0.0, %v613
    %v615 = vpop.f32.mrf.mxu0
    %v616 = vadd.f32 0.0, %v615
    %617 = vmatprep.mubr.bf16.mxu0 0
    %618 = vmatmul.mubr.bf16.gmra.mxu0 %v372
    %v619 = vpop.f32.mrf.mxu0
    %v620 = vadd.f32 0.0, %v619
    %v621 = vpop.f32.mrf.mxu0
    %v622 = vadd.f32 0.0, %v621
    %v623 = vpop.f32.mrf.mxu0
    %v624 = vadd.f32 0.0, %v623
    %v625 = vpop.f32.mrf.mxu0
    %v626 = vadd.f32 0.0, %v625
    %627 = vmatprep.mubr.bf16.mxu0 0
    %628 = vmatmul.mubr.bf16.gmra.mxu0 %v373
    %v629 = vpop.f32.mrf.mxu0
    %v630 = vadd.f32 0.0, %v629
    %v631 = vpop.f32.mrf.mxu0
    %v632 = vadd.f32 0.0, %v631
    %v633 = vpop.f32.mrf.mxu0
    %v634 = vadd.f32 0.0, %v633
    %v635 = vpop.f32.mrf.mxu0
    %v636 = vadd.f32 0.0, %v635
    %637 = vmatprep.mubr.bf16.mxu0 0
    %638 = vmatmul.mubr.bf16.gmra.mxu0 %v374
    %v639 = vpop.f32.mrf.mxu0
    %v640 = vadd.f32 0.0, %v639
    %v641 = vpop.f32.mrf.mxu0
    %v642 = vadd.f32 0.0, %v641
    %v643 = vpop.f32.mrf.mxu0
    %v644 = vadd.f32 0.0, %v643
    %v645 = vpop.f32.mrf.mxu0
    %v646 = vadd.f32 0.0, %v645
    %647 = vdwg.mxu0
    %648 = vmatprep.subr.bf16.mxu0 0
    %649 = vmatpush1.bf16.msra.mxu0 %v510
    %650 = vmatprep.subr.bf16.mxu0 0
    %651 = vmatpush1.bf16.msra.mxu0 %v507
    %652 = vmatprep.subr.bf16.mxu0 0
    %653 = vmatpush1.bf16.msra.mxu0 %v504
    %654 = vmatprep.subr.bf16.mxu0 0
    %655 = vmatpush1.bf16.msra.mxu0 %v501
    %656 = vmatprep.subr.bf16.mxu0 0
    %657 = vmatpush1.bf16.msra.mxu0 %v498
    %658 = vmatprep.subr.bf16.mxu0 0
    %659 = vmatpush1.bf16.msra.mxu0 %v495
    %660 = vmatprep.subr.bf16.mxu0 0
    %661 = vmatpush1.bf16.msra.mxu0 %v492
    %662 = vmatprep.subr.bf16.mxu0 0
    %663 = vmatpush1.bf16.msra.mxu0 %v489
    %664 = vmatprep.subr.bf16.mxu0 0
    %665 = vmatpush2.bf16.msra.mxu0 0
    %666 = vmatprep.subr.bf16.mxu0 0
    %667 = vmatpush2.bf16.msra.mxu0 0
    %668 = vmatprep.subr.bf16.mxu0 0
    %669 = vmatpush2.bf16.msra.mxu0 0
    %670 = vmatprep.subr.bf16.mxu0 0
    %671 = vmatpush2.bf16.msra.mxu0 0
    %672 = vmatprep.subr.bf16.mxu0 0
    %673 = vmatpush2.bf16.msra.mxu0 0
    %674 = vmatprep.subr.bf16.mxu0 0
    %675 = vmatpush2.bf16.msra.mxu0 0
    %676 = vmatprep.subr.bf16.mxu0 0
    %677 = vmatpush2.bf16.msra.mxu0 0
    %678 = vmatprep.subr.bf16.mxu0 0
    %679 = vmatpush2.bf16.msra.mxu0 0
    %680 = vmatprep.mubr.bf16.mxu0 0
    %681 = vmatmul.mubr.bf16.gmra.mxu0 %v367
    %v682 = vpop.f32.mrf.mxu0
    %v683 = vadd.f32 0.0, %v682
    %v684 = vpop.f32.mrf.mxu0
    %v685 = vpop.f32.mrf.mxu0
    %v686 = vadd.f32 0.0, %v685
    %v687 = vpop.f32.mrf.mxu0
    %688 = vmatprep.mubr.bf16.mxu0 0
    %689 = vmatmul.mubr.bf16.gmra.mxu0 %v368
    %v690 = vpop.f32.mrf.mxu0
    %v691 = vadd.f32 0.0, %v690
    %v692 = vpop.f32.mrf.mxu0
    %v693 = vpop.f32.mrf.mxu0
    %v694 = vadd.f32 0.0, %v693
    %v695 = vpop.f32.mrf.mxu0
    %696 = vmatprep.mubr.bf16.mxu0 0
    %697 = vmatmul.mubr.bf16.gmra.mxu0 %v369
    %v698 = vpop.f32.mrf.mxu0
    %v699 = vadd.f32 0.0, %v698
    %v700 = vpop.f32.mrf.mxu0
    %v701 = vpop.f32.mrf.mxu0
    %v702 = vadd.f32 0.0, %v701
    %v703 = vpop.f32.mrf.mxu0
    %704 = vmatprep.mubr.bf16.mxu0 0
    %705 = vmatmul.mubr.bf16.gmra.mxu0 %v370
    %v706 = vpop.f32.mrf.mxu0
    %v707 = vadd.f32 0.0, %v706
    %v708 = vpop.f32.mrf.mxu0
    %v709 = vpop.f32.mrf.mxu0
    %v710 = vadd.f32 0.0, %v709
    %v711 = vpop.f32.mrf.mxu0
    %712 = vmatprep.mubr.bf16.mxu0 0
    %713 = vmatmul.mubr.bf16.gmra.mxu0 %v371
    %v714 = vpop.f32.mrf.mxu0
    %v715 = vadd.f32 0.0, %v714
    %v716 = vpop.f32.mrf.mxu0
    %v717 = vpop.f32.mrf.mxu0
    %v718 = vadd.f32 0.0, %v717
    %v719 = vpop.f32.mrf.mxu0
    %720 = vmatprep.mubr.bf16.mxu0 0
    %721 = vmatmul.mubr.bf16.gmra.mxu0 %v372
    %v722 = vpop.f32.mrf.mxu0
    %v723 = vadd.f32 0.0, %v722
    %v724 = vpop.f32.mrf.mxu0
    %v725 = vpop.f32.mrf.mxu0
    %v726 = vadd.f32 0.0, %v725
    %v727 = vpop.f32.mrf.mxu0
    %728 = vmatprep.mubr.bf16.mxu0 0
    %729 = vmatmul.mubr.bf16.gmra.mxu0 %v373
    %v730 = vpop.f32.mrf.mxu0
    %v731 = vadd.f32 0.0, %v730
    %v732 = vpop.f32.mrf.mxu0
    %v733 = vpop.f32.mrf.mxu0
    %v734 = vadd.f32 0.0, %v733
    %v735 = vpop.f32.mrf.mxu0
    %736 = vmatprep.mubr.bf16.mxu0 0
    %737 = vmatmul.mubr.bf16.gmra.mxu0 %v374
    %v738 = vpop.f32.mrf.mxu0
    %v739 = vadd.f32 0.0, %v738
    %v740 = vpop.f32.mrf.mxu0
    %v741 = vpop.f32.mrf.mxu0
    %v742 = vadd.f32 0.0, %v741
    %v743 = vpop.f32.mrf.mxu0
    %744 = vdwg.mxu0
    %v745 = vmul.f32 %v570, 0.088388346
    %v746 = vmul.f32 %v574, 0.088388346
    %v747 = vmul.f32 %v580, 0.088388346
    %v748 = vmul.f32 %v584, 0.088388346
    %v749 = vmul.f32 %v590, 0.088388346
    %v750 = vmul.f32 %v594, 0.088388346
    %v751 = vmul.f32 %v600, 0.088388346
    %v752 = vmul.f32 %v604, 0.088388346
    %v753 = vmul.f32 %v610, 0.088388346
    %v754 = vmul.f32 %v614, 0.088388346
    %v755 = vmul.f32 %v620, 0.088388346
    %v756 = vmul.f32 %v624, 0.088388346
    %v757 = vmul.f32 %v630, 0.088388346
    %v758 = vmul.f32 %v634, 0.088388346
    %v759 = vmul.f32 %v640, 0.088388346
    %v760 = vmul.f32 %v644, 0.088388346
    %v761 = vpack.c.bf16 %v746, %v745
    %v762 = vpack.c.bf16 %v748, %v747
    %v763 = vpack.c.bf16 %v750, %v749
    %v764 = vpack.c.bf16 %v752, %v751
    %v765 = vpack.c.bf16 %v754, %v753
    %v766 = vpack.c.bf16 %v756, %v755
    %v767 = vpack.c.bf16 %v758, %v757
    %v768 = vpack.c.bf16 %v760, %v759
    %v769 = vpack.c.bf16 %v576, %v572
    %v770 = vpack.c.bf16 %v586, %v582
    %v771 = vpack.c.bf16 %v596, %v592
    %v772 = vpack.c.bf16 %v606, %v602
    %v773 = vpack.c.bf16 %v616, %v612
    %v774 = vpack.c.bf16 %v626, %v622
    %v775 = vpack.c.bf16 %v636, %v632
    %v776 = vpack.c.bf16 %v646, %v642
    %v777 = vpack.c.bf16 %v686, %v683
    %v778 = vpack.c.bf16 %v694, %v691
    %v779 = vpack.c.bf16 %v702, %v699
    %v780 = vpack.c.bf16 %v710, %v707
    %v781 = vpack.c.bf16 %v718, %v715
    %v782 = vpack.c.bf16 %v726, %v723
    %v783 = vpack.c.bf16 %v734, %v731
    %v784 = vpack.c.bf16 %v742, %v739
    %793 = vrot.lane.b32.xlu0 %v761, 96
    %v794 = vpop.permute.xlu0 %793
    %795 = vrot.lane.b32.xlu0 %v762, 96
    %v796 = vpop.permute.xlu0 %795
    %797 = vrot.lane.b32.xlu0 %v763, 96
    %v798 = vpop.permute.xlu0 %797
    %799 = vrot.lane.b32.xlu0 %v764, 96
    %v800 = vpop.permute.xlu0 %799
    %801 = vrot.lane.b32.xlu0 %v765, 96
    %v802 = vpop.permute.xlu0 %801
    %803 = vrot.lane.b32.xlu0 %v766, 96
    %v804 = vpop.permute.xlu0 %803
    %805 = vrot.lane.b32.xlu0 %v767, 96
    %v806 = vpop.permute.xlu0 %805
    %807 = vrot.lane.b32.xlu0 %v768, 96
    %v808 = vpop.permute.xlu0 %807
    %809 = vrot.lane.b32.xlu0 %v761, 64
    %v810 = vpop.permute.xlu0 %809
    %811 = vrot.lane.b32.xlu0 %v762, 64
    %v812 = vpop.permute.xlu0 %811
    %813 = vrot.lane.b32.xlu0 %v763, 64
    %v814 = vpop.permute.xlu0 %813
    %815 = vrot.lane.b32.xlu0 %v764, 64
    %v816 = vpop.permute.xlu0 %815
    %817 = vrot.lane.b32.xlu0 %v765, 64
    %v818 = vpop.permute.xlu0 %817
    %819 = vrot.lane.b32.xlu0 %v766, 64
    %v820 = vpop.permute.xlu0 %819
    %821 = vrot.lane.b32.xlu0 %v767, 64
    %v822 = vpop.permute.xlu0 %821
    %823 = vrot.lane.b32.xlu0 %v768, 64
    %v824 = vpop.permute.xlu0 %823
    %825 = vrot.lane.b32.xlu0 %v761, 32
    %v826 = vpop.permute.xlu0 %825
    %827 = vrot.lane.b32.xlu0 %v762, 32
    %v828 = vpop.permute.xlu0 %827
    %829 = vrot.lane.b32.xlu0 %v763, 32
    %v830 = vpop.permute.xlu0 %829
    %831 = vrot.lane.b32.xlu0 %v764, 32
    %v832 = vpop.permute.xlu0 %831
    %833 = vrot.lane.b32.xlu0 %v765, 32
    %v834 = vpop.permute.xlu0 %833
    %835 = vrot.lane.b32.xlu0 %v766, 32
    %v836 = vpop.permute.xlu0 %835
    %837 = vrot.lane.b32.xlu0 %v767, 32
    %v838 = vpop.permute.xlu0 %837
    %839 = vrot.lane.b32.xlu0 %v768, 32
    %v840 = vpop.permute.xlu0 %839
    %849 = vrot.lane.b32.xlu0 %v769, 96
    %v850 = vpop.permute.xlu0 %849
    %851 = vrot.lane.b32.xlu0 %v770, 96
    %v852 = vpop.permute.xlu0 %851
    %853 = vrot.lane.b32.xlu0 %v771, 96
    %v854 = vpop.permute.xlu0 %853
    %855 = vrot.lane.b32.xlu0 %v772, 96
    %v856 = vpop.permute.xlu0 %855
    %857 = vrot.lane.b32.xlu0 %v773, 96
    %v858 = vpop.permute.xlu0 %857
    %859 = vrot.lane.b32.xlu0 %v774, 96
    %v860 = vpop.permute.xlu0 %859
    %861 = vrot.lane.b32.xlu0 %v775, 96
    %v862 = vpop.permute.xlu0 %861
    %863 = vrot.lane.b32.xlu0 %v776, 96
    %v864 = vpop.permute.xlu0 %863
    %865 = vrot.lane.b32.xlu0 %v769, 64
    %v866 = vpop.permute.xlu0 %865
    %867 = vrot.lane.b32.xlu0 %v770, 64
    %v868 = vpop.permute.xlu0 %867
    %869 = vrot.lane.b32.xlu0 %v771, 64
    %v870 = vpop.permute.xlu0 %869
    %871 = vrot.lane.b32.xlu0 %v772, 64
    %v872 = vpop.permute.xlu0 %871
    %873 = vrot.lane.b32.xlu0 %v773, 64
    %v874 = vpop.permute.xlu0 %873
    %875 = vrot.lane.b32.xlu0 %v774, 64
    %v876 = vpop.permute.xlu0 %875
    %877 = vrot.lane.b32.xlu0 %v775, 64
    %v878 = vpop.permute.xlu0 %877
    %879 = vrot.lane.b32.xlu0 %v776, 64
    %v880 = vpop.permute.xlu0 %879
    %881 = vrot.lane.b32.xlu0 %v769, 32
    %v882 = vpop.permute.xlu0 %881
    %883 = vrot.lane.b32.xlu0 %v770, 32
    %v884 = vpop.permute.xlu0 %883
    %885 = vrot.lane.b32.xlu0 %v771, 32
    %v886 = vpop.permute.xlu0 %885
    %887 = vrot.lane.b32.xlu0 %v772, 32
    %v888 = vpop.permute.xlu0 %887
    %889 = vrot.lane.b32.xlu0 %v773, 32
    %v890 = vpop.permute.xlu0 %889
    %891 = vrot.lane.b32.xlu0 %v774, 32
    %v892 = vpop.permute.xlu0 %891
    %893 = vrot.lane.b32.xlu0 %v775, 32
    %v894 = vpop.permute.xlu0 %893
    %895 = vrot.lane.b32.xlu0 %v776, 32
    %v896 = vpop.permute.xlu0 %895
    %905 = vrot.lane.b32.xlu0 %v777, 96
    %v906 = vpop.permute.xlu0 %905
    %907 = vrot.lane.b32.xlu0 %v778, 96
    %v908 = vpop.permute.xlu0 %907
    %909 = vrot.lane.b32.xlu0 %v779, 96
    %v910 = vpop.permute.xlu0 %909
    %911 = vrot.lane.b32.xlu0 %v780, 96
    %v912 = vpop.permute.xlu0 %911
    %913 = vrot.lane.b32.xlu0 %v781, 96
    %v914 = vpop.permute.xlu0 %913
    %915 = vrot.lane.b32.xlu0 %v782, 96
    %v916 = vpop.permute.xlu0 %915
    %917 = vrot.lane.b32.xlu0 %v783, 96
    %v918 = vpop.permute.xlu0 %917
    %919 = vrot.lane.b32.xlu0 %v784, 96
    %v920 = vpop.permute.xlu0 %919
    %929 = vrot.lane.b32.xlu0 %v777, 64
    %v930 = vpop.permute.xlu0 %929
    %931 = vrot.lane.b32.xlu0 %v778, 64
    %v932 = vpop.permute.xlu0 %931
    %933 = vrot.lane.b32.xlu0 %v779, 64
    %v934 = vpop.permute.xlu0 %933
    %935 = vrot.lane.b32.xlu0 %v780, 64
    %v936 = vpop.permute.xlu0 %935
    %937 = vrot.lane.b32.xlu0 %v781, 64
    %v938 = vpop.permute.xlu0 %937
    %939 = vrot.lane.b32.xlu0 %v782, 64
    %v940 = vpop.permute.xlu0 %939
    %941 = vrot.lane.b32.xlu0 %v783, 64
    %v942 = vpop.permute.xlu0 %941
    %943 = vrot.lane.b32.xlu0 %v784, 64
    %v944 = vpop.permute.xlu0 %943
    %953 = vrot.lane.b32.xlu0 %v777, 32
    %v954 = vpop.permute.xlu0 %953
    %955 = vrot.lane.b32.xlu0 %v778, 32
    %v956 = vpop.permute.xlu0 %955
    %957 = vrot.lane.b32.xlu0 %v779, 32
    %v958 = vpop.permute.xlu0 %957
    %959 = vrot.lane.b32.xlu0 %v780, 32
    %v960 = vpop.permute.xlu0 %959
    %961 = vrot.lane.b32.xlu0 %v781, 32
    %v962 = vpop.permute.xlu0 %961
    %963 = vrot.lane.b32.xlu0 %v782, 32
    %v964 = vpop.permute.xlu0 %963
    %965 = vrot.lane.b32.xlu0 %v783, 32
    %v966 = vpop.permute.xlu0 %965
    %967 = vrot.lane.b32.xlu0 %v784, 32
    %v968 = vpop.permute.xlu0 %967
    %v977 = vld [vmem:[#allocation5] sm:$0xff]
    %v978 = vld [vmem:[#allocation5 + $0x8] sm:$0xff]
    %v979 = vld [vmem:[#allocation5 + $0x10] sm:$0xff]
    %v980 = vld [vmem:[#allocation5 + $0x18] sm:$0xff]
    %v981 = vld [vmem:[#allocation5 + $0x20] sm:$0xff]
    %v982 = vld [vmem:[#allocation5 + $0x28] sm:$0xff]
    %v983 = vld [vmem:[#allocation5 + $0x30] sm:$0xff]
    %v984 = vld [vmem:[#allocation5 + $0x38] sm:$0xff]
    %vm985 = vcmask 261120
    %v987 = vsel %vm985, %v761, 0
    %v990 = vsel %vm985, %v762, 0
    %v993 = vsel %vm985, %v763, 0
    %v996 = vsel %vm985, %v764, 0
    %v999 = vsel %vm985, %v769, 0
    %v1002 = vsel %vm985, %v770, 0
    %v1005 = vsel %vm985, %v771, 0
    %v1008 = vsel %vm985, %v772, 0
    %1010 = vmatprep.subr.bf16.mxu0 0
    %1011 = vmatpush1.bf16.xpose.msra.mxu0 0
    %1012 = vmatprep.subr.bf16.mxu0 0
    %1013 = vmatpush1.bf16.xpose.msra.mxu0 0
    %1014 = vmatprep.subr.bf16.mxu0 0
    %1015 = vmatpush1.bf16.xpose.msra.mxu0 0
    %1016 = vmatprep.subr.bf16.mxu0 0
    %1017 = vmatpush1.bf16.xpose.msra.mxu0 0
    %1018 = vmatprep.subr.bf16.mxu0 0
    %1019 = vmatpush1.bf16.xpose.msra.mxu0 %v1008
    %1020 = vmatprep.subr.bf16.mxu0 0
    %1021 = vmatpush1.bf16.xpose.msra.mxu0 %v1005
    %1022 = vmatprep.subr.bf16.mxu0 0
    %1023 = vmatpush1.bf16.xpose.msra.mxu0 %v1002
    %1024 = vmatprep.subr.bf16.mxu0 0
    %1025 = vmatpush1.bf16.xpose.msra.mxu0 %v999
    %1026 = vmatprep.subr.bf16.mxu0 0
    %1027 = vmatpush2.bf16.xpose.msra.mxu0 0
    %1028 = vmatprep.subr.bf16.mxu0 0
    %1029 = vmatpush2.bf16.xpose.msra.mxu0 0
    %1030 = vmatprep.subr.bf16.mxu0 0
    %1031 = vmatpush2.bf16.xpose.msra.mxu0 0
    %1032 = vmatprep.subr.bf16.mxu0 0
    %1033 = vmatpush2.bf16.xpose.msra.mxu0 0
    %1034 = vmatprep.subr.bf16.mxu0 0
    %1035 = vmatpush2.bf16.xpose.msra.mxu0 0
    %1036 = vmatprep.subr.bf16.mxu0 0
    %1037 = vmatpush2.bf16.xpose.msra.mxu0 0
    %1038 = vmatprep.subr.bf16.mxu0 0
    %1039 = vmatpush2.bf16.xpose.msra.mxu0 0
    %1040 = vmatprep.subr.bf16.mxu0 0
    %1041 = vmatpush2.bf16.xpose.msra.mxu0 0
    %1042 = vmatprep.mubr.bf16.mxu0 0
    %1043 = vmatmul.mubr.bf16.gmra.mxu0 %v987
    %v1044 = vpop.f32.mrf.mxu0
    %v1045 = vadd.f32 %v977, %v1044
    %v1046 = vpop.f32.mrf.mxu0
    %v1047 = vpop.f32.mrf.mxu0
    %v1048 = vadd.f32 %v978, %v1047
    %v1049 = vpop.f32.mrf.mxu0
    %1050 = vmatprep.mubr.bf16.mxu0 0
    %1051 = vmatmul.mubr.bf16.gmra.mxu0 %v990
    %v1052 = vpop.f32.mrf.mxu0
    %v1053 = vadd.f32 %v979, %v1052
    %v1054 = vpop.f32.mrf.mxu0
    %v1055 = vpop.f32.mrf.mxu0
    %v1056 = vadd.f32 %v980, %v1055
    %v1057 = vpop.f32.mrf.mxu0
    %1058 = vmatprep.mubr.bf16.mxu0 0
    %1059 = vmatmul.mubr.bf16.gmra.mxu0 %v993
    %v1060 = vpop.f32.mrf.mxu0
    %v1061 = vadd.f32 %v981, %v1060
    %v1062 = vpop.f32.mrf.mxu0
    %v1063 = vpop.f32.mrf.mxu0
    %v1064 = vadd.f32 %v982, %v1063
    %v1065 = vpop.f32.mrf.mxu0
    %1066 = vmatprep.mubr.bf16.mxu0 0
    %1067 = vmatmul.mubr.bf16.gmra.mxu0 %v996
    %v1068 = vpop.f32.mrf.mxu0
    %v1069 = vadd.f32 %v983, %v1068
    %v1070 = vpop.f32.mrf.mxu0
    %v1071 = vpop.f32.mrf.mxu0
    %v1072 = vadd.f32 %v984, %v1071
    %v1073 = vpop.f32.mrf.mxu0
    %1074 = vdwg.mxu0
    %v1076 = vsel %vm985, %v765, 0
    %v1079 = vsel %vm985, %v766, 0
    %v1082 = vsel %vm985, %v767, 0
    %v1085 = vsel %vm985, %v768, 0
    %v1088 = vsel %vm985, %v773, 0
    %v1091 = vsel %vm985, %v774, 0
    %v1094 = vsel %vm985, %v775, 0
    %v1097 = vsel %vm985, %v776, 0
    %1099 = vmatprep.subr.bf16.mxu0 0
    %1100 = vmatpush1.bf16.xpose.msra.mxu0 0
    %1101 = vmatprep.subr.bf16.mxu0 0
    %1102 = vmatpush1.bf16.xpose.msra.mxu0 0
    %1103 = vmatprep.subr.bf16.mxu0 0
    %1104 = vmatpush1.bf16.xpose.msra.mxu0 0
    %1105 = vmatprep.subr.bf16.mxu0 0
    %1106 = vmatpush1.bf16.xpose.msra.mxu0 0
    %1107 = vmatprep.subr.bf16.mxu0 0
    %1108 = vmatpush1.bf16.xpose.msra.mxu0 %v1097
    %1109 = vmatprep.subr.bf16.mxu0 0
    %1110 = vmatpush1.bf16.xpose.msra.mxu0 %v1094
    %1111 = vmatprep.subr.bf16.mxu0 0
    %1112 = vmatpush1.bf16.xpose.msra.mxu0 %v1091
    %1113 = vmatprep.subr.bf16.mxu0 0
    %1114 = vmatpush1.bf16.xpose.msra.mxu0 %v1088
    %1115 = vmatprep.subr.bf16.mxu0 0
    %1116 = vmatpush2.bf16.xpose.msra.mxu0 0
    %1117 = vmatprep.subr.bf16.mxu0 0
    %1118 = vmatpush2.bf16.xpose.msra.mxu0 0
    %1119 = vmatprep.subr.bf16.mxu0 0
    %1120 = vmatpush2.bf16.xpose.msra.mxu0 0
    %1121 = vmatprep.subr.bf16.mxu0 0
    %1122 = vmatpush2.bf16.xpose.msra.mxu0 0
    %1123 = vmatprep.subr.bf16.mxu0 0
    %1124 = vmatpush2.bf16.xpose.msra.mxu0 0
    %1125 = vmatprep.subr.bf16.mxu0 0
    %1126 = vmatpush2.bf16.xpose.msra.mxu0 0
    %1127 = vmatprep.subr.bf16.mxu0 0
    %1128 = vmatpush2.bf16.xpose.msra.mxu0 0
    %1129 = vmatprep.subr.bf16.mxu0 0
    %1130 = vmatpush2.bf16.xpose.msra.mxu0 0
    %1131 = vmatprep.mubr.bf16.mxu0 0
    %1132 = vmatmul.mubr.bf16.gmra.mxu0 %v1076
    %v1133 = vpop.f32.mrf.mxu0
    %v1134 = vadd.f32 %v977, %v1133
    %v1135 = vpop.f32.mrf.mxu0
    %v1136 = vpop.f32.mrf.mxu0
    %v1137 = vadd.f32 %v978, %v1136
    %v1138 = vpop.f32.mrf.mxu0
    %1139 = vmatprep.mubr.bf16.mxu0 0
    %1140 = vmatmul.mubr.bf16.gmra.mxu0 %v1079
    %v1141 = vpop.f32.mrf.mxu0
    %v1142 = vadd.f32 %v979, %v1141
    %v1143 = vpop.f32.mrf.mxu0
    %v1144 = vpop.f32.mrf.mxu0
    %v1145 = vadd.f32 %v980, %v1144
    %v1146 = vpop.f32.mrf.mxu0
    %1147 = vmatprep.mubr.bf16.mxu0 0
    %1148 = vmatmul.mubr.bf16.gmra.mxu0 %v1082
    %v1149 = vpop.f32.mrf.mxu0
    %v1150 = vadd.f32 %v981, %v1149
    %v1151 = vpop.f32.mrf.mxu0
    %v1152 = vpop.f32.mrf.mxu0
    %v1153 = vadd.f32 %v982, %v1152
    %v1154 = vpop.f32.mrf.mxu0
    %1155 = vmatprep.mubr.bf16.mxu0 0
    %1156 = vmatmul.mubr.bf16.gmra.mxu0 %v1085
    %v1157 = vpop.f32.mrf.mxu0
    %v1158 = vadd.f32 %v983, %v1157
    %v1159 = vpop.f32.mrf.mxu0
    %v1160 = vpop.f32.mrf.mxu0
    %v1161 = vadd.f32 %v984, %v1160
    %v1162 = vpop.f32.mrf.mxu0
    %1163 = vdwg.mxu0
    %v1165 = vsel %vm985, %v794, 0
    %v1168 = vsel %vm985, %v796, 0
    %v1171 = vsel %vm985, %v798, 0
    %v1174 = vsel %vm985, %v800, 0
    %v1177 = vsel %vm985, %v850, 0
    %v1180 = vsel %vm985, %v852, 0
    %v1183 = vsel %vm985, %v854, 0
    %v1186 = vsel %vm985, %v856, 0
    %1188 = vmatprep.subr.bf16.mxu0 0
    %1189 = vmatpush1.bf16.xpose.msra.mxu0 0
    %1190 = vmatprep.subr.bf16.mxu0 0
    %1191 = vmatpush1.bf16.xpose.msra.mxu0 0
    %1192 = vmatprep.subr.bf16.mxu0 0
    %1193 = vmatpush1.bf16.xpose.msra.mxu0 0
    %1194 = vmatprep.subr.bf16.mxu0 0
    %1195 = vmatpush1.bf16.xpose.msra.mxu0 0
    %1196 = vmatprep.subr.bf16.mxu0 0
    %1197 = vmatpush1.bf16.xpose.msra.mxu0 %v1186
    %1198 = vmatprep.subr.bf16.mxu0 0
    %1199 = vmatpush1.bf16.xpose.msra.mxu0 %v1183
    %1200 = vmatprep.subr.bf16.mxu0 0
    %1201 = vmatpush1.bf16.xpose.msra.mxu0 %v1180
    %1202 = vmatprep.subr.bf16.mxu0 0
    %1203 = vmatpush1.bf16.xpose.msra.mxu0 %v1177
    %1204 = vmatprep.subr.bf16.mxu0 0
    %1205 = vmatpush2.bf16.xpose.msra.mxu0 0
    %1206 = vmatprep.subr.bf16.mxu0 0
    %1207 = vmatpush2.bf16.xpose.msra.mxu0 0
    %1208 = vmatprep.subr.bf16.mxu0 0
    %1209 = vmatpush2.bf16.xpose.msra.mxu0 0
    %1210 = vmatprep.subr.bf16.mxu0 0
    %1211 = vmatpush2.bf16.xpose.msra.mxu0 0
    %1212 = vmatprep.subr.bf16.mxu0 0
    %1213 = vmatpush2.bf16.xpose.msra.mxu0 0
    %1214 = vmatprep.subr.bf16.mxu0 0
    %1215 = vmatpush2.bf16.xpose.msra.mxu0 0
    %1216 = vmatprep.subr.bf16.mxu0 0
    %1217 = vmatpush2.bf16.xpose.msra.mxu0 0
    %1218 = vmatprep.subr.bf16.mxu0 0
    %1219 = vmatpush2.bf16.xpose.msra.mxu0 0
    %1220 = vmatprep.mubr.bf16.mxu0 0
    %1221 = vmatmul.mubr.bf16.gmra.mxu0 %v1165
    %v1222 = vpop.f32.mrf.mxu0
    %v1223 = vadd.f32 %v977, %v1222
    %v1224 = vpop.f32.mrf.mxu0
    %v1225 = vpop.f32.mrf.mxu0
    %v1226 = vadd.f32 %v978, %v1225
    %v1227 = vpop.f32.mrf.mxu0
    %1228 = vmatprep.mubr.bf16.mxu0 0
    %1229 = vmatmul.mubr.bf16.gmra.mxu0 %v1168
    %v1230 = vpop.f32.mrf.mxu0
    %v1231 = vadd.f32 %v979, %v1230
    %v1232 = vpop.f32.mrf.mxu0
    %v1233 = vpop.f32.mrf.mxu0
    %v1234 = vadd.f32 %v980, %v1233
    %v1235 = vpop.f32.mrf.mxu0
    %1236 = vmatprep.mubr.bf16.mxu0 0
    %1237 = vmatmul.mubr.bf16.gmra.mxu0 %v1171
    %v1238 = vpop.f32.mrf.mxu0
    %v1239 = vadd.f32 %v981, %v1238
    %v1240 = vpop.f32.mrf.mxu0
    %v1241 = vpop.f32.mrf.mxu0
    %v1242 = vadd.f32 %v982, %v1241
    %v1243 = vpop.f32.mrf.mxu0
    %1244 = vmatprep.mubr.bf16.mxu0 0
    %1245 = vmatmul.mubr.bf16.gmra.mxu0 %v1174
    %v1246 = vpop.f32.mrf.mxu0
    %v1247 = vadd.f32 %v983, %v1246
    %v1248 = vpop.f32.mrf.mxu0
    %v1249 = vpop.f32.mrf.mxu0
    %v1250 = vadd.f32 %v984, %v1249
    %v1251 = vpop.f32.mrf.mxu0
    %1252 = vdwg.mxu0
    %v1254 = vsel %vm985, %v802, 0
    %v1257 = vsel %vm985, %v804, 0
    %v1260 = vsel %vm985, %v806, 0
    %v1263 = vsel %vm985, %v808, 0
    %v1266 = vsel %vm985, %v858, 0
    %v1269 = vsel %vm985, %v860, 0
    %v1272 = vsel %vm985, %v862, 0
    %v1275 = vsel %vm985, %v864, 0
    %1277 = vmatprep.subr.bf16.mxu0 0
    %1278 = vmatpush1.bf16.xpose.msra.mxu0 0
    %1279 = vmatprep.subr.bf16.mxu0 0
    %1280 = vmatpush1.bf16.xpose.msra.mxu0 0
    %1281 = vmatprep.subr.bf16.mxu0 0
    %1282 = vmatpush1.bf16.xpose.msra.mxu0 0
    %1283 = vmatprep.subr.bf16.mxu0 0
    %1284 = vmatpush1.bf16.xpose.msra.mxu0 0
    %1285 = vmatprep.subr.bf16.mxu0 0
    %1286 = vmatpush1.bf16.xpose.msra.mxu0 %v1275
    %1287 = vmatprep.subr.bf16.mxu0 0
    %1288 = vmatpush1.bf16.xpose.msra.mxu0 %v1272
    %1289 = vmatprep.subr.bf16.mxu0 0
    %1290 = vmatpush1.bf16.xpose.msra.mxu0 %v1269
    %1291 = vmatprep.subr.bf16.mxu0 0
    %1292 = vmatpush1.bf16.xpose.msra.mxu0 %v1266
    %1293 = vmatprep.subr.bf16.mxu0 0
    %1294 = vmatpush2.bf16.xpose.msra.mxu0 0
    %1295 = vmatprep.subr.bf16.mxu0 0
    %1296 = vmatpush2.bf16.xpose.msra.mxu0 0
    %1297 = vmatprep.subr.bf16.mxu0 0
    %1298 = vmatpush2.bf16.xpose.msra.mxu0 0
    %1299 = vmatprep.subr.bf16.mxu0 0
    %1300 = vmatpush2.bf16.xpose.msra.mxu0 0
    %1301 = vmatprep.subr.bf16.mxu0 0
    %1302 = vmatpush2.bf16.xpose.msra.mxu0 0
    %1303 = vmatprep.subr.bf16.mxu0 0
    %1304 = vmatpush2.bf16.xpose.msra.mxu0 0
    %1305 = vmatprep.subr.bf16.mxu0 0
    %1306 = vmatpush2.bf16.xpose.msra.mxu0 0
    %1307 = vmatprep.subr.bf16.mxu0 0
    %1308 = vmatpush2.bf16.xpose.msra.mxu0 0
    %1309 = vmatprep.mubr.bf16.mxu0 0
    %1310 = vmatmul.mubr.bf16.gmra.mxu0 %v1254
    %v1311 = vpop.f32.mrf.mxu0
    %v1312 = vadd.f32 %v977, %v1311
    %v1313 = vpop.f32.mrf.mxu0
    %v1314 = vpop.f32.mrf.mxu0
    %v1315 = vadd.f32 %v978, %v1314
    %v1316 = vpop.f32.mrf.mxu0
    %1317 = vmatprep.mubr.bf16.mxu0 0
    %1318 = vmatmul.mubr.bf16.gmra.mxu0 %v1257
    %v1319 = vpop.f32.mrf.mxu0
    %v1320 = vadd.f32 %v979, %v1319
    %v1321 = vpop.f32.mrf.mxu0
    %v1322 = vpop.f32.mrf.mxu0
    %v1323 = vadd.f32 %v980, %v1322
    %v1324 = vpop.f32.mrf.mxu0
    %1325 = vmatprep.mubr.bf16.mxu0 0
    %1326 = vmatmul.mubr.bf16.gmra.mxu0 %v1260
    %v1327 = vpop.f32.mrf.mxu0
    %v1328 = vadd.f32 %v981, %v1327
    %v1329 = vpop.f32.mrf.mxu0
    %v1330 = vpop.f32.mrf.mxu0
    %v1331 = vadd.f32 %v982, %v1330
    %v1332 = vpop.f32.mrf.mxu0
    %1333 = vmatprep.mubr.bf16.mxu0 0
    %1334 = vmatmul.mubr.bf16.gmra.mxu0 %v1263
    %v1335 = vpop.f32.mrf.mxu0
    %v1336 = vadd.f32 %v983, %v1335
    %v1337 = vpop.f32.mrf.mxu0
    %v1338 = vpop.f32.mrf.mxu0
    %v1339 = vadd.f32 %v984, %v1338
    %v1340 = vpop.f32.mrf.mxu0
    %1341 = vdwg.mxu0
    %v1343 = vsel %vm985, %v810, 0
    %v1346 = vsel %vm985, %v812, 0
    %v1349 = vsel %vm985, %v814, 0
    %v1352 = vsel %vm985, %v816, 0
    %v1355 = vsel %vm985, %v866, 0
    %v1358 = vsel %vm985, %v868, 0
    %v1361 = vsel %vm985, %v870, 0
    %v1364 = vsel %vm985, %v872, 0
    %1366 = vmatprep.subr.bf16.mxu0 0
    %1367 = vmatpush1.bf16.xpose.msra.mxu0 0
    %1368 = vmatprep.subr.bf16.mxu0 0
    %1369 = vmatpush1.bf16.xpose.msra.mxu0 0
    %1370 = vmatprep.subr.bf16.mxu0 0
    %1371 = vmatpush1.bf16.xpose.msra.mxu0 0
    %1372 = vmatprep.subr.bf16.mxu0 0
    %1373 = vmatpush1.bf16.xpose.msra.mxu0 0
    %1374 = vmatprep.subr.bf16.mxu0 0
    %1375 = vmatpush1.bf16.xpose.msra.mxu0 %v1364
    %1376 = vmatprep.subr.bf16.mxu0 0
    %1377 = vmatpush1.bf16.xpose.msra.mxu0 %v1361
    %1378 = vmatprep.subr.bf16.mxu0 0
    %1379 = vmatpush1.bf16.xpose.msra.mxu0 %v1358
    %1380 = vmatprep.subr.bf16.mxu0 0
    %1381 = vmatpush1.bf16.xpose.msra.mxu0 %v1355
    %1382 = vmatprep.subr.bf16.mxu0 0
    %1383 = vmatpush2.bf16.xpose.msra.mxu0 0
    %1384 = vmatprep.subr.bf16.mxu0 0
    %1385 = vmatpush2.bf16.xpose.msra.mxu0 0
    %1386 = vmatprep.subr.bf16.mxu0 0
    %1387 = vmatpush2.bf16.xpose.msra.mxu0 0
    %1388 = vmatprep.subr.bf16.mxu0 0
    %1389 = vmatpush2.bf16.xpose.msra.mxu0 0
    %1390 = vmatprep.subr.bf16.mxu0 0
    %1391 = vmatpush2.bf16.xpose.msra.mxu0 0
    %1392 = vmatprep.subr.bf16.mxu0 0
    %1393 = vmatpush2.bf16.xpose.msra.mxu0 0
    %1394 = vmatprep.subr.bf16.mxu0 0
    %1395 = vmatpush2.bf16.xpose.msra.mxu0 0
    %1396 = vmatprep.subr.bf16.mxu0 0
    %1397 = vmatpush2.bf16.xpose.msra.mxu0 0
    %1398 = vmatprep.mubr.bf16.mxu0 0
    %1399 = vmatmul.mubr.bf16.gmra.mxu0 %v1343
    %v1400 = vpop.f32.mrf.mxu0
    %v1401 = vadd.f32 %v977, %v1400
    %v1402 = vpop.f32.mrf.mxu0
    %v1403 = vpop.f32.mrf.mxu0
    %v1404 = vadd.f32 %v978, %v1403
    %v1405 = vpop.f32.mrf.mxu0
    %1406 = vmatprep.mubr.bf16.mxu0 0
    %1407 = vmatmul.mubr.bf16.gmra.mxu0 %v1346
    %v1408 = vpop.f32.mrf.mxu0
    %v1409 = vadd.f32 %v979, %v1408
    %v1410 = vpop.f32.mrf.mxu0
    %v1411 = vpop.f32.mrf.mxu0
    %v1412 = vadd.f32 %v980, %v1411
    %v1413 = vpop.f32.mrf.mxu0
    %1414 = vmatprep.mubr.bf16.mxu0 0
    %1415 = vmatmul.mubr.bf16.gmra.mxu0 %v1349
    %v1416 = vpop.f32.mrf.mxu0
    %v1417 = vadd.f32 %v981, %v1416
    %v1418 = vpop.f32.mrf.mxu0
    %v1419 = vpop.f32.mrf.mxu0
    %v1420 = vadd.f32 %v982, %v1419
    %v1421 = vpop.f32.mrf.mxu0
    %1422 = vmatprep.mubr.bf16.mxu0 0
    %1423 = vmatmul.mubr.bf16.gmra.mxu0 %v1352
    %v1424 = vpop.f32.mrf.mxu0
    %v1425 = vadd.f32 %v983, %v1424
    %v1426 = vpop.f32.mrf.mxu0
    %v1427 = vpop.f32.mrf.mxu0
    %v1428 = vadd.f32 %v984, %v1427
    %v1429 = vpop.f32.mrf.mxu0
    %1430 = vdwg.mxu0
    %v1432 = vsel %vm985, %v818, 0
    %v1435 = vsel %vm985, %v820, 0
    %v1438 = vsel %vm985, %v822, 0
    %v1441 = vsel %vm985, %v824, 0
    %v1444 = vsel %vm985, %v874, 0
    %v1447 = vsel %vm985, %v876, 0
    %v1450 = vsel %vm985, %v878, 0
    %v1453 = vsel %vm985, %v880, 0
    %1455 = vmatprep.subr.bf16.mxu0 0
    %1456 = vmatpush1.bf16.xpose.msra.mxu0 0
    %1457 = vmatprep.subr.bf16.mxu0 0
    %1458 = vmatpush1.bf16.xpose.msra.mxu0 0
    %1459 = vmatprep.subr.bf16.mxu0 0
    %1460 = vmatpush1.bf16.xpose.msra.mxu0 0
    %1461 = vmatprep.subr.bf16.mxu0 0
    %1462 = vmatpush1.bf16.xpose.msra.mxu0 0
    %1463 = vmatprep.subr.bf16.mxu0 0
    %1464 = vmatpush1.bf16.xpose.msra.mxu0 %v1453
    %1465 = vmatprep.subr.bf16.mxu0 0
    %1466 = vmatpush1.bf16.xpose.msra.mxu0 %v1450
    %1467 = vmatprep.subr.bf16.mxu0 0
    %1468 = vmatpush1.bf16.xpose.msra.mxu0 %v1447
    %1469 = vmatprep.subr.bf16.mxu0 0
    %1470 = vmatpush1.bf16.xpose.msra.mxu0 %v1444
    %1471 = vmatprep.subr.bf16.mxu0 0
    %1472 = vmatpush2.bf16.xpose.msra.mxu0 0
    %1473 = vmatprep.subr.bf16.mxu0 0
    %1474 = vmatpush2.bf16.xpose.msra.mxu0 0
    %1475 = vmatprep.subr.bf16.mxu0 0
    %1476 = vmatpush2.bf16.xpose.msra.mxu0 0
    %1477 = vmatprep.subr.bf16.mxu0 0
    %1478 = vmatpush2.bf16.xpose.msra.mxu0 0
    %1479 = vmatprep.subr.bf16.mxu0 0
    %1480 = vmatpush2.bf16.xpose.msra.mxu0 0
    %1481 = vmatprep.subr.bf16.mxu0 0
    %1482 = vmatpush2.bf16.xpose.msra.mxu0 0
    %1483 = vmatprep.subr.bf16.mxu0 0
    %1484 = vmatpush2.bf16.xpose.msra.mxu0 0
    %1485 = vmatprep.subr.bf16.mxu0 0
    %1486 = vmatpush2.bf16.xpose.msra.mxu0 0
    %1487 = vmatprep.mubr.bf16.mxu0 0
    %1488 = vmatmul.mubr.bf16.gmra.mxu0 %v1432
    %v1489 = vpop.f32.mrf.mxu0
    %v1490 = vadd.f32 %v977, %v1489
    %v1491 = vpop.f32.mrf.mxu0
    %v1492 = vpop.f32.mrf.mxu0
    %v1493 = vadd.f32 %v978, %v1492
    %v1494 = vpop.f32.mrf.mxu0
    %1495 = vmatprep.mubr.bf16.mxu0 0
    %1496 = vmatmul.mubr.bf16.gmra.mxu0 %v1435
    %v1497 = vpop.f32.mrf.mxu0
    %v1498 = vadd.f32 %v979, %v1497
    %v1499 = vpop.f32.mrf.mxu0
    %v1500 = vpop.f32.mrf.mxu0
    %v1501 = vadd.f32 %v980, %v1500
    %v1502 = vpop.f32.mrf.mxu0
    %1503 = vmatprep.mubr.bf16.mxu0 0
    %1504 = vmatmul.mubr.bf16.gmra.mxu0 %v1438
    %v1505 = vpop.f32.mrf.mxu0
    %v1506 = vadd.f32 %v981, %v1505
    %v1507 = vpop.f32.mrf.mxu0
    %v1508 = vpop.f32.mrf.mxu0
    %v1509 = vadd.f32 %v982, %v1508
    %v1510 = vpop.f32.mrf.mxu0
    %1511 = vmatprep.mubr.bf16.mxu0 0
    %1512 = vmatmul.mubr.bf16.gmra.mxu0 %v1441
    %v1513 = vpop.f32.mrf.mxu0
    %v1514 = vadd.f32 %v983, %v1513
    %v1515 = vpop.f32.mrf.mxu0
    %v1516 = vpop.f32.mrf.mxu0
    %v1517 = vadd.f32 %v984, %v1516
    %v1518 = vpop.f32.mrf.mxu0
    %1519 = vdwg.mxu0
    %v1521 = vsel %vm985, %v826, 0
    %v1524 = vsel %vm985, %v828, 0
    %v1527 = vsel %vm985, %v830, 0
    %v1530 = vsel %vm985, %v832, 0
    %v1533 = vsel %vm985, %v882, 0
    %v1536 = vsel %vm985, %v884, 0
    %v1539 = vsel %vm985, %v886, 0
    %v1542 = vsel %vm985, %v888, 0
    %1544 = vmatprep.subr.bf16.mxu0 0
    %1545 = vmatpush1.bf16.xpose.msra.mxu0 0
    %1546 = vmatprep.subr.bf16.mxu0 0
    %1547 = vmatpush1.bf16.xpose.msra.mxu0 0
    %1548 = vmatprep.subr.bf16.mxu0 0
    %1549 = vmatpush1.bf16.xpose.msra.mxu0 0
    %1550 = vmatprep.subr.bf16.mxu0 0
    %1551 = vmatpush1.bf16.xpose.msra.mxu0 0
    %1552 = vmatprep.subr.bf16.mxu0 0
    %1553 = vmatpush1.bf16.xpose.msra.mxu0 %v1542
    %1554 = vmatprep.subr.bf16.mxu0 0
    %1555 = vmatpush1.bf16.xpose.msra.mxu0 %v1539
    %1556 = vmatprep.subr.bf16.mxu0 0
    %1557 = vmatpush1.bf16.xpose.msra.mxu0 %v1536
    %1558 = vmatprep.subr.bf16.mxu0 0
    %1559 = vmatpush1.bf16.xpose.msra.mxu0 %v1533
    %1560 = vmatprep.subr.bf16.mxu0 0
    %1561 = vmatpush2.bf16.xpose.msra.mxu0 0
    %1562 = vmatprep.subr.bf16.mxu0 0
    %1563 = vmatpush2.bf16.xpose.msra.mxu0 0
    %1564 = vmatprep.subr.bf16.mxu0 0
    %1565 = vmatpush2.bf16.xpose.msra.mxu0 0
    %1566 = vmatprep.subr.bf16.mxu0 0
    %1567 = vmatpush2.bf16.xpose.msra.mxu0 0
    %1568 = vmatprep.subr.bf16.mxu0 0
    %1569 = vmatpush2.bf16.xpose.msra.mxu0 0
    %1570 = vmatprep.subr.bf16.mxu0 0
    %1571 = vmatpush2.bf16.xpose.msra.mxu0 0
    %1572 = vmatprep.subr.bf16.mxu0 0
    %1573 = vmatpush2.bf16.xpose.msra.mxu0 0
    %1574 = vmatprep.subr.bf16.mxu0 0
    %1575 = vmatpush2.bf16.xpose.msra.mxu0 0
    %1576 = vmatprep.mubr.bf16.mxu0 0
    %1577 = vmatmul.mubr.bf16.gmra.mxu0 %v1521
    %v1578 = vpop.f32.mrf.mxu0
    %v1579 = vadd.f32 %v977, %v1578
    %v1580 = vpop.f32.mrf.mxu0
    %v1581 = vpop.f32.mrf.mxu0
    %v1582 = vadd.f32 %v978, %v1581
    %v1583 = vpop.f32.mrf.mxu0
    %1584 = vmatprep.mubr.bf16.mxu0 0
    %1585 = vmatmul.mubr.bf16.gmra.mxu0 %v1524
    %v1586 = vpop.f32.mrf.mxu0
    %v1587 = vadd.f32 %v979, %v1586
    %v1588 = vpop.f32.mrf.mxu0
    %v1589 = vpop.f32.mrf.mxu0
    %v1590 = vadd.f32 %v980, %v1589
    %v1591 = vpop.f32.mrf.mxu0
    %1592 = vmatprep.mubr.bf16.mxu0 0
    %1593 = vmatmul.mubr.bf16.gmra.mxu0 %v1527
    %v1594 = vpop.f32.mrf.mxu0
    %v1595 = vadd.f32 %v981, %v1594
    %v1596 = vpop.f32.mrf.mxu0
    %v1597 = vpop.f32.mrf.mxu0
    %v1598 = vadd.f32 %v982, %v1597
    %v1599 = vpop.f32.mrf.mxu0
    %1600 = vmatprep.mubr.bf16.mxu0 0
    %1601 = vmatmul.mubr.bf16.gmra.mxu0 %v1530
    %v1602 = vpop.f32.mrf.mxu0
    %v1603 = vadd.f32 %v983, %v1602
    %v1604 = vpop.f32.mrf.mxu0
    %v1605 = vpop.f32.mrf.mxu0
    %v1606 = vadd.f32 %v984, %v1605
    %v1607 = vpop.f32.mrf.mxu0
    %1608 = vdwg.mxu0
    %v1610 = vsel %vm985, %v834, 0
    %v1613 = vsel %vm985, %v836, 0
    %v1616 = vsel %vm985, %v838, 0
    %v1619 = vsel %vm985, %v840, 0
    %v1622 = vsel %vm985, %v890, 0
    %v1625 = vsel %vm985, %v892, 0
    %v1628 = vsel %vm985, %v894, 0
    %v1631 = vsel %vm985, %v896, 0
    %1633 = vmatprep.subr.bf16.mxu0 0
    %1634 = vmatpush1.bf16.xpose.msra.mxu0 0
    %1635 = vmatprep.subr.bf16.mxu0 0
    %1636 = vmatpush1.bf16.xpose.msra.mxu0 0
    %1637 = vmatprep.subr.bf16.mxu0 0
    %1638 = vmatpush1.bf16.xpose.msra.mxu0 0
    %1639 = vmatprep.subr.bf16.mxu0 0
    %1640 = vmatpush1.bf16.xpose.msra.mxu0 0
    %1641 = vmatprep.subr.bf16.mxu0 0
    %1642 = vmatpush1.bf16.xpose.msra.mxu0 %v1631
    %1643 = vmatprep.subr.bf16.mxu0 0
    %1644 = vmatpush1.bf16.xpose.msra.mxu0 %v1628
    %1645 = vmatprep.subr.bf16.mxu0 0
    %1646 = vmatpush1.bf16.xpose.msra.mxu0 %v1625
    %1647 = vmatprep.subr.bf16.mxu0 0
    %1648 = vmatpush1.bf16.xpose.msra.mxu0 %v1622
    %1649 = vmatprep.subr.bf16.mxu0 0
    %1650 = vmatpush2.bf16.xpose.msra.mxu0 0
    %1651 = vmatprep.subr.bf16.mxu0 0
    %1652 = vmatpush2.bf16.xpose.msra.mxu0 0
    %1653 = vmatprep.subr.bf16.mxu0 0
    %1654 = vmatpush2.bf16.xpose.msra.mxu0 0
    %1655 = vmatprep.subr.bf16.mxu0 0
    %1656 = vmatpush2.bf16.xpose.msra.mxu0 0
    %1657 = vmatprep.subr.bf16.mxu0 0
    %1658 = vmatpush2.bf16.xpose.msra.mxu0 0
    %1659 = vmatprep.subr.bf16.mxu0 0
    %1660 = vmatpush2.bf16.xpose.msra.mxu0 0
    %1661 = vmatprep.subr.bf16.mxu0 0
    %1662 = vmatpush2.bf16.xpose.msra.mxu0 0
    %1663 = vmatprep.subr.bf16.mxu0 0
    %1664 = vmatpush2.bf16.xpose.msra.mxu0 0
    %1665 = vmatprep.mubr.bf16.mxu0 0
    %1666 = vmatmul.mubr.bf16.gmra.mxu0 %v1610
    %v1667 = vpop.f32.mrf.mxu0
    %v1668 = vadd.f32 %v977, %v1667
    %v1669 = vpop.f32.mrf.mxu0
    %v1670 = vpop.f32.mrf.mxu0
    %v1671 = vadd.f32 %v978, %v1670
    %v1672 = vpop.f32.mrf.mxu0
    %1673 = vmatprep.mubr.bf16.mxu0 0
    %1674 = vmatmul.mubr.bf16.gmra.mxu0 %v1613
    %v1675 = vpop.f32.mrf.mxu0
    %v1676 = vadd.f32 %v979, %v1675
    %v1677 = vpop.f32.mrf.mxu0
    %v1678 = vpop.f32.mrf.mxu0
    %v1679 = vadd.f32 %v980, %v1678
    %v1680 = vpop.f32.mrf.mxu0
    %1681 = vmatprep.mubr.bf16.mxu0 0
    %1682 = vmatmul.mubr.bf16.gmra.mxu0 %v1616
    %v1683 = vpop.f32.mrf.mxu0
    %v1684 = vadd.f32 %v981, %v1683
    %v1685 = vpop.f32.mrf.mxu0
    %v1686 = vpop.f32.mrf.mxu0
    %v1687 = vadd.f32 %v982, %v1686
    %v1688 = vpop.f32.mrf.mxu0
    %1689 = vmatprep.mubr.bf16.mxu0 0
    %1690 = vmatmul.mubr.bf16.gmra.mxu0 %v1619
    %v1691 = vpop.f32.mrf.mxu0
    %v1692 = vadd.f32 %v983, %v1691
    %v1693 = vpop.f32.mrf.mxu0
    %v1694 = vpop.f32.mrf.mxu0
    %v1695 = vadd.f32 %v984, %v1694
    %v1696 = vpop.f32.mrf.mxu0
    %1697 = vdwg.mxu0
    %vm1698 = vcmask 523264
    %v1699 = vsel %vm1698, %v1045, -inf
    %1700 = vmax.xlane.f32.xlu0 %v1699
    %v1701 = vpop.xlane.xlu0 %1700
    %v1702 = vsel %vm1698, %v1048, -inf
    %1703 = vmax.xlane.f32.xlu0 %v1702
    %v1704 = vpop.xlane.xlu0 %1703
    %v1705 = vsel %vm1698, %v1053, -inf
    %1706 = vmax.xlane.f32.xlu0 %v1705
    %v1707 = vpop.xlane.xlu0 %1706
    %v1708 = vsel %vm1698, %v1056, -inf
    %1709 = vmax.xlane.f32.xlu0 %v1708
    %v1710 = vpop.xlane.xlu0 %1709
    %v1711 = vsel %vm1698, %v1061, -inf
    %1712 = vmax.xlane.f32.xlu0 %v1711
    %v1713 = vpop.xlane.xlu0 %1712
    %v1714 = vsel %vm1698, %v1064, -inf
    %1715 = vmax.xlane.f32.xlu0 %v1714
    %v1716 = vpop.xlane.xlu0 %1715
    %v1717 = vsel %vm1698, %v1069, -inf
    %1718 = vmax.xlane.f32.xlu0 %v1717
    %v1719 = vpop.xlane.xlu0 %1718
    %v1720 = vsel %vm1698, %v1072, -inf
    %1721 = vmax.xlane.f32.xlu0 %v1720
    %v1722 = vpop.xlane.xlu0 %1721
    %v1723 = vsel %vm1698, %v1134, -inf
    %1724 = vmax.xlane.f32.xlu0 %v1723
    %v1725 = vpop.xlane.xlu0 %1724
    %v1726 = vsel %vm1698, %v1137, -inf
    %1727 = vmax.xlane.f32.xlu0 %v1726
    %v1728 = vpop.xlane.xlu0 %1727
    %v1729 = vsel %vm1698, %v1142, -inf
    %1730 = vmax.xlane.f32.xlu0 %v1729
    %v1731 = vpop.xlane.xlu0 %1730
    %v1732 = vsel %vm1698, %v1145, -inf
    %1733 = vmax.xlane.f32.xlu0 %v1732
    %v1734 = vpop.xlane.xlu0 %1733
    %v1735 = vsel %vm1698, %v1150, -inf
    %1736 = vmax.xlane.f32.xlu0 %v1735
    %v1737 = vpop.xlane.xlu0 %1736
    %v1738 = vsel %vm1698, %v1153, -inf
    %1739 = vmax.xlane.f32.xlu0 %v1738
    %v1740 = vpop.xlane.xlu0 %1739
    %v1741 = vsel %vm1698, %v1158, -inf
    %1742 = vmax.xlane.f32.xlu0 %v1741
    %v1743 = vpop.xlane.xlu0 %1742
    %v1744 = vsel %vm1698, %v1161, -inf
    %1745 = vmax.xlane.f32.xlu0 %v1744
    %v1746 = vpop.xlane.xlu0 %1745
    %v1747 = vsel %vm1698, %v1223, -inf
    %1748 = vmax.xlane.f32.xlu0 %v1747
    %v1749 = vpop.xlane.xlu0 %1748
    %v1750 = vsel %vm1698, %v1226, -inf
    %1751 = vmax.xlane.f32.xlu0 %v1750
    %v1752 = vpop.xlane.xlu0 %1751
    %v1753 = vsel %vm1698, %v1231, -inf
    %1754 = vmax.xlane.f32.xlu0 %v1753
    %v1755 = vpop.xlane.xlu0 %1754
    %v1756 = vsel %vm1698, %v1234, -inf
    %1757 = vmax.xlane.f32.xlu0 %v1756
    %v1758 = vpop.xlane.xlu0 %1757
    %v1759 = vsel %vm1698, %v1239, -inf
    %1760 = vmax.xlane.f32.xlu0 %v1759
    %v1761 = vpop.xlane.xlu0 %1760
    %v1762 = vsel %vm1698, %v1242, -inf
    %1763 = vmax.xlane.f32.xlu0 %v1762
    %v1764 = vpop.xlane.xlu0 %1763
    %v1765 = vsel %vm1698, %v1247, -inf
    %1766 = vmax.xlane.f32.xlu0 %v1765
    %v1767 = vpop.xlane.xlu0 %1766
    %v1768 = vsel %vm1698, %v1250, -inf
    %1769 = vmax.xlane.f32.xlu0 %v1768
    %v1770 = vpop.xlane.xlu0 %1769
    %v1771 = vsel %vm1698, %v1312, -inf
    %1772 = vmax.xlane.f32.xlu0 %v1771
    %v1773 = vpop.xlane.xlu0 %1772
    %v1774 = vsel %vm1698, %v1315, -inf
    %1775 = vmax.xlane.f32.xlu0 %v1774
    %v1776 = vpop.xlane.xlu0 %1775
    %v1777 = vsel %vm1698, %v1320, -inf
    %1778 = vmax.xlane.f32.xlu0 %v1777
    %v1779 = vpop.xlane.xlu0 %1778
    %v1780 = vsel %vm1698, %v1323, -inf
    %1781 = vmax.xlane.f32.xlu0 %v1780
    %v1782 = vpop.xlane.xlu0 %1781
    %v1783 = vsel %vm1698, %v1328, -inf
    %1784 = vmax.xlane.f32.xlu0 %v1783
    %v1785 = vpop.xlane.xlu0 %1784
    %v1786 = vsel %vm1698, %v1331, -inf
    %1787 = vmax.xlane.f32.xlu0 %v1786
    %v1788 = vpop.xlane.xlu0 %1787
    %v1789 = vsel %vm1698, %v1336, -inf
    %1790 = vmax.xlane.f32.xlu0 %v1789
    %v1791 = vpop.xlane.xlu0 %1790
    %v1792 = vsel %vm1698, %v1339, -inf
    %1793 = vmax.xlane.f32.xlu0 %v1792
    %v1794 = vpop.xlane.xlu0 %1793
    %v1795 = vsel %vm1698, %v1401, -inf
    %1796 = vmax.xlane.f32.xlu0 %v1795
    %v1797 = vpop.xlane.xlu0 %1796
    %v1798 = vsel %vm1698, %v1404, -inf
    %1799 = vmax.xlane.f32.xlu0 %v1798
    %v1800 = vpop.xlane.xlu0 %1799
    %v1801 = vsel %vm1698, %v1409, -inf
    %1802 = vmax.xlane.f32.xlu0 %v1801
    %v1803 = vpop.xlane.xlu0 %1802
    %v1804 = vsel %vm1698, %v1412, -inf
    %1805 = vmax.xlane.f32.xlu0 %v1804
    %v1806 = vpop.xlane.xlu0 %1805
    %v1807 = vsel %vm1698, %v1417, -inf
    %1808 = vmax.xlane.f32.xlu0 %v1807
    %v1809 = vpop.xlane.xlu0 %1808
    %v1810 = vsel %vm1698, %v1420, -inf
    %1811 = vmax.xlane.f32.xlu0 %v1810
    %v1812 = vpop.xlane.xlu0 %1811
    %v1813 = vsel %vm1698, %v1425, -inf
    %1814 = vmax.xlane.f32.xlu0 %v1813
    %v1815 = vpop.xlane.xlu0 %1814
    %v1816 = vsel %vm1698, %v1428, -inf
    %1817 = vmax.xlane.f32.xlu0 %v1816
    %v1818 = vpop.xlane.xlu0 %1817
    %v1819 = vsel %vm1698, %v1490, -inf
    %1820 = vmax.xlane.f32.xlu0 %v1819
    %v1821 = vpop.xlane.xlu0 %1820
    %v1822 = vsel %vm1698, %v1493, -inf
    %1823 = vmax.xlane.f32.xlu0 %v1822
    %v1824 = vpop.xlane.xlu0 %1823
    %v1825 = vsel %vm1698, %v1498, -inf
    %1826 = vmax.xlane.f32.xlu0 %v1825
    %v1827 = vpop.xlane.xlu0 %1826
    %v1828 = vsel %vm1698, %v1501, -inf
    %1829 = vmax.xlane.f32.xlu0 %v1828
    %v1830 = vpop.xlane.xlu0 %1829
    %v1831 = vsel %vm1698, %v1506, -inf
    %1832 = vmax.xlane.f32.xlu0 %v1831
    %v1833 = vpop.xlane.xlu0 %1832
    %v1834 = vsel %vm1698, %v1509, -inf
    %1835 = vmax.xlane.f32.xlu0 %v1834
    %v1836 = vpop.xlane.xlu0 %1835
    %v1837 = vsel %vm1698, %v1514, -inf
    %1838 = vmax.xlane.f32.xlu0 %v1837
    %v1839 = vpop.xlane.xlu0 %1838
    %v1840 = vsel %vm1698, %v1517, -inf
    %1841 = vmax.xlane.f32.xlu0 %v1840
    %v1842 = vpop.xlane.xlu0 %1841
    %v1843 = vsel %vm1698, %v1579, -inf
    %1844 = vmax.xlane.f32.xlu0 %v1843
    %v1845 = vpop.xlane.xlu0 %1844
    %v1846 = vsel %vm1698, %v1582, -inf
    %1847 = vmax.xlane.f32.xlu0 %v1846
    %v1848 = vpop.xlane.xlu0 %1847
    %v1849 = vsel %vm1698, %v1587, -inf
    %1850 = vmax.xlane.f32.xlu0 %v1849
    %v1851 = vpop.xlane.xlu0 %1850
    %v1852 = vsel %vm1698, %v1590, -inf
    %1853 = vmax.xlane.f32.xlu0 %v1852
    %v1854 = vpop.xlane.xlu0 %1853
    %v1855 = vsel %vm1698, %v1595, -inf
    %1856 = vmax.xlane.f32.xlu0 %v1855
    %v1857 = vpop.xlane.xlu0 %1856
    %v1858 = vsel %vm1698, %v1598, -inf
    %1859 = vmax.xlane.f32.xlu0 %v1858
    %v1860 = vpop.xlane.xlu0 %1859
    %v1861 = vsel %vm1698, %v1603, -inf
    %1862 = vmax.xlane.f32.xlu0 %v1861
    %v1863 = vpop.xlane.xlu0 %1862
    %v1864 = vsel %vm1698, %v1606, -inf
    %1865 = vmax.xlane.f32.xlu0 %v1864
    %v1866 = vpop.xlane.xlu0 %1865
    %v1867 = vsel %vm1698, %v1668, -inf
    %1868 = vmax.xlane.f32.xlu0 %v1867
    %v1869 = vpop.xlane.xlu0 %1868
    %v1870 = vsel %vm1698, %v1671, -inf
    %1871 = vmax.xlane.f32.xlu0 %v1870
    %v1872 = vpop.xlane.xlu0 %1871
    %v1873 = vsel %vm1698, %v1676, -inf
    %1874 = vmax.xlane.f32.xlu0 %v1873
    %v1875 = vpop.xlane.xlu0 %1874
    %v1876 = vsel %vm1698, %v1679, -inf
    %1877 = vmax.xlane.f32.xlu0 %v1876
    %v1878 = vpop.xlane.xlu0 %1877
    %v1879 = vsel %vm1698, %v1684, -inf
    %1880 = vmax.xlane.f32.xlu0 %v1879
    %v1881 = vpop.xlane.xlu0 %1880
    %v1882 = vsel %vm1698, %v1687, -inf
    %1883 = vmax.xlane.f32.xlu0 %v1882
    %v1884 = vpop.xlane.xlu0 %1883
    %v1885 = vsel %vm1698, %v1692, -inf
    %1886 = vmax.xlane.f32.xlu0 %v1885
    %v1887 = vpop.xlane.xlu0 %1886
    %v1888 = vsel %vm1698, %v1695, -inf
    %1889 = vmax.xlane.f32.xlu0 %v1888
    %v1890 = vpop.xlane.xlu0 %1889
    %v1891 = vsub.f32 %v1045, %v1701
    %v1892 = vsub.f32 %v1048, %v1704
    %v1893 = vsub.f32 %v1053, %v1707
    %v1894 = vsub.f32 %v1056, %v1710
    %v1895 = vsub.f32 %v1061, %v1713
    %v1896 = vsub.f32 %v1064, %v1716
    %v1897 = vsub.f32 %v1069, %v1719
    %v1898 = vsub.f32 %v1072, %v1722
    %v1899 = vsub.f32 %v1134, %v1725
    %v1900 = vsub.f32 %v1137, %v1728
    %v1901 = vsub.f32 %v1142, %v1731
    %v1902 = vsub.f32 %v1145, %v1734
    %v1903 = vsub.f32 %v1150, %v1737
    %v1904 = vsub.f32 %v1153, %v1740
    %v1905 = vsub.f32 %v1158, %v1743
    %v1906 = vsub.f32 %v1161, %v1746
    %v1907 = vsub.f32 %v1223, %v1749
    %v1908 = vsub.f32 %v1226, %v1752
    %v1909 = vsub.f32 %v1231, %v1755
    %v1910 = vsub.f32 %v1234, %v1758
    %v1911 = vsub.f32 %v1239, %v1761
    %v1912 = vsub.f32 %v1242, %v1764
    %v1913 = vsub.f32 %v1247, %v1767
    %v1914 = vsub.f32 %v1250, %v1770
    %v1915 = vsub.f32 %v1312, %v1773
    %v1916 = vsub.f32 %v1315, %v1776
    %v1917 = vsub.f32 %v1320, %v1779
    %v1918 = vsub.f32 %v1323, %v1782
    %v1919 = vsub.f32 %v1328, %v1785
    %v1920 = vsub.f32 %v1331, %v1788
    %v1921 = vsub.f32 %v1336, %v1791
    %v1922 = vsub.f32 %v1339, %v1794
    %v1923 = vsub.f32 %v1401, %v1797
    %v1924 = vsub.f32 %v1404, %v1800
    %v1925 = vsub.f32 %v1409, %v1803
    %v1926 = vsub.f32 %v1412, %v1806
    %v1927 = vsub.f32 %v1417, %v1809
    %v1928 = vsub.f32 %v1420, %v1812
    %v1929 = vsub.f32 %v1425, %v1815
    %v1930 = vsub.f32 %v1428, %v1818
    %v1931 = vsub.f32 %v1490, %v1821
    %v1932 = vsub.f32 %v1493, %v1824
    %v1933 = vsub.f32 %v1498, %v1827
    %v1934 = vsub.f32 %v1501, %v1830
    %v1935 = vsub.f32 %v1506, %v1833
    %v1936 = vsub.f32 %v1509, %v1836
    %v1937 = vsub.f32 %v1514, %v1839
    %v1938 = vsub.f32 %v1517, %v1842
    %v1939 = vsub.f32 %v1579, %v1845
    %v1940 = vsub.f32 %v1582, %v1848
    %v1941 = vsub.f32 %v1587, %v1851
    %v1942 = vsub.f32 %v1590, %v1854
    %v1943 = vsub.f32 %v1595, %v1857
    %v1944 = vsub.f32 %v1598, %v1860
    %v1945 = vsub.f32 %v1603, %v1863
    %v1946 = vsub.f32 %v1606, %v1866
    %v1947 = vsub.f32 %v1668, %v1869
    %v1948 = vsub.f32 %v1671, %v1872
    %v1949 = vsub.f32 %v1676, %v1875
    %v1950 = vsub.f32 %v1679, %v1878
    %v1951 = vsub.f32 %v1684, %v1881
    %v1952 = vsub.f32 %v1687, %v1884
    %v1953 = vsub.f32 %v1692, %v1887
    %v1954 = vsub.f32 %v1695, %v1890
    %v1955 = vmul.f32 %v1891, 1.442695
    %v1956 = vpow.pop %v1955
    %v1957 = vmul.f32 %v1892, 1.442695
    %v1958 = vpow.pop %v1957
    %v1959 = vmul.f32 %v1893, 1.442695
    %v1960 = vpow.pop %v1959
    %v1961 = vmul.f32 %v1894, 1.442695
    %v1962 = vpow.pop %v1961
    %v1963 = vmul.f32 %v1895, 1.442695
    %v1964 = vpow.pop %v1963
    %v1965 = vmul.f32 %v1896, 1.442695
    %v1966 = vpow.pop %v1965
    %v1967 = vmul.f32 %v1897, 1.442695
    %v1968 = vpow.pop %v1967
    %v1969 = vmul.f32 %v1898, 1.442695
    %v1970 = vpow.pop %v1969
    %v1971 = vmul.f32 %v1899, 1.442695
    %v1972 = vpow.pop %v1971
    %v1973 = vmul.f32 %v1900, 1.442695
    %v1974 = vpow.pop %v1973
    %v1975 = vmul.f32 %v1901, 1.442695
    %v1976 = vpow.pop %v1975
    %v1977 = vmul.f32 %v1902, 1.442695
    %v1978 = vpow.pop %v1977
    %v1979 = vmul.f32 %v1903, 1.442695
    %v1980 = vpow.pop %v1979
    %v1981 = vmul.f32 %v1904, 1.442695
    %v1982 = vpow.pop %v1981
    %v1983 = vmul.f32 %v1905, 1.442695
    %v1984 = vpow.pop %v1983
    %v1985 = vmul.f32 %v1906, 1.442695
    %v1986 = vpow.pop %v1985
    %v1987 = vmul.f32 %v1907, 1.442695
    %v1988 = vpow.pop %v1987
    %v1989 = vmul.f32 %v1908, 1.442695
    %v1990 = vpow.pop %v1989
    %v1991 = vmul.f32 %v1909, 1.442695
    %v1992 = vpow.pop %v1991
    %v1993 = vmul.f32 %v1910, 1.442695
    %v1994 = vpow.pop %v1993
    %v1995 = vmul.f32 %v1911, 1.442695
    %v1996 = vpow.pop %v1995
    %v1997 = vmul.f32 %v1912, 1.442695
    %v1998 = vpow.pop %v1997
    %v1999 = vmul.f32 %v1913, 1.442695
    %v2000 = vpow.pop %v1999
    %v2001 = vmul.f32 %v1914, 1.442695
    %v2002 = vpow.pop %v2001
    %v2003 = vmul.f32 %v1915, 1.442695
    %v2004 = vpow.pop %v2003
    %v2005 = vmul.f32 %v1916, 1.442695
    %v2006 = vpow.pop %v2005
    %v2007 = vmul.f32 %v1917, 1.442695
    %v2008 = vpow.pop %v2007
    %v2009 = vmul.f32 %v1918, 1.442695
    %v2010 = vpow.pop %v2009
    %v2011 = vmul.f32 %v1919, 1.442695
    %v2012 = vpow.pop %v2011
    %v2013 = vmul.f32 %v1920, 1.442695
    %v2014 = vpow.pop %v2013
    %v2015 = vmul.f32 %v1921, 1.442695
    %v2016 = vpow.pop %v2015
    %v2017 = vmul.f32 %v1922, 1.442695
    %v2018 = vpow.pop %v2017
    %v2019 = vmul.f32 %v1923, 1.442695
    %v2020 = vpow.pop %v2019
    %v2021 = vmul.f32 %v1924, 1.442695
    %v2022 = vpow.pop %v2021
    %v2023 = vmul.f32 %v1925, 1.442695
    %v2024 = vpow.pop %v2023
    %v2025 = vmul.f32 %v1926, 1.442695
    %v2026 = vpow.pop %v2025
    %v2027 = vmul.f32 %v1927, 1.442695
    %v2028 = vpow.pop %v2027
    %v2029 = vmul.f32 %v1928, 1.442695
    %v2030 = vpow.pop %v2029
    %v2031 = vmul.f32 %v1929, 1.442695
    %v2032 = vpow.pop %v2031
    %v2033 = vmul.f32 %v1930, 1.442695
    %v2034 = vpow.pop %v2033
    %v2035 = vmul.f32 %v1931, 1.442695
    %v2036 = vpow.pop %v2035
    %v2037 = vmul.f32 %v1932, 1.442695
    %v2038 = vpow.pop %v2037
    %v2039 = vmul.f32 %v1933, 1.442695
    %v2040 = vpow.pop %v2039
    %v2041 = vmul.f32 %v1934, 1.442695
    %v2042 = vpow.pop %v2041
    %v2043 = vmul.f32 %v1935, 1.442695
    %v2044 = vpow.pop %v2043
    %v2045 = vmul.f32 %v1936, 1.442695
    %v2046 = vpow.pop %v2045
    %v2047 = vmul.f32 %v1937, 1.442695
    %v2048 = vpow.pop %v2047
    %v2049 = vmul.f32 %v1938, 1.442695
    %v2050 = vpow.pop %v2049
    %v2051 = vmul.f32 %v1939, 1.442695
    %v2052 = vpow.pop %v2051
    %v2053 = vmul.f32 %v1940, 1.442695
    %v2054 = vpow.pop %v2053
    %v2055 = vmul.f32 %v1941, 1.442695
    %v2056 = vpow.pop %v2055
    %v2057 = vmul.f32 %v1942, 1.442695
    %v2058 = vpow.pop %v2057
    %v2059 = vmul.f32 %v1943, 1.442695
    %v2060 = vpow.pop %v2059
    %v2061 = vmul.f32 %v1944, 1.442695
    %v2062 = vpow.pop %v2061
    %v2063 = vmul.f32 %v1945, 1.442695
    %v2064 = vpow.pop %v2063
    %v2065 = vmul.f32 %v1946, 1.442695
    %v2066 = vpow.pop %v2065
    %v2067 = vmul.f32 %v1947, 1.442695
    %v2068 = vpow.pop %v2067
    %v2069 = vmul.f32 %v1948, 1.442695
    %v2070 = vpow.pop %v2069
    %v2071 = vmul.f32 %v1949, 1.442695
    %v2072 = vpow.pop %v2071
    %v2073 = vmul.f32 %v1950, 1.442695
    %v2074 = vpow.pop %v2073
    %v2075 = vmul.f32 %v1951, 1.442695
    %v2076 = vpow.pop %v2075
    %v2077 = vmul.f32 %v1952, 1.442695
    %v2078 = vpow.pop %v2077
    %v2079 = vmul.f32 %v1953, 1.442695
    %v2080 = vpow.pop %v2079
    %v2081 = vmul.f32 %v1954, 1.442695
    %v2082 = vpow.pop %v2081
    %v2083 = vsel %vm1698, %v1956, 0.0
    %2084 = vadd.xlane.f32.xlu0 %v2083
    %v2085 = vpop.xlane.xlu0 %2084
    %v2086 = vsel %vm1698, %v1958, 0.0
    %2087 = vadd.xlane.f32.xlu0 %v2086
    %v2088 = vpop.xlane.xlu0 %2087
    %v2089 = vsel %vm1698, %v1960, 0.0
    %2090 = vadd.xlane.f32.xlu0 %v2089
    %v2091 = vpop.xlane.xlu0 %2090
    %v2092 = vsel %vm1698, %v1962, 0.0
    %2093 = vadd.xlane.f32.xlu0 %v2092
    %v2094 = vpop.xlane.xlu0 %2093
    %v2095 = vsel %vm1698, %v1964, 0.0
    %2096 = vadd.xlane.f32.xlu0 %v2095
    %v2097 = vpop.xlane.xlu0 %2096
    %v2098 = vsel %vm1698, %v1966, 0.0
    %2099 = vadd.xlane.f32.xlu0 %v2098
    %v2100 = vpop.xlane.xlu0 %2099
    %v2101 = vsel %vm1698, %v1968, 0.0
    %2102 = vadd.xlane.f32.xlu0 %v2101
    %v2103 = vpop.xlane.xlu0 %2102
    %v2104 = vsel %vm1698, %v1970, 0.0
    %2105 = vadd.xlane.f32.xlu0 %v2104
    %v2106 = vpop.xlane.xlu0 %2105
    %v2107 = vsel %vm1698, %v1972, 0.0
    %2108 = vadd.xlane.f32.xlu0 %v2107
    %v2109 = vpop.xlane.xlu0 %2108
    %v2110 = vsel %vm1698, %v1974, 0.0
    %2111 = vadd.xlane.f32.xlu0 %v2110
    %v2112 = vpop.xlane.xlu0 %2111
    %v2113 = vsel %vm1698, %v1976, 0.0
    %2114 = vadd.xlane.f32.xlu0 %v2113
    %v2115 = vpop.xlane.xlu0 %2114
    %v2116 = vsel %vm1698, %v1978, 0.0
    %2117 = vadd.xlane.f32.xlu0 %v2116
    %v2118 = vpop.xlane.xlu0 %2117
    %v2119 = vsel %vm1698, %v1980, 0.0
    %2120 = vadd.xlane.f32.xlu0 %v2119
    %v2121 = vpop.xlane.xlu0 %2120
    %v2122 = vsel %vm1698, %v1982, 0.0
    %2123 = vadd.xlane.f32.xlu0 %v2122
    %v2124 = vpop.xlane.xlu0 %2123
    %v2125 = vsel %vm1698, %v1984, 0.0
    %2126 = vadd.xlane.f32.xlu0 %v2125
    %v2127 = vpop.xlane.xlu0 %2126
    %v2128 = vsel %vm1698, %v1986, 0.0
    %2129 = vadd.xlane.f32.xlu0 %v2128
    %v2130 = vpop.xlane.xlu0 %2129
    %v2131 = vsel %vm1698, %v1988, 0.0
    %2132 = vadd.xlane.f32.xlu0 %v2131
    %v2133 = vpop.xlane.xlu0 %2132
    %v2134 = vsel %vm1698, %v1990, 0.0
    %2135 = vadd.xlane.f32.xlu0 %v2134
    %v2136 = vpop.xlane.xlu0 %2135
    %v2137 = vsel %vm1698, %v1992, 0.0
    %2138 = vadd.xlane.f32.xlu0 %v2137
    %v2139 = vpop.xlane.xlu0 %2138
    %v2140 = vsel %vm1698, %v1994, 0.0
    %2141 = vadd.xlane.f32.xlu0 %v2140
    %v2142 = vpop.xlane.xlu0 %2141
    %v2143 = vsel %vm1698, %v1996, 0.0
    %2144 = vadd.xlane.f32.xlu0 %v2143
    %v2145 = vpop.xlane.xlu0 %2144
    %v2146 = vsel %vm1698, %v1998, 0.0
    %2147 = vadd.xlane.f32.xlu0 %v2146
    %v2148 = vpop.xlane.xlu0 %2147
    %v2149 = vsel %vm1698, %v2000, 0.0
    %2150 = vadd.xlane.f32.xlu0 %v2149
    %v2151 = vpop.xlane.xlu0 %2150
    %v2152 = vsel %vm1698, %v2002, 0.0
    %2153 = vadd.xlane.f32.xlu0 %v2152
    %v2154 = vpop.xlane.xlu0 %2153
    %v2155 = vsel %vm1698, %v2004, 0.0
    %2156 = vadd.xlane.f32.xlu0 %v2155
    %v2157 = vpop.xlane.xlu0 %2156
    %v2158 = vsel %vm1698, %v2006, 0.0
    %2159 = vadd.xlane.f32.xlu0 %v2158
    %v2160 = vpop.xlane.xlu0 %2159
    %v2161 = vsel %vm1698, %v2008, 0.0
    %2162 = vadd.xlane.f32.xlu0 %v2161
    %v2163 = vpop.xlane.xlu0 %2162
    %v2164 = vsel %vm1698, %v2010, 0.0
    %2165 = vadd.xlane.f32.xlu0 %v2164
    %v2166 = vpop.xlane.xlu0 %2165
    %v2167 = vsel %vm1698, %v2012, 0.0
    %2168 = vadd.xlane.f32.xlu0 %v2167
    %v2169 = vpop.xlane.xlu0 %2168
    %v2170 = vsel %vm1698, %v2014, 0.0
    %2171 = vadd.xlane.f32.xlu0 %v2170
    %v2172 = vpop.xlane.xlu0 %2171
    %v2173 = vsel %vm1698, %v2016, 0.0
    %2174 = vadd.xlane.f32.xlu0 %v2173
    %v2175 = vpop.xlane.xlu0 %2174
    %v2176 = vsel %vm1698, %v2018, 0.0
    %2177 = vadd.xlane.f32.xlu0 %v2176
    %v2178 = vpop.xlane.xlu0 %2177
    %v2179 = vsel %vm1698, %v2020, 0.0
    %2180 = vadd.xlane.f32.xlu0 %v2179
    %v2181 = vpop.xlane.xlu0 %2180
    %v2182 = vsel %vm1698, %v2022, 0.0
    %2183 = vadd.xlane.f32.xlu0 %v2182
    %v2184 = vpop.xlane.xlu0 %2183
    %v2185 = vsel %vm1698, %v2024, 0.0
    %2186 = vadd.xlane.f32.xlu0 %v2185
    %v2187 = vpop.xlane.xlu0 %2186
    %v2188 = vsel %vm1698, %v2026, 0.0
    %2189 = vadd.xlane.f32.xlu0 %v2188
    %v2190 = vpop.xlane.xlu0 %2189
    %v2191 = vsel %vm1698, %v2028, 0.0
    %2192 = vadd.xlane.f32.xlu0 %v2191
    %v2193 = vpop.xlane.xlu0 %2192
    %v2194 = vsel %vm1698, %v2030, 0.0
    %2195 = vadd.xlane.f32.xlu0 %v2194
    %v2196 = vpop.xlane.xlu0 %2195
    %v2197 = vsel %vm1698, %v2032, 0.0
    %2198 = vadd.xlane.f32.xlu0 %v2197
    %v2199 = vpop.xlane.xlu0 %2198
    %v2200 = vsel %vm1698, %v2034, 0.0
    %2201 = vadd.xlane.f32.xlu0 %v2200
    %v2202 = vpop.xlane.xlu0 %2201
    %v2203 = vsel %vm1698, %v2036, 0.0
    %2204 = vadd.xlane.f32.xlu0 %v2203
    %v2205 = vpop.xlane.xlu0 %2204
    %v2206 = vsel %vm1698, %v2038, 0.0
    %2207 = vadd.xlane.f32.xlu0 %v2206
    %v2208 = vpop.xlane.xlu0 %2207
    %v2209 = vsel %vm1698, %v2040, 0.0
    %2210 = vadd.xlane.f32.xlu0 %v2209
    %v2211 = vpop.xlane.xlu0 %2210
    %v2212 = vsel %vm1698, %v2042, 0.0
    %2213 = vadd.xlane.f32.xlu0 %v2212
    %v2214 = vpop.xlane.xlu0 %2213
    %v2215 = vsel %vm1698, %v2044, 0.0
    %2216 = vadd.xlane.f32.xlu0 %v2215
    %v2217 = vpop.xlane.xlu0 %2216
    %v2218 = vsel %vm1698, %v2046, 0.0
    %2219 = vadd.xlane.f32.xlu0 %v2218
    %v2220 = vpop.xlane.xlu0 %2219
    %v2221 = vsel %vm1698, %v2048, 0.0
    %2222 = vadd.xlane.f32.xlu0 %v2221
    %v2223 = vpop.xlane.xlu0 %2222
    %v2224 = vsel %vm1698, %v2050, 0.0
    %2225 = vadd.xlane.f32.xlu0 %v2224
    %v2226 = vpop.xlane.xlu0 %2225
    %v2227 = vsel %vm1698, %v2052, 0.0
    %2228 = vadd.xlane.f32.xlu0 %v2227
    %v2229 = vpop.xlane.xlu0 %2228
    %v2230 = vsel %vm1698, %v2054, 0.0
    %2231 = vadd.xlane.f32.xlu0 %v2230
    %v2232 = vpop.xlane.xlu0 %2231
    %v2233 = vsel %vm1698, %v2056, 0.0
    %2234 = vadd.xlane.f32.xlu0 %v2233
    %v2235 = vpop.xlane.xlu0 %2234
    %v2236 = vsel %vm1698, %v2058, 0.0
    %2237 = vadd.xlane.f32.xlu0 %v2236
    %v2238 = vpop.xlane.xlu0 %2237
    %v2239 = vsel %vm1698, %v2060, 0.0
    %2240 = vadd.xlane.f32.xlu0 %v2239
    %v2241 = vpop.xlane.xlu0 %2240
    %v2242 = vsel %vm1698, %v2062, 0.0
    %2243 = vadd.xlane.f32.xlu0 %v2242
    %v2244 = vpop.xlane.xlu0 %2243
    %v2245 = vsel %vm1698, %v2064, 0.0
    %2246 = vadd.xlane.f32.xlu0 %v2245
    %v2247 = vpop.xlane.xlu0 %2246
    %v2248 = vsel %vm1698, %v2066, 0.0
    %2249 = vadd.xlane.f32.xlu0 %v2248
    %v2250 = vpop.xlane.xlu0 %2249
    %v2251 = vsel %vm1698, %v2068, 0.0
    %2252 = vadd.xlane.f32.xlu0 %v2251
    %v2253 = vpop.xlane.xlu0 %2252
    %v2254 = vsel %vm1698, %v2070, 0.0
    %2255 = vadd.xlane.f32.xlu0 %v2254
    %v2256 = vpop.xlane.xlu0 %2255
    %v2257 = vsel %vm1698, %v2072, 0.0
    %2258 = vadd.xlane.f32.xlu0 %v2257
    %v2259 = vpop.xlane.xlu0 %2258
    %v2260 = vsel %vm1698, %v2074, 0.0
    %2261 = vadd.xlane.f32.xlu0 %v2260
    %v2262 = vpop.xlane.xlu0 %2261
    %v2263 = vsel %vm1698, %v2076, 0.0
    %2264 = vadd.xlane.f32.xlu0 %v2263
    %v2265 = vpop.xlane.xlu0 %2264
    %v2266 = vsel %vm1698, %v2078, 0.0
    %2267 = vadd.xlane.f32.xlu0 %v2266
    %v2268 = vpop.xlane.xlu0 %2267
    %v2269 = vsel %vm1698, %v2080, 0.0
    %2270 = vadd.xlane.f32.xlu0 %v2269
    %v2271 = vpop.xlane.xlu0 %2270
    %v2272 = vsel %vm1698, %v2082, 0.0
    %2273 = vadd.xlane.f32.xlu0 %v2272
    %v2274 = vpop.xlane.xlu0 %2273
    %v2275 = vrcp.pop %v2085
    %v2276 = vrcp.pop %v2088
    %v2277 = vrcp.pop %v2091
    %v2278 = vrcp.pop %v2094
    %v2279 = vrcp.pop %v2097
    %v2280 = vrcp.pop %v2100
    %v2281 = vrcp.pop %v2103
    %v2282 = vrcp.pop %v2106
    %v2283 = vrcp.pop %v2109
    %v2284 = vrcp.pop %v2112
    %v2285 = vrcp.pop %v2115
    %v2286 = vrcp.pop %v2118
    %v2287 = vrcp.pop %v2121
    %v2288 = vrcp.pop %v2124
    %v2289 = vrcp.pop %v2127
    %v2290 = vrcp.pop %v2130
    %v2291 = vrcp.pop %v2133
    %v2292 = vrcp.pop %v2136
    %v2293 = vrcp.pop %v2139
    %v2294 = vrcp.pop %v2142
    %v2295 = vrcp.pop %v2145
    %v2296 = vrcp.pop %v2148
    %v2297 = vrcp.pop %v2151
    %v2298 = vrcp.pop %v2154
    %v2299 = vrcp.pop %v2157
    %v2300 = vrcp.pop %v2160
    %v2301 = vrcp.pop %v2163
    %v2302 = vrcp.pop %v2166
    %v2303 = vrcp.pop %v2169
    %v2304 = vrcp.pop %v2172
    %v2305 = vrcp.pop %v2175
    %v2306 = vrcp.pop %v2178
    %v2307 = vrcp.pop %v2181
    %v2308 = vrcp.pop %v2184
    %v2309 = vrcp.pop %v2187
    %v2310 = vrcp.pop %v2190
    %v2311 = vrcp.pop %v2193
    %v2312 = vrcp.pop %v2196
    %v2313 = vrcp.pop %v2199
    %v2314 = vrcp.pop %v2202
    %v2315 = vrcp.pop %v2205
    %v2316 = vrcp.pop %v2208
    %v2317 = vrcp.pop %v2211
    %v2318 = vrcp.pop %v2214
    %v2319 = vrcp.pop %v2217
    %v2320 = vrcp.pop %v2220
    %v2321 = vrcp.pop %v2223
    %v2322 = vrcp.pop %v2226
    %v2323 = vrcp.pop %v2229
    %v2324 = vrcp.pop %v2232
    %v2325 = vrcp.pop %v2235
    %v2326 = vrcp.pop %v2238
    %v2327 = vrcp.pop %v2241
    %v2328 = vrcp.pop %v2244
    %v2329 = vrcp.pop %v2247
    %v2330 = vrcp.pop %v2250
    %v2331 = vrcp.pop %v2253
    %v2332 = vrcp.pop %v2256
    %v2333 = vrcp.pop %v2259
    %v2334 = vrcp.pop %v2262
    %v2335 = vrcp.pop %v2265
    %v2336 = vrcp.pop %v2268
    %v2337 = vrcp.pop %v2271
    %v2338 = vrcp.pop %v2274
    %v2339 = vmul.f32 %v1956, %v2275
    %v2340 = vmul.f32 %v1958, %v2276
    %v2341 = vmul.f32 %v1960, %v2277
    %v2342 = vmul.f32 %v1962, %v2278
    %v2343 = vmul.f32 %v1964, %v2279
    %v2344 = vmul.f32 %v1966, %v2280
    %v2345 = vmul.f32 %v1968, %v2281
    %v2346 = vmul.f32 %v1970, %v2282
    %v2347 = vmul.f32 %v1972, %v2283
    %v2348 = vmul.f32 %v1974, %v2284
    %v2349 = vmul.f32 %v1976, %v2285
    %v2350 = vmul.f32 %v1978, %v2286
    %v2351 = vmul.f32 %v1980, %v2287
    %v2352 = vmul.f32 %v1982, %v2288
    %v2353 = vmul.f32 %v1984, %v2289
    %v2354 = vmul.f32 %v1986, %v2290
    %v2355 = vmul.f32 %v1988, %v2291
    %v2356 = vmul.f32 %v1990, %v2292
    %v2357 = vmul.f32 %v1992, %v2293
    %v2358 = vmul.f32 %v1994, %v2294
    %v2359 = vmul.f32 %v1996, %v2295
    %v2360 = vmul.f32 %v1998, %v2296
    %v2361 = vmul.f32 %v2000, %v2297
    %v2362 = vmul.f32 %v2002, %v2298
    %v2363 = vmul.f32 %v2004, %v2299
    %v2364 = vmul.f32 %v2006, %v2300
    %v2365 = vmul.f32 %v2008, %v2301
    %v2366 = vmul.f32 %v2010, %v2302
    %v2367 = vmul.f32 %v2012, %v2303
    %v2368 = vmul.f32 %v2014, %v2304
    %v2369 = vmul.f32 %v2016, %v2305
    %v2370 = vmul.f32 %v2018, %v2306
    %v2371 = vmul.f32 %v2020, %v2307
    %v2372 = vmul.f32 %v2022, %v2308
    %v2373 = vmul.f32 %v2024, %v2309
    %v2374 = vmul.f32 %v2026, %v2310
    %v2375 = vmul.f32 %v2028, %v2311
    %v2376 = vmul.f32 %v2030, %v2312
    %v2377 = vmul.f32 %v2032, %v2313
    %v2378 = vmul.f32 %v2034, %v2314
    %v2379 = vmul.f32 %v2036, %v2315
    %v2380 = vmul.f32 %v2038, %v2316
    %v2381 = vmul.f32 %v2040, %v2317
    %v2382 = vmul.f32 %v2042, %v2318
    %v2383 = vmul.f32 %v2044, %v2319
    %v2384 = vmul.f32 %v2046, %v2320
    %v2385 = vmul.f32 %v2048, %v2321
    %v2386 = vmul.f32 %v2050, %v2322
    %v2387 = vmul.f32 %v2052, %v2323
    %v2388 = vmul.f32 %v2054, %v2324
    %v2389 = vmul.f32 %v2056, %v2325
    %v2390 = vmul.f32 %v2058, %v2326
    %v2391 = vmul.f32 %v2060, %v2327
    %v2392 = vmul.f32 %v2062, %v2328
    %v2393 = vmul.f32 %v2064, %v2329
    %v2394 = vmul.f32 %v2066, %v2330
    %v2395 = vmul.f32 %v2068, %v2331
    %v2396 = vmul.f32 %v2070, %v2332
    %v2397 = vmul.f32 %v2072, %v2333
    %v2398 = vmul.f32 %v2074, %v2334
    %v2399 = vmul.f32 %v2076, %v2335
    %v2400 = vmul.f32 %v2078, %v2336
    %v2401 = vmul.f32 %v2080, %v2337
    %v2402 = vmul.f32 %v2082, %v2338
    %v2403 = vpack.c.bf16 %v2340, %v2339
    %v2404 = vpack.c.bf16 %v2342, %v2341
    %v2405 = vpack.c.bf16 %v2344, %v2343
    %v2406 = vpack.c.bf16 %v2346, %v2345
    %v2407 = vpack.c.bf16 %v2348, %v2347
    %v2408 = vpack.c.bf16 %v2350, %v2349
    %v2409 = vpack.c.bf16 %v2352, %v2351
    %v2410 = vpack.c.bf16 %v2354, %v2353
    %v2411 = vpack.c.bf16 %v2356, %v2355
    %v2412 = vpack.c.bf16 %v2358, %v2357
    %v2413 = vpack.c.bf16 %v2360, %v2359
    %v2414 = vpack.c.bf16 %v2362, %v2361
    %v2415 = vpack.c.bf16 %v2364, %v2363
    %v2416 = vpack.c.bf16 %v2366, %v2365
    %v2417 = vpack.c.bf16 %v2368, %v2367
    %v2418 = vpack.c.bf16 %v2370, %v2369
    %v2419 = vpack.c.bf16 %v2372, %v2371
    %v2420 = vpack.c.bf16 %v2374, %v2373
    %v2421 = vpack.c.bf16 %v2376, %v2375
    %v2422 = vpack.c.bf16 %v2378, %v2377
    %v2423 = vpack.c.bf16 %v2380, %v2379
    %v2424 = vpack.c.bf16 %v2382, %v2381
    %v2425 = vpack.c.bf16 %v2384, %v2383
    %v2426 = vpack.c.bf16 %v2386, %v2385
    %v2427 = vpack.c.bf16 %v2388, %v2387
    %v2428 = vpack.c.bf16 %v2390, %v2389
    %v2429 = vpack.c.bf16 %v2392, %v2391
    %v2430 = vpack.c.bf16 %v2394, %v2393
    %v2431 = vpack.c.bf16 %v2396, %v2395
    %v2432 = vpack.c.bf16 %v2398, %v2397
    %v2433 = vpack.c.bf16 %v2400, %v2399
    %v2434 = vpack.c.bf16 %v2402, %v2401
    %v2436 = vsel %vm1698, %v2403, 0
    %v2439 = vsel %vm1698, %v2404, 0
    %v2442 = vsel %vm1698, %v2405, 0
    %v2445 = vsel %vm1698, %v2406, 0
    %2447 = vmatprep.subr.bf16.mxu0 0
    %2448 = vmatpush1.bf16.msra.mxu0 0
    %2449 = vmatprep.subr.bf16.mxu0 0
    %2450 = vmatpush1.bf16.msra.mxu0 0
    %2451 = vmatprep.subr.bf16.mxu0 0
    %2452 = vmatpush1.bf16.msra.mxu0 0
    %2453 = vmatprep.subr.bf16.mxu0 0
    %2454 = vmatpush1.bf16.msra.mxu0 0
    %2455 = vmatprep.subr.bf16.mxu0 0
    %2456 = vmatpush1.bf16.msra.mxu0 %v780
    %2457 = vmatprep.subr.bf16.mxu0 0
    %2458 = vmatpush1.bf16.msra.mxu0 %v779
    %2459 = vmatprep.subr.bf16.mxu0 0
    %2460 = vmatpush1.bf16.msra.mxu0 %v778
    %2461 = vmatprep.subr.bf16.mxu0 0
    %2462 = vmatpush1.bf16.msra.mxu0 %v777
    %2463 = vmatprep.subr.bf16.mxu0 0
    %2464 = vmatpush2.bf16.msra.mxu0 0
    %2465 = vmatprep.subr.bf16.mxu0 0
    %2466 = vmatpush2.bf16.msra.mxu0 0
    %2467 = vmatprep.subr.bf16.mxu0 0
    %2468 = vmatpush2.bf16.msra.mxu0 0
    %2469 = vmatprep.subr.bf16.mxu0 0
    %2470 = vmatpush2.bf16.msra.mxu0 0
    %2471 = vmatprep.subr.bf16.mxu0 0
    %2472 = vmatpush2.bf16.msra.mxu0 0
    %2473 = vmatprep.subr.bf16.mxu0 0
    %2474 = vmatpush2.bf16.msra.mxu0 0
    %2475 = vmatprep.subr.bf16.mxu0 0
    %2476 = vmatpush2.bf16.msra.mxu0 0
    %2477 = vmatprep.subr.bf16.mxu0 0
    %2478 = vmatpush2.bf16.msra.mxu0 0
    %2479 = vmatprep.mubr.bf16.mxu0 0
    %2480 = vmatmul.mubr.bf16.gmra.mxu0 %v2436
    %v2481 = vpop.f32.mrf.mxu0
    %v2482 = vadd.f32 0.0, %v2481
    %v2483 = vpop.f32.mrf.mxu0
    %v2484 = vpop.f32.mrf.mxu0
    %v2485 = vadd.f32 0.0, %v2484
    %v2486 = vpop.f32.mrf.mxu0
    %2487 = vmatprep.mubr.bf16.mxu0 0
    %2488 = vmatmul.mubr.bf16.gmra.mxu0 %v2439
    %v2489 = vpop.f32.mrf.mxu0
    %v2490 = vadd.f32 0.0, %v2489
    %v2491 = vpop.f32.mrf.mxu0
    %v2492 = vpop.f32.mrf.mxu0
    %v2493 = vadd.f32 0.0, %v2492
    %v2494 = vpop.f32.mrf.mxu0
    %2495 = vmatprep.mubr.bf16.mxu0 0
    %2496 = vmatmul.mubr.bf16.gmra.mxu0 %v2442
    %v2497 = vpop.f32.mrf.mxu0
    %v2498 = vadd.f32 0.0, %v2497
    %v2499 = vpop.f32.mrf.mxu0
    %v2500 = vpop.f32.mrf.mxu0
    %v2501 = vadd.f32 0.0, %v2500
    %v2502 = vpop.f32.mrf.mxu0
    %2503 = vmatprep.mubr.bf16.mxu0 0
    %2504 = vmatmul.mubr.bf16.gmra.mxu0 %v2445
    %v2505 = vpop.f32.mrf.mxu0
    %v2506 = vadd.f32 0.0, %v2505
    %v2507 = vpop.f32.mrf.mxu0
    %v2508 = vpop.f32.mrf.mxu0
    %v2509 = vadd.f32 0.0, %v2508
    %v2510 = vpop.f32.mrf.mxu0
    %2511 = vdwg.mxu0
    %v2513 = vsel %vm1698, %v2407, 0
    %v2516 = vsel %vm1698, %v2408, 0
    %v2519 = vsel %vm1698, %v2409, 0
    %v2522 = vsel %vm1698, %v2410, 0
    %2524 = vmatprep.subr.bf16.mxu0 0
    %2525 = vmatpush1.bf16.msra.mxu0 0
    %2526 = vmatprep.subr.bf16.mxu0 0
    %2527 = vmatpush1.bf16.msra.mxu0 0
    %2528 = vmatprep.subr.bf16.mxu0 0
    %2529 = vmatpush1.bf16.msra.mxu0 0
    %2530 = vmatprep.subr.bf16.mxu0 0
    %2531 = vmatpush1.bf16.msra.mxu0 0
    %2532 = vmatprep.subr.bf16.mxu0 0
    %2533 = vmatpush1.bf16.msra.mxu0 %v784
    %2534 = vmatprep.subr.bf16.mxu0 0
    %2535 = vmatpush1.bf16.msra.mxu0 %v783
    %2536 = vmatprep.subr.bf16.mxu0 0
    %2537 = vmatpush1.bf16.msra.mxu0 %v782
    %2538 = vmatprep.subr.bf16.mxu0 0
    %2539 = vmatpush1.bf16.msra.mxu0 %v781
    %2540 = vmatprep.subr.bf16.mxu0 0
    %2541 = vmatpush2.bf16.msra.mxu0 0
    %2542 = vmatprep.subr.bf16.mxu0 0
    %2543 = vmatpush2.bf16.msra.mxu0 0
    %2544 = vmatprep.subr.bf16.mxu0 0
    %2545 = vmatpush2.bf16.msra.mxu0 0
    %2546 = vmatprep.subr.bf16.mxu0 0
    %2547 = vmatpush2.bf16.msra.mxu0 0
    %2548 = vmatprep.subr.bf16.mxu0 0
    %2549 = vmatpush2.bf16.msra.mxu0 0
    %2550 = vmatprep.subr.bf16.mxu0 0
    %2551 = vmatpush2.bf16.msra.mxu0 0
    %2552 = vmatprep.subr.bf16.mxu0 0
    %2553 = vmatpush2.bf16.msra.mxu0 0
    %2554 = vmatprep.subr.bf16.mxu0 0
    %2555 = vmatpush2.bf16.msra.mxu0 0
    %2556 = vmatprep.mubr.bf16.mxu0 0
    %2557 = vmatmul.mubr.bf16.gmra.mxu0 %v2513
    %v2558 = vpop.f32.mrf.mxu0
    %v2559 = vadd.f32 0.0, %v2558
    %v2560 = vpop.f32.mrf.mxu0
    %v2561 = vpop.f32.mrf.mxu0
    %v2562 = vadd.f32 0.0, %v2561
    %v2563 = vpop.f32.mrf.mxu0
    %2564 = vmatprep.mubr.bf16.mxu0 0
    %2565 = vmatmul.mubr.bf16.gmra.mxu0 %v2516
    %v2566 = vpop.f32.mrf.mxu0
    %v2567 = vadd.f32 0.0, %v2566
    %v2568 = vpop.f32.mrf.mxu0
    %v2569 = vpop.f32.mrf.mxu0
    %v2570 = vadd.f32 0.0, %v2569
    %v2571 = vpop.f32.mrf.mxu0
    %2572 = vmatprep.mubr.bf16.mxu0 0
    %2573 = vmatmul.mubr.bf16.gmra.mxu0 %v2519
    %v2574 = vpop.f32.mrf.mxu0
    %v2575 = vadd.f32 0.0, %v2574
    %v2576 = vpop.f32.mrf.mxu0
    %v2577 = vpop.f32.mrf.mxu0
    %v2578 = vadd.f32 0.0, %v2577
    %v2579 = vpop.f32.mrf.mxu0
    %2580 = vmatprep.mubr.bf16.mxu0 0
    %2581 = vmatmul.mubr.bf16.gmra.mxu0 %v2522
    %v2582 = vpop.f32.mrf.mxu0
    %v2583 = vadd.f32 0.0, %v2582
    %v2584 = vpop.f32.mrf.mxu0
    %v2585 = vpop.f32.mrf.mxu0
    %v2586 = vadd.f32 0.0, %v2585
    %v2587 = vpop.f32.mrf.mxu0
    %2588 = vdwg.mxu0
    %v2590 = vsel %vm1698, %v2411, 0
    %v2593 = vsel %vm1698, %v2412, 0
    %v2596 = vsel %vm1698, %v2413, 0
    %v2599 = vsel %vm1698, %v2414, 0
    %2601 = vmatprep.subr.bf16.mxu0 0
    %2602 = vmatpush1.bf16.msra.mxu0 0
    %2603 = vmatprep.subr.bf16.mxu0 0
    %2604 = vmatpush1.bf16.msra.mxu0 0
    %2605 = vmatprep.subr.bf16.mxu0 0
    %2606 = vmatpush1.bf16.msra.mxu0 0
    %2607 = vmatprep.subr.bf16.mxu0 0
    %2608 = vmatpush1.bf16.msra.mxu0 0
    %2609 = vmatprep.subr.bf16.mxu0 0
    %2610 = vmatpush1.bf16.msra.mxu0 %v912
    %2611 = vmatprep.subr.bf16.mxu0 0
    %2612 = vmatpush1.bf16.msra.mxu0 %v910
    %2613 = vmatprep.subr.bf16.mxu0 0
    %2614 = vmatpush1.bf16.msra.mxu0 %v908
    %2615 = vmatprep.subr.bf16.mxu0 0
    %2616 = vmatpush1.bf16.msra.mxu0 %v906
    %2617 = vmatprep.subr.bf16.mxu0 0
    %2618 = vmatpush2.bf16.msra.mxu0 0
    %2619 = vmatprep.subr.bf16.mxu0 0
    %2620 = vmatpush2.bf16.msra.mxu0 0
    %2621 = vmatprep.subr.bf16.mxu0 0
    %2622 = vmatpush2.bf16.msra.mxu0 0
    %2623 = vmatprep.subr.bf16.mxu0 0
    %2624 = vmatpush2.bf16.msra.mxu0 0
    %2625 = vmatprep.subr.bf16.mxu0 0
    %2626 = vmatpush2.bf16.msra.mxu0 0
    %2627 = vmatprep.subr.bf16.mxu0 0
    %2628 = vmatpush2.bf16.msra.mxu0 0
    %2629 = vmatprep.subr.bf16.mxu0 0
    %2630 = vmatpush2.bf16.msra.mxu0 0
    %2631 = vmatprep.subr.bf16.mxu0 0
    %2632 = vmatpush2.bf16.msra.mxu0 0
    %2633 = vmatprep.mubr.bf16.mxu0 0
    %2634 = vmatmul.mubr.bf16.gmra.mxu0 %v2590
    %v2635 = vpop.f32.mrf.mxu0
    %v2636 = vadd.f32 0.0, %v2635
    %v2637 = vpop.f32.mrf.mxu0
    %v2638 = vpop.f32.mrf.mxu0
    %v2639 = vadd.f32 0.0, %v2638
    %v2640 = vpop.f32.mrf.mxu0
    %2641 = vmatprep.mubr.bf16.mxu0 0
    %2642 = vmatmul.mubr.bf16.gmra.mxu0 %v2593
    %v2643 = vpop.f32.mrf.mxu0
    %v2644 = vadd.f32 0.0, %v2643
    %v2645 = vpop.f32.mrf.mxu0
    %v2646 = vpop.f32.mrf.mxu0
    %v2647 = vadd.f32 0.0, %v2646
    %v2648 = vpop.f32.mrf.mxu0
    %2649 = vmatprep.mubr.bf16.mxu0 0
    %2650 = vmatmul.mubr.bf16.gmra.mxu0 %v2596
    %v2651 = vpop.f32.mrf.mxu0
    %v2652 = vadd.f32 0.0, %v2651
    %v2653 = vpop.f32.mrf.mxu0
    %v2654 = vpop.f32.mrf.mxu0
    %v2655 = vadd.f32 0.0, %v2654
    %v2656 = vpop.f32.mrf.mxu0
    %2657 = vmatprep.mubr.bf16.mxu0 0
    %2658 = vmatmul.mubr.bf16.gmra.mxu0 %v2599
    %v2659 = vpop.f32.mrf.mxu0
    %v2660 = vadd.f32 0.0, %v2659
    %v2661 = vpop.f32.mrf.mxu0
    %v2662 = vpop.f32.mrf.mxu0
    %v2663 = vadd.f32 0.0, %v2662
    %v2664 = vpop.f32.mrf.mxu0
    %2665 = vdwg.mxu0
    %v2667 = vsel %vm1698, %v2415, 0
    %v2670 = vsel %vm1698, %v2416, 0
    %v2673 = vsel %vm1698, %v2417, 0
    %v2676 = vsel %vm1698, %v2418, 0
    %2678 = vmatprep.subr.bf16.mxu0 0
    %2679 = vmatpush1.bf16.msra.mxu0 0
    %2680 = vmatprep.subr.bf16.mxu0 0
    %2681 = vmatpush1.bf16.msra.mxu0 0
    %2682 = vmatprep.subr.bf16.mxu0 0
    %2683 = vmatpush1.bf16.msra.mxu0 0
    %2684 = vmatprep.subr.bf16.mxu0 0
    %2685 = vmatpush1.bf16.msra.mxu0 0
    %2686 = vmatprep.subr.bf16.mxu0 0
    %2687 = vmatpush1.bf16.msra.mxu0 %v920
    %2688 = vmatprep.subr.bf16.mxu0 0
    %2689 = vmatpush1.bf16.msra.mxu0 %v918
    %2690 = vmatprep.subr.bf16.mxu0 0
    %2691 = vmatpush1.bf16.msra.mxu0 %v916
    %2692 = vmatprep.subr.bf16.mxu0 0
    %2693 = vmatpush1.bf16.msra.mxu0 %v914
    %2694 = vmatprep.subr.bf16.mxu0 0
    %2695 = vmatpush2.bf16.msra.mxu0 0
    %2696 = vmatprep.subr.bf16.mxu0 0
    %2697 = vmatpush2.bf16.msra.mxu0 0
    %2698 = vmatprep.subr.bf16.mxu0 0
    %2699 = vmatpush2.bf16.msra.mxu0 0
    %2700 = vmatprep.subr.bf16.mxu0 0
    %2701 = vmatpush2.bf16.msra.mxu0 0
    %2702 = vmatprep.subr.bf16.mxu0 0
    %2703 = vmatpush2.bf16.msra.mxu0 0
    %2704 = vmatprep.subr.bf16.mxu0 0
    %2705 = vmatpush2.bf16.msra.mxu0 0
    %2706 = vmatprep.subr.bf16.mxu0 0
    %2707 = vmatpush2.bf16.msra.mxu0 0
    %2708 = vmatprep.subr.bf16.mxu0 0
    %2709 = vmatpush2.bf16.msra.mxu0 0
    %2710 = vmatprep.mubr.bf16.mxu0 0
    %2711 = vmatmul.mubr.bf16.gmra.mxu0 %v2667
    %v2712 = vpop.f32.mrf.mxu0
    %v2713 = vadd.f32 0.0, %v2712
    %v2714 = vpop.f32.mrf.mxu0
    %v2715 = vpop.f32.mrf.mxu0
    %v2716 = vadd.f32 0.0, %v2715
    %v2717 = vpop.f32.mrf.mxu0
    %2718 = vmatprep.mubr.bf16.mxu0 0
    %2719 = vmatmul.mubr.bf16.gmra.mxu0 %v2670
    %v2720 = vpop.f32.mrf.mxu0
    %v2721 = vadd.f32 0.0, %v2720
    %v2722 = vpop.f32.mrf.mxu0
    %v2723 = vpop.f32.mrf.mxu0
    %v2724 = vadd.f32 0.0, %v2723
    %v2725 = vpop.f32.mrf.mxu0
    %2726 = vmatprep.mubr.bf16.mxu0 0
    %2727 = vmatmul.mubr.bf16.gmra.mxu0 %v2673
    %v2728 = vpop.f32.mrf.mxu0
    %v2729 = vadd.f32 0.0, %v2728
    %v2730 = vpop.f32.mrf.mxu0
    %v2731 = vpop.f32.mrf.mxu0
    %v2732 = vadd.f32 0.0, %v2731
    %v2733 = vpop.f32.mrf.mxu0
    %2734 = vmatprep.mubr.bf16.mxu0 0
    %2735 = vmatmul.mubr.bf16.gmra.mxu0 %v2676
    %v2736 = vpop.f32.mrf.mxu0
    %v2737 = vadd.f32 0.0, %v2736
    %v2738 = vpop.f32.mrf.mxu0
    %v2739 = vpop.f32.mrf.mxu0
    %v2740 = vadd.f32 0.0, %v2739
    %v2741 = vpop.f32.mrf.mxu0
    %2742 = vdwg.mxu0
    %v2744 = vsel %vm1698, %v2419, 0
    %v2747 = vsel %vm1698, %v2420, 0
    %v2750 = vsel %vm1698, %v2421, 0
    %v2753 = vsel %vm1698, %v2422, 0
    %2755 = vmatprep.subr.bf16.mxu0 0
    %2756 = vmatpush1.bf16.msra.mxu0 0
    %2757 = vmatprep.subr.bf16.mxu0 0
    %2758 = vmatpush1.bf16.msra.mxu0 0
    %2759 = vmatprep.subr.bf16.mxu0 0
    %2760 = vmatpush1.bf16.msra.mxu0 0
    %2761 = vmatprep.subr.bf16.mxu0 0
    %2762 = vmatpush1.bf16.msra.mxu0 0
    %2763 = vmatprep.subr.bf16.mxu0 0
    %2764 = vmatpush1.bf16.msra.mxu0 %v936
    %2765 = vmatprep.subr.bf16.mxu0 0
    %2766 = vmatpush1.bf16.msra.mxu0 %v934
    %2767 = vmatprep.subr.bf16.mxu0 0
    %2768 = vmatpush1.bf16.msra.mxu0 %v932
    %2769 = vmatprep.subr.bf16.mxu0 0
    %2770 = vmatpush1.bf16.msra.mxu0 %v930
    %2771 = vmatprep.subr.bf16.mxu0 0
    %2772 = vmatpush2.bf16.msra.mxu0 0
    %2773 = vmatprep.subr.bf16.mxu0 0
    %2774 = vmatpush2.bf16.msra.mxu0 0
    %2775 = vmatprep.subr.bf16.mxu0 0
    %2776 = vmatpush2.bf16.msra.mxu0 0
    %2777 = vmatprep.subr.bf16.mxu0 0
    %2778 = vmatpush2.bf16.msra.mxu0 0
    %2779 = vmatprep.subr.bf16.mxu0 0
    %2780 = vmatpush2.bf16.msra.mxu0 0
    %2781 = vmatprep.subr.bf16.mxu0 0
    %2782 = vmatpush2.bf16.msra.mxu0 0
    %2783 = vmatprep.subr.bf16.mxu0 0
    %2784 = vmatpush2.bf16.msra.mxu0 0
    %2785 = vmatprep.subr.bf16.mxu0 0
    %2786 = vmatpush2.bf16.msra.mxu0 0
    %2787 = vmatprep.mubr.bf16.mxu0 0
    %2788 = vmatmul.mubr.bf16.gmra.mxu0 %v2744
    %v2789 = vpop.f32.mrf.mxu0
    %v2790 = vadd.f32 0.0, %v2789
    %v2791 = vpop.f32.mrf.mxu0
    %v2792 = vpop.f32.mrf.mxu0
    %v2793 = vadd.f32 0.0, %v2792
    %v2794 = vpop.f32.mrf.mxu0
    %2795 = vmatprep.mubr.bf16.mxu0 0
    %2796 = vmatmul.mubr.bf16.gmra.mxu0 %v2747
    %v2797 = vpop.f32.mrf.mxu0
    %v2798 = vadd.f32 0.0, %v2797
    %v2799 = vpop.f32.mrf.mxu0
    %v2800 = vpop.f32.mrf.mxu0
    %v2801 = vadd.f32 0.0, %v2800
    %v2802 = vpop.f32.mrf.mxu0
    %2803 = vmatprep.mubr.bf16.mxu0 0
    %2804 = vmatmul.mubr.bf16.gmra.mxu0 %v2750
    %v2805 = vpop.f32.mrf.mxu0
    %v2806 = vadd.f32 0.0, %v2805
    %v2807 = vpop.f32.mrf.mxu0
    %v2808 = vpop.f32.mrf.mxu0
    %v2809 = vadd.f32 0.0, %v2808
    %v2810 = vpop.f32.mrf.mxu0
    %2811 = vmatprep.mubr.bf16.mxu0 0
    %2812 = vmatmul.mubr.bf16.gmra.mxu0 %v2753
    %v2813 = vpop.f32.mrf.mxu0
    %v2814 = vadd.f32 0.0, %v2813
    %v2815 = vpop.f32.mrf.mxu0
    %v2816 = vpop.f32.mrf.mxu0
    %v2817 = vadd.f32 0.0, %v2816
    %v2818 = vpop.f32.mrf.mxu0
    %2819 = vdwg.mxu0
    %v2821 = vsel %vm1698, %v2423, 0
    %v2824 = vsel %vm1698, %v2424, 0
    %v2827 = vsel %vm1698, %v2425, 0
    %v2830 = vsel %vm1698, %v2426, 0
    %2832 = vmatprep.subr.bf16.mxu0 0
    %2833 = vmatpush1.bf16.msra.mxu0 0
    %2834 = vmatprep.subr.bf16.mxu0 0
    %2835 = vmatpush1.bf16.msra.mxu0 0
    %2836 = vmatprep.subr.bf16.mxu0 0
    %2837 = vmatpush1.bf16.msra.mxu0 0
    %2838 = vmatprep.subr.bf16.mxu0 0
    %2839 = vmatpush1.bf16.msra.mxu0 0
    %2840 = vmatprep.subr.bf16.mxu0 0
    %2841 = vmatpush1.bf16.msra.mxu0 %v944
    %2842 = vmatprep.subr.bf16.mxu0 0
    %2843 = vmatpush1.bf16.msra.mxu0 %v942
    %2844 = vmatprep.subr.bf16.mxu0 0
    %2845 = vmatpush1.bf16.msra.mxu0 %v940
    %2846 = vmatprep.subr.bf16.mxu0 0
    %2847 = vmatpush1.bf16.msra.mxu0 %v938
    %2848 = vmatprep.subr.bf16.mxu0 0
    %2849 = vmatpush2.bf16.msra.mxu0 0
    %2850 = vmatprep.subr.bf16.mxu0 0
    %2851 = vmatpush2.bf16.msra.mxu0 0
    %2852 = vmatprep.subr.bf16.mxu0 0
    %2853 = vmatpush2.bf16.msra.mxu0 0
    %2854 = vmatprep.subr.bf16.mxu0 0
    %2855 = vmatpush2.bf16.msra.mxu0 0
    %2856 = vmatprep.subr.bf16.mxu0 0
    %2857 = vmatpush2.bf16.msra.mxu0 0
    %2858 = vmatprep.subr.bf16.mxu0 0
    %2859 = vmatpush2.bf16.msra.mxu0 0
    %2860 = vmatprep.subr.bf16.mxu0 0
    %2861 = vmatpush2.bf16.msra.mxu0 0
    %2862 = vmatprep.subr.bf16.mxu0 0
    %2863 = vmatpush2.bf16.msra.mxu0 0
    %2864 = vmatprep.mubr.bf16.mxu0 0
    %2865 = vmatmul.mubr.bf16.gmra.mxu0 %v2821
    %v2866 = vpop.f32.mrf.mxu0
    %v2867 = vadd.f32 0.0, %v2866
    %v2868 = vpop.f32.mrf.mxu0
    %v2869 = vpop.f32.mrf.mxu0
    %v2870 = vadd.f32 0.0, %v2869
    %v2871 = vpop.f32.mrf.mxu0
    %2872 = vmatprep.mubr.bf16.mxu0 0
    %2873 = vmatmul.mubr.bf16.gmra.mxu0 %v2824
    %v2874 = vpop.f32.mrf.mxu0
    %v2875 = vadd.f32 0.0, %v2874
    %v2876 = vpop.f32.mrf.mxu0
    %v2877 = vpop.f32.mrf.mxu0
    %v2878 = vadd.f32 0.0, %v2877
    %v2879 = vpop.f32.mrf.mxu0
    %2880 = vmatprep.mubr.bf16.mxu0 0
    %2881 = vmatmul.mubr.bf16.gmra.mxu0 %v2827
    %v2882 = vpop.f32.mrf.mxu0
    %v2883 = vadd.f32 0.0, %v2882
    %v2884 = vpop.f32.mrf.mxu0
    %v2885 = vpop.f32.mrf.mxu0
    %v2886 = vadd.f32 0.0, %v2885
    %v2887 = vpop.f32.mrf.mxu0
    %2888 = vmatprep.mubr.bf16.mxu0 0
    %2889 = vmatmul.mubr.bf16.gmra.mxu0 %v2830
    %v2890 = vpop.f32.mrf.mxu0
    %v2891 = vadd.f32 0.0, %v2890
    %v2892 = vpop.f32.mrf.mxu0
    %v2893 = vpop.f32.mrf.mxu0
    %v2894 = vadd.f32 0.0, %v2893
    %v2895 = vpop.f32.mrf.mxu0
    %2896 = vdwg.mxu0
    %v2898 = vsel %vm1698, %v2427, 0
    %v2901 = vsel %vm1698, %v2428, 0
    %v2904 = vsel %vm1698, %v2429, 0
    %v2907 = vsel %vm1698, %v2430, 0
    %2909 = vmatprep.subr.bf16.mxu0 0
    %2910 = vmatpush1.bf16.msra.mxu0 0
    %2911 = vmatprep.subr.bf16.mxu0 0
    %2912 = vmatpush1.bf16.msra.mxu0 0
    %2913 = vmatprep.subr.bf16.mxu0 0
    %2914 = vmatpush1.bf16.msra.mxu0 0
    %2915 = vmatprep.subr.bf16.mxu0 0
    %2916 = vmatpush1.bf16.msra.mxu0 0
    %2917 = vmatprep.subr.bf16.mxu0 0
    %2918 = vmatpush1.bf16.msra.mxu0 %v960
    %2919 = vmatprep.subr.bf16.mxu0 0
    %2920 = vmatpush1.bf16.msra.mxu0 %v958
    %2921 = vmatprep.subr.bf16.mxu0 0
    %2922 = vmatpush1.bf16.msra.mxu0 %v956
    %2923 = vmatprep.subr.bf16.mxu0 0
    %2924 = vmatpush1.bf16.msra.mxu0 %v954
    %2925 = vmatprep.subr.bf16.mxu0 0
    %2926 = vmatpush2.bf16.msra.mxu0 0
    %2927 = vmatprep.subr.bf16.mxu0 0
    %2928 = vmatpush2.bf16.msra.mxu0 0
    %2929 = vmatprep.subr.bf16.mxu0 0
    %2930 = vmatpush2.bf16.msra.mxu0 0
    %2931 = vmatprep.subr.bf16.mxu0 0
    %2932 = vmatpush2.bf16.msra.mxu0 0
    %2933 = vmatprep.subr.bf16.mxu0 0
    %2934 = vmatpush2.bf16.msra.mxu0 0
    %2935 = vmatprep.subr.bf16.mxu0 0
    %2936 = vmatpush2.bf16.msra.mxu0 0
    %2937 = vmatprep.subr.bf16.mxu0 0
    %2938 = vmatpush2.bf16.msra.mxu0 0
    %2939 = vmatprep.subr.bf16.mxu0 0
    %2940 = vmatpush2.bf16.msra.mxu0 0
    %2941 = vmatprep.mubr.bf16.mxu0 0
    %2942 = vmatmul.mubr.bf16.gmra.mxu0 %v2898
    %v2943 = vpop.f32.mrf.mxu0
    %v2944 = vadd.f32 0.0, %v2943
    %v2945 = vpop.f32.mrf.mxu0
    %v2946 = vpop.f32.mrf.mxu0
    %v2947 = vadd.f32 0.0, %v2946
    %v2948 = vpop.f32.mrf.mxu0
    %2949 = vmatprep.mubr.bf16.mxu0 0
    %2950 = vmatmul.mubr.bf16.gmra.mxu0 %v2901
    %v2951 = vpop.f32.mrf.mxu0
    %v2952 = vadd.f32 0.0, %v2951
    %v2953 = vpop.f32.mrf.mxu0
    %v2954 = vpop.f32.mrf.mxu0
    %v2955 = vadd.f32 0.0, %v2954
    %v2956 = vpop.f32.mrf.mxu0
    %2957 = vmatprep.mubr.bf16.mxu0 0
    %2958 = vmatmul.mubr.bf16.gmra.mxu0 %v2904
    %v2959 = vpop.f32.mrf.mxu0
    %v2960 = vadd.f32 0.0, %v2959
    %v2961 = vpop.f32.mrf.mxu0
    %v2962 = vpop.f32.mrf.mxu0
    %v2963 = vadd.f32 0.0, %v2962
    %v2964 = vpop.f32.mrf.mxu0
    %2965 = vmatprep.mubr.bf16.mxu0 0
    %2966 = vmatmul.mubr.bf16.gmra.mxu0 %v2907
    %v2967 = vpop.f32.mrf.mxu0
    %v2968 = vadd.f32 0.0, %v2967
    %v2969 = vpop.f32.mrf.mxu0
    %v2970 = vpop.f32.mrf.mxu0
    %v2971 = vadd.f32 0.0, %v2970
    %v2972 = vpop.f32.mrf.mxu0
    %2973 = vdwg.mxu0
    %v2975 = vsel %vm1698, %v2431, 0
    %v2978 = vsel %vm1698, %v2432, 0
    %v2981 = vsel %vm1698, %v2433, 0
    %v2984 = vsel %vm1698, %v2434, 0
    %2986 = vmatprep.subr.bf16.mxu0 0
    %2987 = vmatpush1.bf16.msra.mxu0 0
    %2988 = vmatprep.subr.bf16.mxu0 0
    %2989 = vmatpush1.bf16.msra.mxu0 0
    %2990 = vmatprep.subr.bf16.mxu0 0
    %2991 = vmatpush1.bf16.msra.mxu0 0
    %2992 = vmatprep.subr.bf16.mxu0 0
    %2993 = vmatpush1.bf16.msra.mxu0 0
    %2994 = vmatprep.subr.bf16.mxu0 0
    %2995 = vmatpush1.bf16.msra.mxu0 %v968
    %2996 = vmatprep.subr.bf16.mxu0 0
    %2997 = vmatpush1.bf16.msra.mxu0 %v966
    %2998 = vmatprep.subr.bf16.mxu0 0
    %2999 = vmatpush1.bf16.msra.mxu0 %v964
    %3000 = vmatprep.subr.bf16.mxu0 0
    %3001 = vmatpush1.bf16.msra.mxu0 %v962
    %3002 = vmatprep.subr.bf16.mxu0 0
    %3003 = vmatpush2.bf16.msra.mxu0 0
    %3004 = vmatprep.subr.bf16.mxu0 0
    %3005 = vmatpush2.bf16.msra.mxu0 0
    %3006 = vmatprep.subr.bf16.mxu0 0
    %3007 = vmatpush2.bf16.msra.mxu0 0
    %3008 = vmatprep.subr.bf16.mxu0 0
    %3009 = vmatpush2.bf16.msra.mxu0 0
    %3010 = vmatprep.subr.bf16.mxu0 0
    %3011 = vmatpush2.bf16.msra.mxu0 0
    %3012 = vmatprep.subr.bf16.mxu0 0
    %3013 = vmatpush2.bf16.msra.mxu0 0
    %3014 = vmatprep.subr.bf16.mxu0 0
    %3015 = vmatpush2.bf16.msra.mxu0 0
    %3016 = vmatprep.subr.bf16.mxu0 0
    %3017 = vmatpush2.bf16.msra.mxu0 0
    %3018 = vmatprep.mubr.bf16.mxu0 0
    %3019 = vmatmul.mubr.bf16.gmra.mxu0 %v2975
    %v3020 = vpop.f32.mrf.mxu0
    %v3021 = vadd.f32 0.0, %v3020
    %v3022 = vpop.f32.mrf.mxu0
    %v3023 = vpop.f32.mrf.mxu0
    %v3024 = vadd.f32 0.0, %v3023
    %v3025 = vpop.f32.mrf.mxu0
    %3026 = vmatprep.mubr.bf16.mxu0 0
    %3027 = vmatmul.mubr.bf16.gmra.mxu0 %v2978
    %v3028 = vpop.f32.mrf.mxu0
    %v3029 = vadd.f32 0.0, %v3028
    %v3030 = vpop.f32.mrf.mxu0
    %v3031 = vpop.f32.mrf.mxu0
    %v3032 = vadd.f32 0.0, %v3031
    %v3033 = vpop.f32.mrf.mxu0
    %3034 = vmatprep.mubr.bf16.mxu0 0
    %3035 = vmatmul.mubr.bf16.gmra.mxu0 %v2981
    %v3036 = vpop.f32.mrf.mxu0
    %v3037 = vadd.f32 0.0, %v3036
    %v3038 = vpop.f32.mrf.mxu0
    %v3039 = vpop.f32.mrf.mxu0
    %v3040 = vadd.f32 0.0, %v3039
    %v3041 = vpop.f32.mrf.mxu0
    %3042 = vmatprep.mubr.bf16.mxu0 0
    %3043 = vmatmul.mubr.bf16.gmra.mxu0 %v2984
    %v3044 = vpop.f32.mrf.mxu0
    %v3045 = vadd.f32 0.0, %v3044
    %v3046 = vpop.f32.mrf.mxu0
    %v3047 = vpop.f32.mrf.mxu0
    %v3048 = vadd.f32 0.0, %v3047
    %v3049 = vpop.f32.mrf.mxu0
    %3050 = vdwg.mxu0
    %3067 = vrot.lane.b32.xlu0 %v2636, 32
    %v3068 = vpop.permute.xlu0 %3067
    %3069 = vrot.lane.b32.xlu0 %v2639, 32
    %v3070 = vpop.permute.xlu0 %3069
    %3071 = vrot.lane.b32.xlu0 %v2644, 32
    %v3072 = vpop.permute.xlu0 %3071
    %3073 = vrot.lane.b32.xlu0 %v2647, 32
    %v3074 = vpop.permute.xlu0 %3073
    %3075 = vrot.lane.b32.xlu0 %v2652, 32
    %v3076 = vpop.permute.xlu0 %3075
    %3077 = vrot.lane.b32.xlu0 %v2655, 32
    %v3078 = vpop.permute.xlu0 %3077
    %3079 = vrot.lane.b32.xlu0 %v2660, 32
    %v3080 = vpop.permute.xlu0 %3079
    %3081 = vrot.lane.b32.xlu0 %v2663, 32
    %v3082 = vpop.permute.xlu0 %3081
    %3083 = vrot.lane.b32.xlu0 %v2713, 32
    %v3084 = vpop.permute.xlu0 %3083
    %3085 = vrot.lane.b32.xlu0 %v2716, 32
    %v3086 = vpop.permute.xlu0 %3085
    %3087 = vrot.lane.b32.xlu0 %v2721, 32
    %v3088 = vpop.permute.xlu0 %3087
    %3089 = vrot.lane.b32.xlu0 %v2724, 32
    %v3090 = vpop.permute.xlu0 %3089
    %3091 = vrot.lane.b32.xlu0 %v2729, 32
    %v3092 = vpop.permute.xlu0 %3091
    %3093 = vrot.lane.b32.xlu0 %v2732, 32
    %v3094 = vpop.permute.xlu0 %3093
    %3095 = vrot.lane.b32.xlu0 %v2737, 32
    %v3096 = vpop.permute.xlu0 %3095
    %3097 = vrot.lane.b32.xlu0 %v2740, 32
    %v3098 = vpop.permute.xlu0 %3097
    %3131 = vrot.lane.b32.xlu0 %v2790, 64
    %v3132 = vpop.permute.xlu0 %3131
    %3133 = vrot.lane.b32.xlu0 %v2793, 64
    %v3134 = vpop.permute.xlu0 %3133
    %3135 = vrot.lane.b32.xlu0 %v2798, 64
    %v3136 = vpop.permute.xlu0 %3135
    %3137 = vrot.lane.b32.xlu0 %v2801, 64
    %v3138 = vpop.permute.xlu0 %3137
    %3139 = vrot.lane.b32.xlu0 %v2806, 64
    %v3140 = vpop.permute.xlu0 %3139
    %3141 = vrot.lane.b32.xlu0 %v2809, 64
    %v3142 = vpop.permute.xlu0 %3141
    %3143 = vrot.lane.b32.xlu0 %v2814, 64
    %v3144 = vpop.permute.xlu0 %3143
    %3145 = vrot.lane.b32.xlu0 %v2817, 64
    %v3146 = vpop.permute.xlu0 %3145
    %3147 = vrot.lane.b32.xlu0 %v2867, 64
    %v3148 = vpop.permute.xlu0 %3147
    %3149 = vrot.lane.b32.xlu0 %v2870, 64
    %v3150 = vpop.permute.xlu0 %3149
    %3151 = vrot.lane.b32.xlu0 %v2875, 64
    %v3152 = vpop.permute.xlu0 %3151
    %3153 = vrot.lane.b32.xlu0 %v2878, 64
    %v3154 = vpop.permute.xlu0 %3153
    %3155 = vrot.lane.b32.xlu0 %v2883, 64
    %v3156 = vpop.permute.xlu0 %3155
    %3157 = vrot.lane.b32.xlu0 %v2886, 64
    %v3158 = vpop.permute.xlu0 %3157
    %3159 = vrot.lane.b32.xlu0 %v2891, 64
    %v3160 = vpop.permute.xlu0 %3159
    %3161 = vrot.lane.b32.xlu0 %v2894, 64
    %v3162 = vpop.permute.xlu0 %3161
    %3195 = vrot.lane.b32.xlu0 %v2944, 96
    %v3196 = vpop.permute.xlu0 %3195
    %3197 = vrot.lane.b32.xlu0 %v2947, 96
    %v3198 = vpop.permute.xlu0 %3197
    %3199 = vrot.lane.b32.xlu0 %v2952, 96
    %v3200 = vpop.permute.xlu0 %3199
    %3201 = vrot.lane.b32.xlu0 %v2955, 96
    %v3202 = vpop.permute.xlu0 %3201
    %3203 = vrot.lane.b32.xlu0 %v2960, 96
    %v3204 = vpop.permute.xlu0 %3203
    %3205 = vrot.lane.b32.xlu0 %v2963, 96
    %v3206 = vpop.permute.xlu0 %3205
    %3207 = vrot.lane.b32.xlu0 %v2968, 96
    %v3208 = vpop.permute.xlu0 %3207
    %3209 = vrot.lane.b32.xlu0 %v2971, 96
    %v3210 = vpop.permute.xlu0 %3209
    %3211 = vrot.lane.b32.xlu0 %v3021, 96
    %v3212 = vpop.permute.xlu0 %3211
    %3213 = vrot.lane.b32.xlu0 %v3024, 96
    %v3214 = vpop.permute.xlu0 %3213
    %3215 = vrot.lane.b32.xlu0 %v3029, 96
    %v3216 = vpop.permute.xlu0 %3215
    %3217 = vrot.lane.b32.xlu0 %v3032, 96
    %v3218 = vpop.permute.xlu0 %3217
    %3219 = vrot.lane.b32.xlu0 %v3037, 96
    %v3220 = vpop.permute.xlu0 %3219
    %3221 = vrot.lane.b32.xlu0 %v3040, 96
    %v3222 = vpop.permute.xlu0 %3221
    %3223 = vrot.lane.b32.xlu0 %v3045, 96
    %v3224 = vpop.permute.xlu0 %3223
    %3225 = vrot.lane.b32.xlu0 %v3048, 96
    %v3226 = vpop.permute.xlu0 %3225
    %v3243 = vsel %vm985, %v2482, %v3068
    %v3244 = vsel %vm985, %v2485, %v3070
    %v3245 = vsel %vm985, %v2490, %v3072
    %v3246 = vsel %vm985, %v2493, %v3074
    %v3247 = vsel %vm985, %v2498, %v3076
    %v3248 = vsel %vm985, %v2501, %v3078
    %v3249 = vsel %vm985, %v2506, %v3080
    %v3250 = vsel %vm985, %v2509, %v3082
    %v3251 = vsel %vm985, %v2559, %v3084
    %v3252 = vsel %vm985, %v2562, %v3086
    %v3253 = vsel %vm985, %v2567, %v3088
    %v3254 = vsel %vm985, %v2570, %v3090
    %v3255 = vsel %vm985, %v2575, %v3092
    %v3256 = vsel %vm985, %v2578, %v3094
    %v3257 = vsel %vm985, %v2583, %v3096
    %v3258 = vsel %vm985, %v2586, %v3098
    %v3259 = vsel %vm1698, %v3243, %v3132
    %v3260 = vsel %vm1698, %v3244, %v3134
    %v3261 = vsel %vm1698, %v3245, %v3136
    %v3262 = vsel %vm1698, %v3246, %v3138
    %v3263 = vsel %vm1698, %v3247, %v3140
    %v3264 = vsel %vm1698, %v3248, %v3142
    %v3265 = vsel %vm1698, %v3249, %v3144
    %v3266 = vsel %vm1698, %v3250, %v3146
    %v3267 = vsel %vm1698, %v3251, %v3148
    %v3268 = vsel %vm1698, %v3252, %v3150
    %v3269 = vsel %vm1698, %v3253, %v3152
    %v3270 = vsel %vm1698, %v3254, %v3154
    %v3271 = vsel %vm1698, %v3255, %v3156
    %v3272 = vsel %vm1698, %v3256, %v3158
    %v3273 = vsel %vm1698, %v3257, %v3160
    %v3274 = vsel %vm1698, %v3258, %v3162
    %vm3275 = vcmask 785408
    %v3276 = vsel %vm3275, %v3259, %v3196
    %v3277 = vsel %vm3275, %v3260, %v3198
    %v3278 = vsel %vm3275, %v3261, %v3200
    %v3279 = vsel %vm3275, %v3262, %v3202
    %v3280 = vsel %vm3275, %v3263, %v3204
    %v3281 = vsel %vm3275, %v3264, %v3206
    %v3282 = vsel %vm3275, %v3265, %v3208
    %v3283 = vsel %vm3275, %v3266, %v3210
    %v3284 = vsel %vm3275, %v3267, %v3212
    %v3285 = vsel %vm3275, %v3268, %v3214
    %v3286 = vsel %vm3275, %v3269, %v3216
    %v3287 = vsel %vm3275, %v3270, %v3218
    %v3288 = vsel %vm3275, %v3271, %v3220
    %v3289 = vsel %vm3275, %v3272, %v3222
    %v3290 = vsel %vm3275, %v3273, %v3224
    %v3291 = vsel %vm3275, %v3274, %v3226
    %v3292 = vpack.c.bf16 %v3277, %v3276
    %v3293 = vpack.c.bf16 %v3279, %v3278
    %v3294 = vpack.c.bf16 %v3281, %v3280
    %v3295 = vpack.c.bf16 %v3283, %v3282
    %v3296 = vpack.c.bf16 %v3285, %v3284
    %v3297 = vpack.c.bf16 %v3287, %v3286
    %v3298 = vpack.c.bf16 %v3289, %v3288
    %v3299 = vpack.c.bf16 %v3291, %v3290
    %v3300 = vld [vmem:[#allocation8] sm:$0xf]
    %v3301 = vld [vmem:[#allocation8 + $0x4] sm:$0xf]
    %v3302 = vld [vmem:[#allocation8 + $0x8] sm:$0xf]
    %v3303 = vld [vmem:[#allocation8 + $0xc] sm:$0xf]
    %v3304 = vld [vmem:[#allocation8 + $0x10] sm:$0xf]
    %v3305 = vld [vmem:[#allocation8 + $0x14] sm:$0xf]
    %v3306 = vld [vmem:[#allocation8 + $0x18] sm:$0xf]
    %v3307 = vld [vmem:[#allocation8 + $0x1c] sm:$0xf]
    %v3308 = vld [vmem:[#allocation8 + $0x20] sm:$0xf]
    %v3309 = vld [vmem:[#allocation8 + $0x24] sm:$0xf]
    %v3310 = vld [vmem:[#allocation8 + $0x28] sm:$0xf]
    %v3311 = vld [vmem:[#allocation8 + $0x2c] sm:$0xf]
    %v3312 = vld [vmem:[#allocation8 + $0x30] sm:$0xf]
    %v3313 = vld [vmem:[#allocation8 + $0x34] sm:$0xf]
    %v3314 = vld [vmem:[#allocation8 + $0x38] sm:$0xf]
    %v3315 = vld [vmem:[#allocation8 + $0x3c] sm:$0xf]
    %v3316 = vld [vmem:[%s6] sm:$0x1]
    %v3318 = vlaneseq
    %v3319 = vshrl.u32 %v3318, 7
    %v3320 = vsub.s32 0, %v3319
    %v3321 = vrot.slane %v3316, %v3320
    %v3339 = vunpack.c.l.b16 %v3300
    %v3340 = vunpack.c.l.b16 %v3301
    %v3341 = vunpack.c.l.b16 %v3302
    %v3342 = vunpack.c.l.b16 %v3303
    %v3343 = vunpack.c.l.b16 %v3304
    %v3344 = vunpack.c.l.b16 %v3305
    %v3345 = vunpack.c.l.b16 %v3306
    %v3346 = vunpack.c.l.b16 %v3307
    %v3347 = vunpack.c.l.b16 %v3308
    %v3348 = vunpack.c.l.b16 %v3309
    %v3349 = vunpack.c.l.b16 %v3310
    %v3350 = vunpack.c.l.b16 %v3311
    %v3351 = vunpack.c.l.b16 %v3312
    %v3352 = vunpack.c.l.b16 %v3313
    %v3353 = vunpack.c.l.b16 %v3314
    %v3354 = vunpack.c.l.b16 %v3315
    %v3355 = vpack.c.b16 %v3340, %v3339
    %v3356 = vpack.c.b16 %v3342, %v3341
    %v3357 = vpack.c.b16 %v3344, %v3343
    %v3358 = vpack.c.b16 %v3346, %v3345
    %v3359 = vpack.c.b16 %v3348, %v3347
    %v3360 = vpack.c.b16 %v3350, %v3349
    %v3361 = vpack.c.b16 %v3352, %v3351
    %v3362 = vpack.c.b16 %v3354, %v3353
    %3371 = vmatprep.subr.bf16.mxu0 0
    %3372 = vmatpush1.bf16.msra.mxu0 %v3362
    %3373 = vmatprep.subr.bf16.mxu0 0
    %3374 = vmatpush1.bf16.msra.mxu0 %v3361
    %3375 = vmatprep.subr.bf16.mxu0 0
    %3376 = vmatpush1.bf16.msra.mxu0 %v3360
    %3377 = vmatprep.subr.bf16.mxu0 0
    %3378 = vmatpush1.bf16.msra.mxu0 %v3359
    %3379 = vmatprep.subr.bf16.mxu0 0
    %3380 = vmatpush1.bf16.msra.mxu0 %v3358
    %3381 = vmatprep.subr.bf16.mxu0 0
    %3382 = vmatpush1.bf16.msra.mxu0 %v3357
    %3383 = vmatprep.subr.bf16.mxu0 0
    %3384 = vmatpush1.bf16.msra.mxu0 %v3356
    %3385 = vmatprep.subr.bf16.mxu0 0
    %3386 = vmatpush1.bf16.msra.mxu0 %v3355
    %3387 = vmatprep.subr.bf16.mxu0 0
    %3388 = vmatpush2.bf16.msra.mxu0 0
    %3389 = vmatprep.subr.bf16.mxu0 0
    %3390 = vmatpush2.bf16.msra.mxu0 0
    %3391 = vmatprep.subr.bf16.mxu0 0
    %3392 = vmatpush2.bf16.msra.mxu0 0
    %3393 = vmatprep.subr.bf16.mxu0 0
    %3394 = vmatpush2.bf16.msra.mxu0 0
    %3395 = vmatprep.subr.bf16.mxu0 0
    %3396 = vmatpush2.bf16.msra.mxu0 0
    %3397 = vmatprep.subr.bf16.mxu0 0
    %3398 = vmatpush2.bf16.msra.mxu0 0
    %3399 = vmatprep.subr.bf16.mxu0 0
    %3400 = vmatpush2.bf16.msra.mxu0 0
    %3401 = vmatprep.subr.bf16.mxu0 0
    %3402 = vmatpush2.bf16.msra.mxu0 0
    %3403 = vmatprep.mubr.bf16.mxu0 0
    %3404 = vmatmul.mubr.bf16.gmra.mxu0 %v3292
    %v3405 = vpop.f32.mrf.mxu0
    %v3406 = vadd.f32 %v3321, %v3405
    %v3407 = vpop.f32.mrf.mxu0
    %v3408 = vpop.f32.mrf.mxu0
    %v3409 = vadd.f32 %v3321, %v3408
    %v3410 = vpop.f32.mrf.mxu0
    %3411 = vmatprep.mubr.bf16.mxu0 0
    %3412 = vmatmul.mubr.bf16.gmra.mxu0 %v3293
    %v3413 = vpop.f32.mrf.mxu0
    %v3414 = vadd.f32 %v3321, %v3413
    %v3415 = vpop.f32.mrf.mxu0
    %v3416 = vpop.f32.mrf.mxu0
    %v3417 = vadd.f32 %v3321, %v3416
    %v3418 = vpop.f32.mrf.mxu0
    %3419 = vmatprep.mubr.bf16.mxu0 0
    %3420 = vmatmul.mubr.bf16.gmra.mxu0 %v3294
    %v3421 = vpop.f32.mrf.mxu0
    %v3422 = vadd.f32 %v3321, %v3421
    %v3423 = vpop.f32.mrf.mxu0
    %v3424 = vpop.f32.mrf.mxu0
    %v3425 = vadd.f32 %v3321, %v3424
    %v3426 = vpop.f32.mrf.mxu0
    %3427 = vmatprep.mubr.bf16.mxu0 0
    %3428 = vmatmul.mubr.bf16.gmra.mxu0 %v3295
    %v3429 = vpop.f32.mrf.mxu0
    %v3430 = vadd.f32 %v3321, %v3429
    %v3431 = vpop.f32.mrf.mxu0
    %v3432 = vpop.f32.mrf.mxu0
    %v3433 = vadd.f32 %v3321, %v3432
    %v3434 = vpop.f32.mrf.mxu0
    %3435 = vmatprep.mubr.bf16.mxu0 0
    %3436 = vmatmul.mubr.bf16.gmra.mxu0 %v3296
    %v3437 = vpop.f32.mrf.mxu0
    %v3438 = vadd.f32 %v3321, %v3437
    %v3439 = vpop.f32.mrf.mxu0
    %v3440 = vpop.f32.mrf.mxu0
    %v3441 = vadd.f32 %v3321, %v3440
    %v3442 = vpop.f32.mrf.mxu0
    %3443 = vmatprep.mubr.bf16.mxu0 0
    %3444 = vmatmul.mubr.bf16.gmra.mxu0 %v3297
    %v3445 = vpop.f32.mrf.mxu0
    %v3446 = vadd.f32 %v3321, %v3445
    %v3447 = vpop.f32.mrf.mxu0
    %v3448 = vpop.f32.mrf.mxu0
    %v3449 = vadd.f32 %v3321, %v3448
    %v3450 = vpop.f32.mrf.mxu0
    %3451 = vmatprep.mubr.bf16.mxu0 0
    %3452 = vmatmul.mubr.bf16.gmra.mxu0 %v3298
    %v3453 = vpop.f32.mrf.mxu0
    %v3454 = vadd.f32 %v3321, %v3453
    %v3455 = vpop.f32.mrf.mxu0
    %v3456 = vpop.f32.mrf.mxu0
    %v3457 = vadd.f32 %v3321, %v3456
    %v3458 = vpop.f32.mrf.mxu0
    %3459 = vmatprep.mubr.bf16.mxu0 0
    %3460 = vmatmul.mubr.bf16.gmra.mxu0 %v3299
    %v3461 = vpop.f32.mrf.mxu0
    %v3462 = vadd.f32 %v3321, %v3461
    %v3463 = vpop.f32.mrf.mxu0
    %v3464 = vpop.f32.mrf.mxu0
    %v3465 = vadd.f32 %v3321, %v3464
    %v3466 = vpop.f32.mrf.mxu0
    %3467 = vdwg.mxu0
    %v3468 = vadd.f32 %v128, %v3406
    %v3469 = vadd.f32 %v129, %v3409
    %v3470 = vadd.f32 %v130, %v3414
    %v3471 = vadd.f32 %v131, %v3417
    %v3472 = vadd.f32 %v132, %v3422
    %v3473 = vadd.f32 %v133, %v3425
    %v3474 = vadd.f32 %v134, %v3430
    %v3475 = vadd.f32 %v135, %v3433
    %v3476 = vadd.f32 %v136, %v3438
    %v3477 = vadd.f32 %v137, %v3441
    %v3478 = vadd.f32 %v138, %v3446
    %v3479 = vadd.f32 %v139, %v3449
    %v3480 = vadd.f32 %v140, %v3454
    %v3481 = vadd.f32 %v141, %v3457
    %v3482 = vadd.f32 %v142, %v3462
    %v3483 = vadd.f32 %v143, %v3465
    %v3484 = vld [vmem:[%s7] sm:$0x1]
    %v3485 = vld [vmem:[%s8] sm:$0x1]
    %3486 = vadd.xlane.f32.xlu0 %v3468
    %v3487 = vpop.xlane.xlu0 %3486
    %3488 = vadd.xlane.f32.xlu0 %v3469
    %v3489 = vpop.xlane.xlu0 %3488
    %3490 = vadd.xlane.f32.xlu0 %v3470
    %v3491 = vpop.xlane.xlu0 %3490
    %3492 = vadd.xlane.f32.xlu0 %v3471
    %v3493 = vpop.xlane.xlu0 %3492
    %3494 = vadd.xlane.f32.xlu0 %v3472
    %v3495 = vpop.xlane.xlu0 %3494
    %3496 = vadd.xlane.f32.xlu0 %v3473
    %v3497 = vpop.xlane.xlu0 %3496
    %3498 = vadd.xlane.f32.xlu0 %v3474
    %v3499 = vpop.xlane.xlu0 %3498
    %3500 = vadd.xlane.f32.xlu0 %v3475
    %v3501 = vpop.xlane.xlu0 %3500
    %3502 = vadd.xlane.f32.xlu0 %v3476
    %v3503 = vpop.xlane.xlu0 %3502
    %3504 = vadd.xlane.f32.xlu0 %v3477
    %v3505 = vpop.xlane.xlu0 %3504
    %3506 = vadd.xlane.f32.xlu0 %v3478
    %v3507 = vpop.xlane.xlu0 %3506
    %3508 = vadd.xlane.f32.xlu0 %v3479
    %v3509 = vpop.xlane.xlu0 %3508
    %3510 = vadd.xlane.f32.xlu0 %v3480
    %v3511 = vpop.xlane.xlu0 %3510
    %3512 = vadd.xlane.f32.xlu0 %v3481
    %v3513 = vpop.xlane.xlu0 %3512
    %3514 = vadd.xlane.f32.xlu0 %v3482
    %v3515 = vpop.xlane.xlu0 %3514
    %3516 = vadd.xlane.f32.xlu0 %v3483
    %v3517 = vpop.xlane.xlu0 %3516
    %v3518 = vmul.f32 %v3487, %v178
    %v3519 = vmul.f32 %v3489, %v178
    %v3520 = vmul.f32 %v3491, %v178
    %v3521 = vmul.f32 %v3493, %v178
    %v3522 = vmul.f32 %v3495, %v178
    %v3523 = vmul.f32 %v3497, %v178
    %v3524 = vmul.f32 %v3499, %v178
    %v3525 = vmul.f32 %v3501, %v178
    %v3526 = vmul.f32 %v3503, %v178
    %v3527 = vmul.f32 %v3505, %v178
    %v3528 = vmul.f32 %v3507, %v178
    %v3529 = vmul.f32 %v3509, %v178
    %v3530 = vmul.f32 %v3511, %v178
    %v3531 = vmul.f32 %v3513, %v178
    %v3532 = vmul.f32 %v3515, %v178
    %v3533 = vmul.f32 %v3517, %v178
    %v3534 = vsub.f32 %v3468, %v3518
    %v3535 = vsub.f32 %v3469, %v3519
    %v3536 = vsub.f32 %v3470, %v3520
    %v3537 = vsub.f32 %v3471, %v3521
    %v3538 = vsub.f32 %v3472, %v3522
    %v3539 = vsub.f32 %v3473, %v3523
    %v3540 = vsub.f32 %v3474, %v3524
    %v3541 = vsub.f32 %v3475, %v3525
    %v3542 = vsub.f32 %v3476, %v3526
    %v3543 = vsub.f32 %v3477, %v3527
    %v3544 = vsub.f32 %v3478, %v3528
    %v3545 = vsub.f32 %v3479, %v3529
    %v3546 = vsub.f32 %v3480, %v3530
    %v3547 = vsub.f32 %v3481, %v3531
    %v3548 = vsub.f32 %v3482, %v3532
    %v3549 = vsub.f32 %v3483, %v3533
    %v3550 = vmul.f32 %v3534, %v3534
    %v3551 = vmul.f32 %v3535, %v3535
    %v3552 = vmul.f32 %v3536, %v3536
    %v3553 = vmul.f32 %v3537, %v3537
    %v3554 = vmul.f32 %v3538, %v3538
    %v3555 = vmul.f32 %v3539, %v3539
    %v3556 = vmul.f32 %v3540, %v3540
    %v3557 = vmul.f32 %v3541, %v3541
    %v3558 = vmul.f32 %v3542, %v3542
    %v3559 = vmul.f32 %v3543, %v3543
    %v3560 = vmul.f32 %v3544, %v3544
    %v3561 = vmul.f32 %v3545, %v3545
    %v3562 = vmul.f32 %v3546, %v3546
    %v3563 = vmul.f32 %v3547, %v3547
    %v3564 = vmul.f32 %v3548, %v3548
    %v3565 = vmul.f32 %v3549, %v3549
    %3566 = vadd.xlane.f32.xlu0 %v3550
    %v3567 = vpop.xlane.xlu0 %3566
    %3568 = vadd.xlane.f32.xlu0 %v3551
    %v3569 = vpop.xlane.xlu0 %3568
    %3570 = vadd.xlane.f32.xlu0 %v3552
    %v3571 = vpop.xlane.xlu0 %3570
    %3572 = vadd.xlane.f32.xlu0 %v3553
    %v3573 = vpop.xlane.xlu0 %3572
    %3574 = vadd.xlane.f32.xlu0 %v3554
    %v3575 = vpop.xlane.xlu0 %3574
    %3576 = vadd.xlane.f32.xlu0 %v3555
    %v3577 = vpop.xlane.xlu0 %3576
    %3578 = vadd.xlane.f32.xlu0 %v3556
    %v3579 = vpop.xlane.xlu0 %3578
    %3580 = vadd.xlane.f32.xlu0 %v3557
    %v3581 = vpop.xlane.xlu0 %3580
    %3582 = vadd.xlane.f32.xlu0 %v3558
    %v3583 = vpop.xlane.xlu0 %3582
    %3584 = vadd.xlane.f32.xlu0 %v3559
    %v3585 = vpop.xlane.xlu0 %3584
    %3586 = vadd.xlane.f32.xlu0 %v3560
    %v3587 = vpop.xlane.xlu0 %3586
    %3588 = vadd.xlane.f32.xlu0 %v3561
    %v3589 = vpop.xlane.xlu0 %3588
    %3590 = vadd.xlane.f32.xlu0 %v3562
    %v3591 = vpop.xlane.xlu0 %3590
    %3592 = vadd.xlane.f32.xlu0 %v3563
    %v3593 = vpop.xlane.xlu0 %3592
    %3594 = vadd.xlane.f32.xlu0 %v3564
    %v3595 = vpop.xlane.xlu0 %3594
    %3596 = vadd.xlane.f32.xlu0 %v3565
    %v3597 = vpop.xlane.xlu0 %3596
    %v3598 = vmul.f32 %v3567, %v178
    %v3599 = vmul.f32 %v3569, %v178
    %v3600 = vmul.f32 %v3571, %v178
    %v3601 = vmul.f32 %v3573, %v178
    %v3602 = vmul.f32 %v3575, %v178
    %v3603 = vmul.f32 %v3577, %v178
    %v3604 = vmul.f32 %v3579, %v178
    %v3605 = vmul.f32 %v3581, %v178
    %v3606 = vmul.f32 %v3583, %v178
    %v3607 = vmul.f32 %v3585, %v178
    %v3608 = vmul.f32 %v3587, %v178
    %v3609 = vmul.f32 %v3589, %v178
    %v3610 = vmul.f32 %v3591, %v178
    %v3611 = vmul.f32 %v3593, %v178
    %v3612 = vmul.f32 %v3595, %v178
    %v3613 = vmul.f32 %v3597, %v178
    %v3614 = vadd.f32 %v3598, 1e-05
    %v3615 = vadd.f32 %v3599, 1e-05
    %v3616 = vadd.f32 %v3600, 1e-05
    %v3617 = vadd.f32 %v3601, 1e-05
    %v3618 = vadd.f32 %v3602, 1e-05
    %v3619 = vadd.f32 %v3603, 1e-05
    %v3620 = vadd.f32 %v3604, 1e-05
    %v3621 = vadd.f32 %v3605, 1e-05
    %v3622 = vadd.f32 %v3606, 1e-05
    %v3623 = vadd.f32 %v3607, 1e-05
    %v3624 = vadd.f32 %v3608, 1e-05
    %v3625 = vadd.f32 %v3609, 1e-05
    %v3626 = vadd.f32 %v3610, 1e-05
    %v3627 = vadd.f32 %v3611, 1e-05
    %v3628 = vadd.f32 %v3612, 1e-05
    %v3629 = vadd.f32 %v3613, 1e-05
    %v3630 = vrsqrt.pop %v3614
    %v3631 = vrsqrt.pop %v3615
    %v3632 = vrsqrt.pop %v3616
    %v3633 = vrsqrt.pop %v3617
    %v3634 = vrsqrt.pop %v3618
    %v3635 = vrsqrt.pop %v3619
    %v3636 = vrsqrt.pop %v3620
    %v3637 = vrsqrt.pop %v3621
    %v3638 = vrsqrt.pop %v3622
    %v3639 = vrsqrt.pop %v3623
    %v3640 = vrsqrt.pop %v3624
    %v3641 = vrsqrt.pop %v3625
    %v3642 = vrsqrt.pop %v3626
    %v3643 = vrsqrt.pop %v3627
    %v3644 = vrsqrt.pop %v3628
    %v3645 = vrsqrt.pop %v3629
    %v3646 = vmul.f32 %v3534, %v3630
    %v3647 = vmul.f32 %v3535, %v3631
    %v3648 = vmul.f32 %v3536, %v3632
    %v3649 = vmul.f32 %v3537, %v3633
    %v3650 = vmul.f32 %v3538, %v3634
    %v3651 = vmul.f32 %v3539, %v3635
    %v3652 = vmul.f32 %v3540, %v3636
    %v3653 = vmul.f32 %v3541, %v3637
    %v3654 = vmul.f32 %v3542, %v3638
    %v3655 = vmul.f32 %v3543, %v3639
    %v3656 = vmul.f32 %v3544, %v3640
    %v3657 = vmul.f32 %v3545, %v3641
    %v3658 = vmul.f32 %v3546, %v3642
    %v3659 = vmul.f32 %v3547, %v3643
    %v3660 = vmul.f32 %v3548, %v3644
    %v3661 = vmul.f32 %v3549, %v3645
    %v3663 = vlaneseq
    %v3664 = vshrl.u32 %v3663, 7
    %v3665 = vsub.s32 0, %v3664
    %v3666 = vrot.slane %v3484, %v3665
    %v3668 = vmul.f32 %v3646, %v3666
    %v3669 = vmul.f32 %v3647, %v3666
    %v3670 = vmul.f32 %v3648, %v3666
    %v3671 = vmul.f32 %v3649, %v3666
    %v3672 = vmul.f32 %v3650, %v3666
    %v3673 = vmul.f32 %v3651, %v3666
    %v3674 = vmul.f32 %v3652, %v3666
    %v3675 = vmul.f32 %v3653, %v3666
    %v3676 = vmul.f32 %v3654, %v3666
    %v3677 = vmul.f32 %v3655, %v3666
    %v3678 = vmul.f32 %v3656, %v3666
    %v3679 = vmul.f32 %v3657, %v3666
    %v3680 = vmul.f32 %v3658, %v3666
    %v3681 = vmul.f32 %v3659, %v3666
    %v3682 = vmul.f32 %v3660, %v3666
    %v3683 = vmul.f32 %v3661, %v3666
    %v3685 = vlaneseq
    %v3686 = vshrl.u32 %v3685, 7
    %v3687 = vsub.s32 0, %v3686
    %v3688 = vrot.slane %v3485, %v3687
    %v3690 = vadd.f32 %v3668, %v3688
    %v3691 = vadd.f32 %v3669, %v3688
    %v3692 = vadd.f32 %v3670, %v3688
    %v3693 = vadd.f32 %v3671, %v3688
    %v3694 = vadd.f32 %v3672, %v3688
    %v3695 = vadd.f32 %v3673, %v3688
    %v3696 = vadd.f32 %v3674, %v3688
    %v3697 = vadd.f32 %v3675, %v3688
    %v3698 = vadd.f32 %v3676, %v3688
    %v3699 = vadd.f32 %v3677, %v3688
    %v3700 = vadd.f32 %v3678, %v3688
    %v3701 = vadd.f32 %v3679, %v3688
    %v3702 = vadd.f32 %v3680, %v3688
    %v3703 = vadd.f32 %v3681, %v3688
    %v3704 = vadd.f32 %v3682, %v3688
    %v3705 = vadd.f32 %v3683, %v3688
    %v3706 = vpack.c.bf16 %v3691, %v3690
    %v3707 = vpack.c.bf16 %v3693, %v3692
    %v3708 = vpack.c.bf16 %v3695, %v3694
    %v3709 = vpack.c.bf16 %v3697, %v3696
    %v3710 = vpack.c.bf16 %v3699, %v3698
    %v3711 = vpack.c.bf16 %v3701, %v3700
    %v3712 = vpack.c.bf16 %v3703, %v3702
    %v3713 = vpack.c.bf16 %v3705, %v3704
    %v3714 = vld [vmem:[#allocation10] sm:$0xff]
    %v3715 = vld [vmem:[#allocation10 + $0x8] sm:$0xff]
    %v3716 = vld [vmem:[#allocation10 + $0x10] sm:$0xff]
    %v3717 = vld [vmem:[#allocation10 + $0x18] sm:$0xff]
    %v3718 = vld [vmem:[#allocation10 + $0x20] sm:$0xff]
    %v3719 = vld [vmem:[#allocation10 + $0x28] sm:$0xff]
    %v3720 = vld [vmem:[#allocation10 + $0x30] sm:$0xff]
    %v3721 = vld [vmem:[#allocation10 + $0x38] sm:$0xff]
    %v3722 = vld [vmem:[#allocation10 + $0x40] sm:$0xff]
    %v3723 = vld [vmem:[#allocation10 + $0x48] sm:$0xff]
    %v3724 = vld [vmem:[#allocation10 + $0x50] sm:$0xff]
    %v3725 = vld [vmem:[#allocation10 + $0x58] sm:$0xff]
    %v3726 = vld [vmem:[#allocation10 + $0x60] sm:$0xff]
    %v3727 = vld [vmem:[#allocation10 + $0x68] sm:$0xff]
    %v3728 = vld [vmem:[#allocation10 + $0x70] sm:$0xff]
    %v3729 = vld [vmem:[#allocation10 + $0x78] sm:$0xff]
    %v3730 = vld [vmem:[#allocation10 + $0x80] sm:$0xff]
    %v3731 = vld [vmem:[#allocation10 + $0x88] sm:$0xff]
    %v3732 = vld [vmem:[#allocation10 + $0x90] sm:$0xff]
    %v3733 = vld [vmem:[#allocation10 + $0x98] sm:$0xff]
    %v3734 = vld [vmem:[#allocation10 + $0xa0] sm:$0xff]
    %v3735 = vld [vmem:[#allocation10 + $0xa8] sm:$0xff]
    %v3736 = vld [vmem:[#allocation10 + $0xb0] sm:$0xff]
    %v3737 = vld [vmem:[#allocation10 + $0xb8] sm:$0xff]
    %v3738 = vld [vmem:[#allocation10 + $0xc0] sm:$0xff]
    %v3739 = vld [vmem:[#allocation10 + $0xc8] sm:$0xff]
    %v3740 = vld [vmem:[#allocation10 + $0xd0] sm:$0xff]
    %v3741 = vld [vmem:[#allocation10 + $0xd8] sm:$0xff]
    %v3742 = vld [vmem:[#allocation10 + $0xe0] sm:$0xff]
    %v3743 = vld [vmem:[#allocation10 + $0xe8] sm:$0xff]
    %v3744 = vld [vmem:[#allocation10 + $0xf0] sm:$0xff]
    %v3745 = vld [vmem:[#allocation10 + $0xf8] sm:$0xff]
    %v3746 = vld [vmem:[%s10] sm:$0xf]
    %v3748 = vlaneseq
    %v3749 = vshrl.u32 %v3748, 7
    %v3750 = vsub.s32 0, %v3749
    %v3751 = vrot.slane %v3746, %v3750
    %v3752 = vlaneseq
    %v3753 = vshrl.u32 %v3752, 7
    %v3754 = vsub.s32 1, %v3753
    %v3755 = vrot.slane %v3746, %v3754
    %v3756 = vlaneseq
    %v3757 = vshrl.u32 %v3756, 7
    %v3758 = vsub.s32 2, %v3757
    %v3759 = vrot.slane %v3746, %v3758
    %v3760 = vlaneseq
    %v3761 = vshrl.u32 %v3760, 7
    %v3762 = vsub.s32 3, %v3761
    %v3763 = vrot.slane %v3746, %v3762
    %v3800 = vunpack.c.l.b16 %v3714
    %v3801 = vunpack.c.h.b16 %v3714
    %v3802 = vunpack.c.l.b16 %v3715
    %v3803 = vunpack.c.h.b16 %v3715
    %v3804 = vunpack.c.l.b16 %v3716
    %v3805 = vunpack.c.h.b16 %v3716
    %v3806 = vunpack.c.l.b16 %v3717
    %v3807 = vunpack.c.h.b16 %v3717
    %v3808 = vunpack.c.l.b16 %v3718
    %v3809 = vunpack.c.h.b16 %v3718
    %v3810 = vunpack.c.l.b16 %v3719
    %v3811 = vunpack.c.h.b16 %v3719
    %v3812 = vunpack.c.l.b16 %v3720
    %v3813 = vunpack.c.h.b16 %v3720
    %v3814 = vunpack.c.l.b16 %v3721
    %v3815 = vunpack.c.h.b16 %v3721
    %v3816 = vunpack.c.l.b16 %v3722
    %v3817 = vunpack.c.h.b16 %v3722
    %v3818 = vunpack.c.l.b16 %v3723
    %v3819 = vunpack.c.h.b16 %v3723
    %v3820 = vunpack.c.l.b16 %v3724
    %v3821 = vunpack.c.h.b16 %v3724
    %v3822 = vunpack.c.l.b16 %v3725
    %v3823 = vunpack.c.h.b16 %v3725
    %v3824 = vunpack.c.l.b16 %v3726
    %v3825 = vunpack.c.h.b16 %v3726
    %v3826 = vunpack.c.l.b16 %v3727
    %v3827 = vunpack.c.h.b16 %v3727
    %v3828 = vunpack.c.l.b16 %v3728
    %v3829 = vunpack.c.h.b16 %v3728
    %v3830 = vunpack.c.l.b16 %v3729
    %v3831 = vunpack.c.h.b16 %v3729
    %v3832 = vunpack.c.l.b16 %v3730
    %v3833 = vunpack.c.h.b16 %v3730
    %v3834 = vunpack.c.l.b16 %v3731
    %v3835 = vunpack.c.h.b16 %v3731
    %v3836 = vunpack.c.l.b16 %v3732
    %v3837 = vunpack.c.h.b16 %v3732
    %v3838 = vunpack.c.l.b16 %v3733
    %v3839 = vunpack.c.h.b16 %v3733
    %v3840 = vunpack.c.l.b16 %v3734
    %v3841 = vunpack.c.h.b16 %v3734
    %v3842 = vunpack.c.l.b16 %v3735
    %v3843 = vunpack.c.h.b16 %v3735
    %v3844 = vunpack.c.l.b16 %v3736
    %v3845 = vunpack.c.h.b16 %v3736
    %v3846 = vunpack.c.l.b16 %v3737
    %v3847 = vunpack.c.h.b16 %v3737
    %v3848 = vunpack.c.l.b16 %v3738
    %v3849 = vunpack.c.h.b16 %v3738
    %v3850 = vunpack.c.l.b16 %v3739
    %v3851 = vunpack.c.h.b16 %v3739
    %v3852 = vunpack.c.l.b16 %v3740
    %v3853 = vunpack.c.h.b16 %v3740
    %v3854 = vunpack.c.l.b16 %v3741
    %v3855 = vunpack.c.h.b16 %v3741
    %v3856 = vunpack.c.l.b16 %v3742
    %v3857 = vunpack.c.h.b16 %v3742
    %v3858 = vunpack.c.l.b16 %v3743
    %v3859 = vunpack.c.h.b16 %v3743
    %v3860 = vunpack.c.l.b16 %v3744
    %v3861 = vunpack.c.h.b16 %v3744
    %v3862 = vunpack.c.l.b16 %v3745
    %v3863 = vunpack.c.h.b16 %v3745
    %v3864 = vpack.c.b16 %v3804, %v3800
    %v3865 = vpack.c.b16 %v3805, %v3801
    %v3866 = vpack.c.b16 %v3806, %v3802
    %v3867 = vpack.c.b16 %v3807, %v3803
    %v3868 = vpack.c.b16 %v3812, %v3808
    %v3869 = vpack.c.b16 %v3813, %v3809
    %v3870 = vpack.c.b16 %v3814, %v3810
    %v3871 = vpack.c.b16 %v3815, %v3811
    %v3872 = vpack.c.b16 %v3820, %v3816
    %v3873 = vpack.c.b16 %v3821, %v3817
    %v3874 = vpack.c.b16 %v3822, %v3818
    %v3875 = vpack.c.b16 %v3823, %v3819
    %v3876 = vpack.c.b16 %v3828, %v3824
    %v3877 = vpack.c.b16 %v3829, %v3825
    %v3878 = vpack.c.b16 %v3830, %v3826
    %v3879 = vpack.c.b16 %v3831, %v3827
    %v3880 = vpack.c.b16 %v3836, %v3832
    %v3881 = vpack.c.b16 %v3837, %v3833
    %v3882 = vpack.c.b16 %v3838, %v3834
    %v3883 = vpack.c.b16 %v3839, %v3835
    %v3884 = vpack.c.b16 %v3844, %v3840
    %v3885 = vpack.c.b16 %v3845, %v3841
    %v3886 = vpack.c.b16 %v3846, %v3842
    %v3887 = vpack.c.b16 %v3847, %v3843
    %v3888 = vpack.c.b16 %v3852, %v3848
    %v3889 = vpack.c.b16 %v3853, %v3849
    %v3890 = vpack.c.b16 %v3854, %v3850
    %v3891 = vpack.c.b16 %v3855, %v3851
    %v3892 = vpack.c.b16 %v3860, %v3856
    %v3893 = vpack.c.b16 %v3861, %v3857
    %v3894 = vpack.c.b16 %v3862, %v3858
    %v3895 = vpack.c.b16 %v3863, %v3859
    %3928 = vmatprep.subr.bf16.mxu0 %v3893
    %3929 = vmatpush1.bf16.msra.mxu0 %v3892
    %3930 = vmatprep.subr.bf16.mxu0 %v3889
    %3931 = vmatpush1.bf16.msra.mxu0 %v3888
    %3932 = vmatprep.subr.bf16.mxu0 %v3885
    %3933 = vmatpush1.bf16.msra.mxu0 %v3884
    %3934 = vmatprep.subr.bf16.mxu0 %v3881
    %3935 = vmatpush1.bf16.msra.mxu0 %v3880
    %3936 = vmatprep.subr.bf16.mxu0 %v3877
    %3937 = vmatpush1.bf16.msra.mxu0 %v3876
    %3938 = vmatprep.subr.bf16.mxu0 %v3873
    %3939 = vmatpush1.bf16.msra.mxu0 %v3872
    %3940 = vmatprep.subr.bf16.mxu0 %v3869
    %3941 = vmatpush1.bf16.msra.mxu0 %v3868
    %3942 = vmatprep.subr.bf16.mxu0 %v3865
    %3943 = vmatpush1.bf16.msra.mxu0 %v3864
    %3944 = vmatprep.subr.bf16.mxu0 0
    %3945 = vmatpush2.bf16.msra.mxu0 0
    %3946 = vmatprep.subr.bf16.mxu0 0
    %3947 = vmatpush2.bf16.msra.mxu0 0
    %3948 = vmatprep.subr.bf16.mxu0 0
    %3949 = vmatpush2.bf16.msra.mxu0 0
    %3950 = vmatprep.subr.bf16.mxu0 0
    %3951 = vmatpush2.bf16.msra.mxu0 0
    %3952 = vmatprep.subr.bf16.mxu0 0
    %3953 = vmatpush2.bf16.msra.mxu0 0
    %3954 = vmatprep.subr.bf16.mxu0 0
    %3955 = vmatpush2.bf16.msra.mxu0 0
    %3956 = vmatprep.subr.bf16.mxu0 0
    %3957 = vmatpush2.bf16.msra.mxu0 0
    %3958 = vmatprep.subr.bf16.mxu0 0
    %3959 = vmatpush2.bf16.msra.mxu0 0
    %3960 = vmatprep.mubr.bf16.mxu0 0
    %3961 = vmatmul.mubr.bf16.gmra.mxu0 %v3706
    %v3962 = vpop.f32.mrf.mxu0
    %v3963 = vadd.f32 %v3751, %v3962
    %v3964 = vpop.f32.mrf.mxu0
    %v3965 = vadd.f32 %v3755, %v3964
    %v3966 = vpop.f32.mrf.mxu0
    %v3967 = vadd.f32 %v3751, %v3966
    %v3968 = vpop.f32.mrf.mxu0
    %v3969 = vadd.f32 %v3755, %v3968
    %3970 = vmatprep.mubr.bf16.mxu0 0
    %3971 = vmatmul.mubr.bf16.gmra.mxu0 %v3707
    %v3972 = vpop.f32.mrf.mxu0
    %v3973 = vadd.f32 %v3751, %v3972
    %v3974 = vpop.f32.mrf.mxu0
    %v3975 = vadd.f32 %v3755, %v3974
    %v3976 = vpop.f32.mrf.mxu0
    %v3977 = vadd.f32 %v3751, %v3976
    %v3978 = vpop.f32.mrf.mxu0
    %v3979 = vadd.f32 %v3755, %v3978
    %3980 = vmatprep.mubr.bf16.mxu0 0
    %3981 = vmatmul.mubr.bf16.gmra.mxu0 %v3708
    %v3982 = vpop.f32.mrf.mxu0
    %v3983 = vadd.f32 %v3751, %v3982
    %v3984 = vpop.f32.mrf.mxu0
    %v3985 = vadd.f32 %v3755, %v3984
    %v3986 = vpop.f32.mrf.mxu0
    %v3987 = vadd.f32 %v3751, %v3986
    %v3988 = vpop.f32.mrf.mxu0
    %v3989 = vadd.f32 %v3755, %v3988
    %3990 = vmatprep.mubr.bf16.mxu0 0
    %3991 = vmatmul.mubr.bf16.gmra.mxu0 %v3709
    %v3992 = vpop.f32.mrf.mxu0
    %v3993 = vadd.f32 %v3751, %v3992
    %v3994 = vpop.f32.mrf.mxu0
    %v3995 = vadd.f32 %v3755, %v3994
    %v3996 = vpop.f32.mrf.mxu0
    %v3997 = vadd.f32 %v3751, %v3996
    %v3998 = vpop.f32.mrf.mxu0
    %v3999 = vadd.f32 %v3755, %v3998
    %4000 = vmatprep.mubr.bf16.mxu0 0
    %4001 = vmatmul.mubr.bf16.gmra.mxu0 %v3710
    %v4002 = vpop.f32.mrf.mxu0
    %v4003 = vadd.f32 %v3751, %v4002
    %v4004 = vpop.f32.mrf.mxu0
    %v4005 = vadd.f32 %v3755, %v4004
    %v4006 = vpop.f32.mrf.mxu0
    %v4007 = vadd.f32 %v3751, %v4006
    %v4008 = vpop.f32.mrf.mxu0
    %v4009 = vadd.f32 %v3755, %v4008
    %4010 = vmatprep.mubr.bf16.mxu0 0
    %4011 = vmatmul.mubr.bf16.gmra.mxu0 %v3711
    %v4012 = vpop.f32.mrf.mxu0
    %v4013 = vadd.f32 %v3751, %v4012
    %v4014 = vpop.f32.mrf.mxu0
    %v4015 = vadd.f32 %v3755, %v4014
    %v4016 = vpop.f32.mrf.mxu0
    %v4017 = vadd.f32 %v3751, %v4016
    %v4018 = vpop.f32.mrf.mxu0
    %v4019 = vadd.f32 %v3755, %v4018
    %4020 = vmatprep.mubr.bf16.mxu0 0
    %4021 = vmatmul.mubr.bf16.gmra.mxu0 %v3712
    %v4022 = vpop.f32.mrf.mxu0
    %v4023 = vadd.f32 %v3751, %v4022
    %v4024 = vpop.f32.mrf.mxu0
    %v4025 = vadd.f32 %v3755, %v4024
    %v4026 = vpop.f32.mrf.mxu0
    %v4027 = vadd.f32 %v3751, %v4026
    %v4028 = vpop.f32.mrf.mxu0
    %v4029 = vadd.f32 %v3755, %v4028
    %4030 = vmatprep.mubr.bf16.mxu0 0
    %4031 = vmatmul.mubr.bf16.gmra.mxu0 %v3713
    %v4032 = vpop.f32.mrf.mxu0
    %v4033 = vadd.f32 %v3751, %v4032
    %v4034 = vpop.f32.mrf.mxu0
    %v4035 = vadd.f32 %v3755, %v4034
    %v4036 = vpop.f32.mrf.mxu0
    %v4037 = vadd.f32 %v3751, %v4036
    %v4038 = vpop.f32.mrf.mxu0
    %v4039 = vadd.f32 %v3755, %v4038
    %4040 = vdwg.mxu0
    %4041 = vmatprep.subr.bf16.mxu0 %v3895
    %4042 = vmatpush1.bf16.msra.mxu0 %v3894
    %4043 = vmatprep.subr.bf16.mxu0 %v3891
    %4044 = vmatpush1.bf16.msra.mxu0 %v3890
    %4045 = vmatprep.subr.bf16.mxu0 %v3887
    %4046 = vmatpush1.bf16.msra.mxu0 %v3886
    %4047 = vmatprep.subr.bf16.mxu0 %v3883
    %4048 = vmatpush1.bf16.msra.mxu0 %v3882
    %4049 = vmatprep.subr.bf16.mxu0 %v3879
    %4050 = vmatpush1.bf16.msra.mxu0 %v3878
    %4051 = vmatprep.subr.bf16.mxu0 %v3875
    %4052 = vmatpush1.bf16.msra.mxu0 %v3874
    %4053 = vmatprep.subr.bf16.mxu0 %v3871
    %4054 = vmatpush1.bf16.msra.mxu0 %v3870
    %4055 = vmatprep.subr.bf16.mxu0 %v3867
    %4056 = vmatpush1.bf16.msra.mxu0 %v3866
    %4057 = vmatprep.subr.bf16.mxu0 0
    %4058 = vmatpush2.bf16.msra.mxu0 0
    %4059 = vmatprep.subr.bf16.mxu0 0
    %4060 = vmatpush2.bf16.msra.mxu0 0
    %4061 = vmatprep.subr.bf16.mxu0 0
    %4062 = vmatpush2.bf16.msra.mxu0 0
    %4063 = vmatprep.subr.bf16.mxu0 0
    %4064 = vmatpush2.bf16.msra.mxu0 0
    %4065 = vmatprep.subr.bf16.mxu0 0
    %4066 = vmatpush2.bf16.msra.mxu0 0
    %4067 = vmatprep.subr.bf16.mxu0 0
    %4068 = vmatpush2.bf16.msra.mxu0 0
    %4069 = vmatprep.subr.bf16.mxu0 0
    %4070 = vmatpush2.bf16.msra.mxu0 0
    %4071 = vmatprep.subr.bf16.mxu0 0
    %4072 = vmatpush2.bf16.msra.mxu0 0
    %4073 = vmatprep.mubr.bf16.mxu0 0
    %4074 = vmatmul.mubr.bf16.gmra.mxu0 %v3706
    %v4075 = vpop.f32.mrf.mxu0
    %v4076 = vadd.f32 %v3759, %v4075
    %v4077 = vpop.f32.mrf.mxu0
    %v4078 = vadd.f32 %v3763, %v4077
    %v4079 = vpop.f32.mrf.mxu0
    %v4080 = vadd.f32 %v3759, %v4079
    %v4081 = vpop.f32.mrf.mxu0
    %v4082 = vadd.f32 %v3763, %v4081
    %4083 = vmatprep.mubr.bf16.mxu0 0
    %4084 = vmatmul.mubr.bf16.gmra.mxu0 %v3707
    %v4085 = vpop.f32.mrf.mxu0
    %v4086 = vadd.f32 %v3759, %v4085
    %v4087 = vpop.f32.mrf.mxu0
    %v4088 = vadd.f32 %v3763, %v4087
    %v4089 = vpop.f32.mrf.mxu0
    %v4090 = vadd.f32 %v3759, %v4089
    %v4091 = vpop.f32.mrf.mxu0
    %v4092 = vadd.f32 %v3763, %v4091
    %4093 = vmatprep.mubr.bf16.mxu0 0
    %4094 = vmatmul.mubr.bf16.gmra.mxu0 %v3708
    %v4095 = vpop.f32.mrf.mxu0
    %v4096 = vadd.f32 %v3759, %v4095
    %v4097 = vpop.f32.mrf.mxu0
    %v4098 = vadd.f32 %v3763, %v4097
    %v4099 = vpop.f32.mrf.mxu0
    %v4100 = vadd.f32 %v3759, %v4099
    %v4101 = vpop.f32.mrf.mxu0
    %v4102 = vadd.f32 %v3763, %v4101
    %4103 = vmatprep.mubr.bf16.mxu0 0
    %4104 = vmatmul.mubr.bf16.gmra.mxu0 %v3709
    %v4105 = vpop.f32.mrf.mxu0
    %v4106 = vadd.f32 %v3759, %v4105
    %v4107 = vpop.f32.mrf.mxu0
    %v4108 = vadd.f32 %v3763, %v4107
    %v4109 = vpop.f32.mrf.mxu0
    %v4110 = vadd.f32 %v3759, %v4109
    %v4111 = vpop.f32.mrf.mxu0
    %v4112 = vadd.f32 %v3763, %v4111
    %4113 = vmatprep.mubr.bf16.mxu0 0
    %4114 = vmatmul.mubr.bf16.gmra.mxu0 %v3710
    %v4115 = vpop.f32.mrf.mxu0
    %v4116 = vadd.f32 %v3759, %v4115
    %v4117 = vpop.f32.mrf.mxu0
    %v4118 = vadd.f32 %v3763, %v4117
    %v4119 = vpop.f32.mrf.mxu0
    %v4120 = vadd.f32 %v3759, %v4119
    %v4121 = vpop.f32.mrf.mxu0
    %v4122 = vadd.f32 %v3763, %v4121
    %4123 = vmatprep.mubr.bf16.mxu0 0
    %4124 = vmatmul.mubr.bf16.gmra.mxu0 %v3711
    %v4125 = vpop.f32.mrf.mxu0
    %v4126 = vadd.f32 %v3759, %v4125
    %v4127 = vpop.f32.mrf.mxu0
    %v4128 = vadd.f32 %v3763, %v4127
    %v4129 = vpop.f32.mrf.mxu0
    %v4130 = vadd.f32 %v3759, %v4129
    %v4131 = vpop.f32.mrf.mxu0
    %v4132 = vadd.f32 %v3763, %v4131
    %4133 = vmatprep.mubr.bf16.mxu0 0
    %4134 = vmatmul.mubr.bf16.gmra.mxu0 %v3712
    %v4135 = vpop.f32.mrf.mxu0
    %v4136 = vadd.f32 %v3759, %v4135
    %v4137 = vpop.f32.mrf.mxu0
    %v4138 = vadd.f32 %v3763, %v4137
    %v4139 = vpop.f32.mrf.mxu0
    %v4140 = vadd.f32 %v3759, %v4139
    %v4141 = vpop.f32.mrf.mxu0
    %v4142 = vadd.f32 %v3763, %v4141
    %4143 = vmatprep.mubr.bf16.mxu0 0
    %4144 = vmatmul.mubr.bf16.gmra.mxu0 %v3713
    %v4145 = vpop.f32.mrf.mxu0
    %v4146 = vadd.f32 %v3759, %v4145
    %v4147 = vpop.f32.mrf.mxu0
    %v4148 = vadd.f32 %v3763, %v4147
    %v4149 = vpop.f32.mrf.mxu0
    %v4150 = vadd.f32 %v3759, %v4149
    %v4151 = vpop.f32.mrf.mxu0
    %v4152 = vadd.f32 %v3763, %v4151
    %4153 = vdwg.mxu0
    %v4154 = vmax.f32 %v3963, 0.0
    %v4155 = vmax.f32 %v3965, 0.0
    %v4156 = vmax.f32 %v4076, 0.0
    %v4157 = vmax.f32 %v4078, 0.0
    %v4158 = vmax.f32 %v3967, 0.0
    %v4159 = vmax.f32 %v3969, 0.0
    %v4160 = vmax.f32 %v4080, 0.0
    %v4161 = vmax.f32 %v4082, 0.0
    %v4162 = vmax.f32 %v3973, 0.0
    %v4163 = vmax.f32 %v3975, 0.0
    %v4164 = vmax.f32 %v4086, 0.0
    %v4165 = vmax.f32 %v4088, 0.0
    %v4166 = vmax.f32 %v3977, 0.0
    %v4167 = vmax.f32 %v3979, 0.0
    %v4168 = vmax.f32 %v4090, 0.0
    %v4169 = vmax.f32 %v4092, 0.0
    %v4170 = vmax.f32 %v3983, 0.0
    %v4171 = vmax.f32 %v3985, 0.0
    %v4172 = vmax.f32 %v4096, 0.0
    %v4173 = vmax.f32 %v4098, 0.0
    %v4174 = vmax.f32 %v3987, 0.0
    %v4175 = vmax.f32 %v3989, 0.0
    %v4176 = vmax.f32 %v4100, 0.0
    %v4177 = vmax.f32 %v4102, 0.0
    %v4178 = vmax.f32 %v3993, 0.0
    %v4179 = vmax.f32 %v3995, 0.0
    %v4180 = vmax.f32 %v4106, 0.0
    %v4181 = vmax.f32 %v4108, 0.0
    %v4182 = vmax.f32 %v3997, 0.0
    %v4183 = vmax.f32 %v3999, 0.0
    %v4184 = vmax.f32 %v4110, 0.0
    %v4185 = vmax.f32 %v4112, 0.0
    %v4186 = vmax.f32 %v4003, 0.0
    %v4187 = vmax.f32 %v4005, 0.0
    %v4188 = vmax.f32 %v4116, 0.0
    %v4189 = vmax.f32 %v4118, 0.0
    %v4190 = vmax.f32 %v4007, 0.0
    %v4191 = vmax.f32 %v4009, 0.0
    %v4192 = vmax.f32 %v4120, 0.0
    %v4193 = vmax.f32 %v4122, 0.0
    %v4194 = vmax.f32 %v4013, 0.0
    %v4195 = vmax.f32 %v4015, 0.0
    %v4196 = vmax.f32 %v4126, 0.0
    %v4197 = vmax.f32 %v4128, 0.0
    %v4198 = vmax.f32 %v4017, 0.0
    %v4199 = vmax.f32 %v4019, 0.0
    %v4200 = vmax.f32 %v4130, 0.0
    %v4201 = vmax.f32 %v4132, 0.0
    %v4202 = vmax.f32 %v4023, 0.0
    %v4203 = vmax.f32 %v4025, 0.0
    %v4204 = vmax.f32 %v4136, 0.0
    %v4205 = vmax.f32 %v4138, 0.0
    %v4206 = vmax.f32 %v4027, 0.0
    %v4207 = vmax.f32 %v4029, 0.0
    %v4208 = vmax.f32 %v4140, 0.0
    %v4209 = vmax.f32 %v4142, 0.0
    %v4210 = vmax.f32 %v4033, 0.0
    %v4211 = vmax.f32 %v4035, 0.0
    %v4212 = vmax.f32 %v4146, 0.0
    %v4213 = vmax.f32 %v4148, 0.0
    %v4214 = vmax.f32 %v4037, 0.0
    %v4215 = vmax.f32 %v4039, 0.0
    %v4216 = vmax.f32 %v4150, 0.0
    %v4217 = vmax.f32 %v4152, 0.0
    %v4218 = vpack.c.bf16 %v4158, %v4154
    %v4219 = vpack.c.bf16 %v4159, %v4155
    %v4220 = vpack.c.bf16 %v4160, %v4156
    %v4221 = vpack.c.bf16 %v4161, %v4157
    %v4222 = vpack.c.bf16 %v4166, %v4162
    %v4223 = vpack.c.bf16 %v4167, %v4163
    %v4224 = vpack.c.bf16 %v4168, %v4164
    %v4225 = vpack.c.bf16 %v4169, %v4165
    %v4226 = vpack.c.bf16 %v4174, %v4170
    %v4227 = vpack.c.bf16 %v4175, %v4171
    %v4228 = vpack.c.bf16 %v4176, %v4172
    %v4229 = vpack.c.bf16 %v4177, %v4173
    %v4230 = vpack.c.bf16 %v4182, %v4178
    %v4231 = vpack.c.bf16 %v4183, %v4179
    %v4232 = vpack.c.bf16 %v4184, %v4180
    %v4233 = vpack.c.bf16 %v4185, %v4181
    %v4234 = vpack.c.bf16 %v4190, %v4186
    %v4235 = vpack.c.bf16 %v4191, %v4187
    %v4236 = vpack.c.bf16 %v4192, %v4188
    %v4237 = vpack.c.bf16 %v4193, %v4189
    %v4238 = vpack.c.bf16 %v4198, %v4194
    %v4239 = vpack.c.bf16 %v4199, %v4195
    %v4240 = vpack.c.bf16 %v4200, %v4196
    %v4241 = vpack.c.bf16 %v4201, %v4197
    %v4242 = vpack.c.bf16 %v4206, %v4202
    %v4243 = vpack.c.bf16 %v4207, %v4203
    %v4244 = vpack.c.bf16 %v4208, %v4204
    %v4245 = vpack.c.bf16 %v4209, %v4205
    %v4246 = vpack.c.bf16 %v4214, %v4210
    %v4247 = vpack.c.bf16 %v4215, %v4211
    %v4248 = vpack.c.bf16 %v4216, %v4212
    %v4249 = vpack.c.bf16 %v4217, %v4213
    %v4250 = vld [vmem:[#allocation11] sm:$0xf]
    %v4251 = vld [vmem:[#allocation11 + $0x4] sm:$0xf]
    %v4252 = vld [vmem:[#allocation11 + $0x8] sm:$0xf]
    %v4253 = vld [vmem:[#allocation11 + $0xc] sm:$0xf]
    %v4254 = vld [vmem:[#allocation11 + $0x10] sm:$0xf]
    %v4255 = vld [vmem:[#allocation11 + $0x14] sm:$0xf]
    %v4256 = vld [vmem:[#allocation11 + $0x18] sm:$0xf]
    %v4257 = vld [vmem:[#allocation11 + $0x1c] sm:$0xf]
    %v4258 = vld [vmem:[#allocation11 + $0x20] sm:$0xf]
    %v4259 = vld [vmem:[#allocation11 + $0x24] sm:$0xf]
    %v4260 = vld [vmem:[#allocation11 + $0x28] sm:$0xf]
    %v4261 = vld [vmem:[#allocation11 + $0x2c] sm:$0xf]
    %v4262 = vld [vmem:[#allocation11 + $0x30] sm:$0xf]
    %v4263 = vld [vmem:[#allocation11 + $0x34] sm:$0xf]
    %v4264 = vld [vmem:[#allocation11 + $0x38] sm:$0xf]
    %v4265 = vld [vmem:[#allocation11 + $0x3c] sm:$0xf]
    %v4266 = vld [vmem:[#allocation11 + $0x40] sm:$0xf]
    %v4267 = vld [vmem:[#allocation11 + $0x44] sm:$0xf]
    %v4268 = vld [vmem:[#allocation11 + $0x48] sm:$0xf]
    %v4269 = vld [vmem:[#allocation11 + $0x4c] sm:$0xf]
    %v4270 = vld [vmem:[#allocation11 + $0x50] sm:$0xf]
    %v4271 = vld [vmem:[#allocation11 + $0x54] sm:$0xf]
    %v4272 = vld [vmem:[#allocation11 + $0x58] sm:$0xf]
    %v4273 = vld [vmem:[#allocation11 + $0x5c] sm:$0xf]
    %v4274 = vld [vmem:[#allocation11 + $0x60] sm:$0xf]
    %v4275 = vld [vmem:[#allocation11 + $0x64] sm:$0xf]
    %v4276 = vld [vmem:[#allocation11 + $0x68] sm:$0xf]
    %v4277 = vld [vmem:[#allocation11 + $0x6c] sm:$0xf]
    %v4278 = vld [vmem:[#allocation11 + $0x70] sm:$0xf]
    %v4279 = vld [vmem:[#allocation11 + $0x74] sm:$0xf]
    %v4280 = vld [vmem:[#allocation11 + $0x78] sm:$0xf]
    %v4281 = vld [vmem:[#allocation11 + $0x7c] sm:$0xf]
    %v4282 = vld [vmem:[#allocation11 + $0x80] sm:$0xf]
    %v4283 = vld [vmem:[#allocation11 + $0x84] sm:$0xf]
    %v4284 = vld [vmem:[#allocation11 + $0x88] sm:$0xf]
    %v4285 = vld [vmem:[#allocation11 + $0x8c] sm:$0xf]
    %v4286 = vld [vmem:[#allocation11 + $0x90] sm:$0xf]
    %v4287 = vld [vmem:[#allocation11 + $0x94] sm:$0xf]
    %v4288 = vld [vmem:[#allocation11 + $0x98] sm:$0xf]
    %v4289 = vld [vmem:[#allocation11 + $0x9c] sm:$0xf]
    %v4290 = vld [vmem:[#allocation11 + $0xa0] sm:$0xf]
    %v4291 = vld [vmem:[#allocation11 + $0xa4] sm:$0xf]
    %v4292 = vld [vmem:[#allocation11 + $0xa8] sm:$0xf]
    %v4293 = vld [vmem:[#allocation11 + $0xac] sm:$0xf]
    %v4294 = vld [vmem:[#allocation11 + $0xb0] sm:$0xf]
    %v4295 = vld [vmem:[#allocation11 + $0xb4] sm:$0xf]
    %v4296 = vld [vmem:[#allocation11 + $0xb8] sm:$0xf]
    %v4297 = vld [vmem:[#allocation11 + $0xbc] sm:$0xf]
    %v4298 = vld [vmem:[#allocation11 + $0xc0] sm:$0xf]
    %v4299 = vld [vmem:[#allocation11 + $0xc4] sm:$0xf]
    %v4300 = vld [vmem:[#allocation11 + $0xc8] sm:$0xf]
    %v4301 = vld [vmem:[#allocation11 + $0xcc] sm:$0xf]
    %v4302 = vld [vmem:[#allocation11 + $0xd0] sm:$0xf]
    %v4303 = vld [vmem:[#allocation11 + $0xd4] sm:$0xf]
    %v4304 = vld [vmem:[#allocation11 + $0xd8] sm:$0xf]
    %v4305 = vld [vmem:[#allocation11 + $0xdc] sm:$0xf]
    %v4306 = vld [vmem:[#allocation11 + $0xe0] sm:$0xf]
    %v4307 = vld [vmem:[#allocation11 + $0xe4] sm:$0xf]
    %v4308 = vld [vmem:[#allocation11 + $0xe8] sm:$0xf]
    %v4309 = vld [vmem:[#allocation11 + $0xec] sm:$0xf]
    %v4310 = vld [vmem:[#allocation11 + $0xf0] sm:$0xf]
    %v4311 = vld [vmem:[#allocation11 + $0xf4] sm:$0xf]
    %v4312 = vld [vmem:[#allocation11 + $0xf8] sm:$0xf]
    %v4313 = vld [vmem:[#allocation11 + $0xfc] sm:$0xf]
    %v4314 = vld [vmem:[%s12] sm:$0x1]
    %v4316 = vlaneseq
    %v4317 = vshrl.u32 %v4316, 7
    %v4318 = vsub.s32 0, %v4317
    %v4319 = vrot.slane %v4314, %v4318
    %v4385 = vunpack.c.l.b16 %v4250
    %v4386 = vunpack.c.l.b16 %v4251
    %v4387 = vunpack.c.l.b16 %v4252
    %v4388 = vunpack.c.l.b16 %v4253
    %v4389 = vunpack.c.l.b16 %v4254
    %v4390 = vunpack.c.l.b16 %v4255
    %v4391 = vunpack.c.l.b16 %v4256
    %v4392 = vunpack.c.l.b16 %v4257
    %v4393 = vunpack.c.l.b16 %v4258
    %v4394 = vunpack.c.l.b16 %v4259
    %v4395 = vunpack.c.l.b16 %v4260
    %v4396 = vunpack.c.l.b16 %v4261
    %v4397 = vunpack.c.l.b16 %v4262
    %v4398 = vunpack.c.l.b16 %v4263
    %v4399 = vunpack.c.l.b16 %v4264
    %v4400 = vunpack.c.l.b16 %v4265
    %v4401 = vunpack.c.l.b16 %v4266
    %v4402 = vunpack.c.l.b16 %v4267
    %v4403 = vunpack.c.l.b16 %v4268
    %v4404 = vunpack.c.l.b16 %v4269
    %v4405 = vunpack.c.l.b16 %v4270
    %v4406 = vunpack.c.l.b16 %v4271
    %v4407 = vunpack.c.l.b16 %v4272
    %v4408 = vunpack.c.l.b16 %v4273
    %v4409 = vunpack.c.l.b16 %v4274
    %v4410 = vunpack.c.l.b16 %v4275
    %v4411 = vunpack.c.l.b16 %v4276
    %v4412 = vunpack.c.l.b16 %v4277
    %v4413 = vunpack.c.l.b16 %v4278
    %v4414 = vunpack.c.l.b16 %v4279
    %v4415 = vunpack.c.l.b16 %v4280
    %v4416 = vunpack.c.l.b16 %v4281
    %v4417 = vunpack.c.l.b16 %v4282
    %v4418 = vunpack.c.l.b16 %v4283
    %v4419 = vunpack.c.l.b16 %v4284
    %v4420 = vunpack.c.l.b16 %v4285
    %v4421 = vunpack.c.l.b16 %v4286
    %v4422 = vunpack.c.l.b16 %v4287
    %v4423 = vunpack.c.l.b16 %v4288
    %v4424 = vunpack.c.l.b16 %v4289
    %v4425 = vunpack.c.l.b16 %v4290
    %v4426 = vunpack.c.l.b16 %v4291
    %v4427 = vunpack.c.l.b16 %v4292
    %v4428 = vunpack.c.l.b16 %v4293
    %v4429 = vunpack.c.l.b16 %v4294
    %v4430 = vunpack.c.l.b16 %v4295
    %v4431 = vunpack.c.l.b16 %v4296
    %v4432 = vunpack.c.l.b16 %v4297
    %v4433 = vunpack.c.l.b16 %v4298
    %v4434 = vunpack.c.l.b16 %v4299
    %v4435 = vunpack.c.l.b16 %v4300
    %v4436 = vunpack.c.l.b16 %v4301
    %v4437 = vunpack.c.l.b16 %v4302
    %v4438 = vunpack.c.l.b16 %v4303
    %v4439 = vunpack.c.l.b16 %v4304
    %v4440 = vunpack.c.l.b16 %v4305
    %v4441 = vunpack.c.l.b16 %v4306
    %v4442 = vunpack.c.l.b16 %v4307
    %v4443 = vunpack.c.l.b16 %v4308
    %v4444 = vunpack.c.l.b16 %v4309
    %v4445 = vunpack.c.l.b16 %v4310
    %v4446 = vunpack.c.l.b16 %v4311
    %v4447 = vunpack.c.l.b16 %v4312
    %v4448 = vunpack.c.l.b16 %v4313
    %v4449 = vpack.c.b16 %v4386, %v4385
    %v4450 = vpack.c.b16 %v4388, %v4387
    %v4451 = vpack.c.b16 %v4390, %v4389
    %v4452 = vpack.c.b16 %v4392, %v4391
    %v4453 = vpack.c.b16 %v4394, %v4393
    %v4454 = vpack.c.b16 %v4396, %v4395
    %v4455 = vpack.c.b16 %v4398, %v4397
    %v4456 = vpack.c.b16 %v4400, %v4399
    %v4457 = vpack.c.b16 %v4402, %v4401
    %v4458 = vpack.c.b16 %v4404, %v4403
    %v4459 = vpack.c.b16 %v4406, %v4405
    %v4460 = vpack.c.b16 %v4408, %v4407
    %v4461 = vpack.c.b16 %v4410, %v4409
    %v4462 = vpack.c.b16 %v4412, %v4411
    %v4463 = vpack.c.b16 %v4414, %v4413
    %v4464 = vpack.c.b16 %v4416, %v4415
    %v4465 = vpack.c.b16 %v4418, %v4417
    %v4466 = vpack.c.b16 %v4420, %v4419
    %v4467 = vpack.c.b16 %v4422, %v4421
    %v4468 = vpack.c.b16 %v4424, %v4423
    %v4469 = vpack.c.b16 %v4426, %v4425
    %v4470 = vpack.c.b16 %v4428, %v4427
    %v4471 = vpack.c.b16 %v4430, %v4429
    %v4472 = vpack.c.b16 %v4432, %v4431
    %v4473 = vpack.c.b16 %v4434, %v4433
    %v4474 = vpack.c.b16 %v4436, %v4435
    %v4475 = vpack.c.b16 %v4438, %v4437
    %v4476 = vpack.c.b16 %v4440, %v4439
    %v4477 = vpack.c.b16 %v4442, %v4441
    %v4478 = vpack.c.b16 %v4444, %v4443
    %v4479 = vpack.c.b16 %v4446, %v4445
    %v4480 = vpack.c.b16 %v4448, %v4447
    %4513 = vmatprep.subr.bf16.mxu0 0
    %4514 = vmatpush1.bf16.msra.mxu0 %v4456
    %4515 = vmatprep.subr.bf16.mxu0 0
    %4516 = vmatpush1.bf16.msra.mxu0 %v4455
    %4517 = vmatprep.subr.bf16.mxu0 0
    %4518 = vmatpush1.bf16.msra.mxu0 %v4454
    %4519 = vmatprep.subr.bf16.mxu0 0
    %4520 = vmatpush1.bf16.msra.mxu0 %v4453
    %4521 = vmatprep.subr.bf16.mxu0 0
    %4522 = vmatpush1.bf16.msra.mxu0 %v4452
    %4523 = vmatprep.subr.bf16.mxu0 0
    %4524 = vmatpush1.bf16.msra.mxu0 %v4451
    %4525 = vmatprep.subr.bf16.mxu0 0
    %4526 = vmatpush1.bf16.msra.mxu0 %v4450
    %4527 = vmatprep.subr.bf16.mxu0 0
    %4528 = vmatpush1.bf16.msra.mxu0 %v4449
    %4529 = vmatprep.subr.bf16.mxu0 0
    %4530 = vmatpush2.bf16.msra.mxu0 %v4464
    %4531 = vmatprep.subr.bf16.mxu0 0
    %4532 = vmatpush2.bf16.msra.mxu0 %v4463
    %4533 = vmatprep.subr.bf16.mxu0 0
    %4534 = vmatpush2.bf16.msra.mxu0 %v4462
    %4535 = vmatprep.subr.bf16.mxu0 0
    %4536 = vmatpush2.bf16.msra.mxu0 %v4461
    %4537 = vmatprep.subr.bf16.mxu0 0
    %4538 = vmatpush2.bf16.msra.mxu0 %v4460
    %4539 = vmatprep.subr.bf16.mxu0 0
    %4540 = vmatpush2.bf16.msra.mxu0 %v4459
    %4541 = vmatprep.subr.bf16.mxu0 0
    %4542 = vmatpush2.bf16.msra.mxu0 %v4458
    %4543 = vmatprep.subr.bf16.mxu0 0
    %4544 = vmatpush2.bf16.msra.mxu0 %v4457
    %4545 = vmatprep.mubr.bf16.mxu0 %v4219
    %4546 = vmatmul.mubr.bf16.gmra.mxu0 %v4218
    %v4547 = vpop.f32.mrf.mxu0
    %v4548 = vadd.f32 %v4319, %v4547
    %v4549 = vpop.f32.mrf.mxu0
    %v4550 = vpop.f32.mrf.mxu0
    %v4551 = vadd.f32 %v4319, %v4550
    %v4552 = vpop.f32.mrf.mxu0
    %4553 = vmatprep.mubr.bf16.mxu0 %v4223
    %4554 = vmatmul.mubr.bf16.gmra.mxu0 %v4222
    %v4555 = vpop.f32.mrf.mxu0
    %v4556 = vadd.f32 %v4319, %v4555
    %v4557 = vpop.f32.mrf.mxu0
    %v4558 = vpop.f32.mrf.mxu0
    %v4559 = vadd.f32 %v4319, %v4558
    %v4560 = vpop.f32.mrf.mxu0
    %4561 = vmatprep.mubr.bf16.mxu0 %v4227
    %4562 = vmatmul.mubr.bf16.gmra.mxu0 %v4226
    %v4563 = vpop.f32.mrf.mxu0
    %v4564 = vadd.f32 %v4319, %v4563
    %v4565 = vpop.f32.mrf.mxu0
    %v4566 = vpop.f32.mrf.mxu0
    %v4567 = vadd.f32 %v4319, %v4566
    %v4568 = vpop.f32.mrf.mxu0
    %4569 = vmatprep.mubr.bf16.mxu0 %v4231
    %4570 = vmatmul.mubr.bf16.gmra.mxu0 %v4230
    %v4571 = vpop.f32.mrf.mxu0
    %v4572 = vadd.f32 %v4319, %v4571
    %v4573 = vpop.f32.mrf.mxu0
    %v4574 = vpop.f32.mrf.mxu0
    %v4575 = vadd.f32 %v4319, %v4574
    %v4576 = vpop.f32.mrf.mxu0
    %4577 = vmatprep.mubr.bf16.mxu0 %v4235
    %4578 = vmatmul.mubr.bf16.gmra.mxu0 %v4234
    %v4579 = vpop.f32.mrf.mxu0
    %v4580 = vadd.f32 %v4319, %v4579
    %v4581 = vpop.f32.mrf.mxu0
    %v4582 = vpop.f32.mrf.mxu0
    %v4583 = vadd.f32 %v4319, %v4582
    %v4584 = vpop.f32.mrf.mxu0
    %4585 = vmatprep.mubr.bf16.mxu0 %v4239
    %4586 = vmatmul.mubr.bf16.gmra.mxu0 %v4238
    %v4587 = vpop.f32.mrf.mxu0
    %v4588 = vadd.f32 %v4319, %v4587
    %v4589 = vpop.f32.mrf.mxu0
    %v4590 = vpop.f32.mrf.mxu0
    %v4591 = vadd.f32 %v4319, %v4590
    %v4592 = vpop.f32.mrf.mxu0
    %4593 = vmatprep.mubr.bf16.mxu0 %v4243
    %4594 = vmatmul.mubr.bf16.gmra.mxu0 %v4242
    %v4595 = vpop.f32.mrf.mxu0
    %v4596 = vadd.f32 %v4319, %v4595
    %v4597 = vpop.f32.mrf.mxu0
    %v4598 = vpop.f32.mrf.mxu0
    %v4599 = vadd.f32 %v4319, %v4598
    %v4600 = vpop.f32.mrf.mxu0
    %4601 = vmatprep.mubr.bf16.mxu0 %v4247
    %4602 = vmatmul.mubr.bf16.gmra.mxu0 %v4246
    %v4603 = vpop.f32.mrf.mxu0
    %v4604 = vadd.f32 %v4319, %v4603
    %v4605 = vpop.f32.mrf.mxu0
    %v4606 = vpop.f32.mrf.mxu0
    %v4607 = vadd.f32 %v4319, %v4606
    %v4608 = vpop.f32.mrf.mxu0
    %4609 = vdwg.mxu0
    %4610 = vmatprep.subr.bf16.mxu0 0
    %4611 = vmatpush1.bf16.msra.mxu0 %v4472
    %4612 = vmatprep.subr.bf16.mxu0 0
    %4613 = vmatpush1.bf16.msra.mxu0 %v4471
    %4614 = vmatprep.subr.bf16.mxu0 0
    %4615 = vmatpush1.bf16.msra.mxu0 %v4470
    %4616 = vmatprep.subr.bf16.mxu0 0
    %4617 = vmatpush1.bf16.msra.mxu0 %v4469
    %4618 = vmatprep.subr.bf16.mxu0 0
    %4619 = vmatpush1.bf16.msra.mxu0 %v4468
    %4620 = vmatprep.subr.bf16.mxu0 0
    %4621 = vmatpush1.bf16.msra.mxu0 %v4467
    %4622 = vmatprep.subr.bf16.mxu0 0
    %4623 = vmatpush1.bf16.msra.mxu0 %v4466
    %4624 = vmatprep.subr.bf16.mxu0 0
    %4625 = vmatpush1.bf16.msra.mxu0 %v4465
    %4626 = vmatprep.subr.bf16.mxu0 0
    %4627 = vmatpush2.bf16.msra.mxu0 %v4480
    %4628 = vmatprep.subr.bf16.mxu0 0
    %4629 = vmatpush2.bf16.msra.mxu0 %v4479
    %4630 = vmatprep.subr.bf16.mxu0 0
    %4631 = vmatpush2.bf16.msra.mxu0 %v4478
    %4632 = vmatprep.subr.bf16.mxu0 0
    %4633 = vmatpush2.bf16.msra.mxu0 %v4477
    %4634 = vmatprep.subr.bf16.mxu0 0
    %4635 = vmatpush2.bf16.msra.mxu0 %v4476
    %4636 = vmatprep.subr.bf16.mxu0 0
    %4637 = vmatpush2.bf16.msra.mxu0 %v4475
    %4638 = vmatprep.subr.bf16.mxu0 0
    %4639 = vmatpush2.bf16.msra.mxu0 %v4474
    %4640 = vmatprep.subr.bf16.mxu0 0
    %4641 = vmatpush2.bf16.msra.mxu0 %v4473
    %4642 = vmatprep.mubr.bf16.mxu0 %v4221
    %4643 = vmatmul.mubr.bf16.gmra.mxu0 %v4220
    %v4644 = vpop.f32.mrf.mxu0
    %v4645 = vadd.f32 %v4548, %v4644
    %v4646 = vpop.f32.mrf.mxu0
    %v4647 = vpop.f32.mrf.mxu0
    %v4648 = vadd.f32 %v4551, %v4647
    %v4649 = vpop.f32.mrf.mxu0
    %4650 = vmatprep.mubr.bf16.mxu0 %v4225
    %4651 = vmatmul.mubr.bf16.gmra.mxu0 %v4224
    %v4652 = vpop.f32.mrf.mxu0
    %v4653 = vadd.f32 %v4556, %v4652
    %v4654 = vpop.f32.mrf.mxu0
    %v4655 = vpop.f32.mrf.mxu0
    %v4656 = vadd.f32 %v4559, %v4655
    %v4657 = vpop.f32.mrf.mxu0
    %4658 = vmatprep.mubr.bf16.mxu0 %v4229
    %4659 = vmatmul.mubr.bf16.gmra.mxu0 %v4228
    %v4660 = vpop.f32.mrf.mxu0
    %v4661 = vadd.f32 %v4564, %v4660
    %v4662 = vpop.f32.mrf.mxu0
    %v4663 = vpop.f32.mrf.mxu0
    %v4664 = vadd.f32 %v4567, %v4663
    %v4665 = vpop.f32.mrf.mxu0
    %4666 = vmatprep.mubr.bf16.mxu0 %v4233
    %4667 = vmatmul.mubr.bf16.gmra.mxu0 %v4232
    %v4668 = vpop.f32.mrf.mxu0
    %v4669 = vadd.f32 %v4572, %v4668
    %v4670 = vpop.f32.mrf.mxu0
    %v4671 = vpop.f32.mrf.mxu0
    %v4672 = vadd.f32 %v4575, %v4671
    %v4673 = vpop.f32.mrf.mxu0
    %4674 = vmatprep.mubr.bf16.mxu0 %v4237
    %4675 = vmatmul.mubr.bf16.gmra.mxu0 %v4236
    %v4676 = vpop.f32.mrf.mxu0
    %v4677 = vadd.f32 %v4580, %v4676
    %v4678 = vpop.f32.mrf.mxu0
    %v4679 = vpop.f32.mrf.mxu0
    %v4680 = vadd.f32 %v4583, %v4679
    %v4681 = vpop.f32.mrf.mxu0
    %4682 = vmatprep.mubr.bf16.mxu0 %v4241
    %4683 = vmatmul.mubr.bf16.gmra.mxu0 %v4240
    %v4684 = vpop.f32.mrf.mxu0
    %v4685 = vadd.f32 %v4588, %v4684
    %v4686 = vpop.f32.mrf.mxu0
    %v4687 = vpop.f32.mrf.mxu0
    %v4688 = vadd.f32 %v4591, %v4687
    %v4689 = vpop.f32.mrf.mxu0
    %4690 = vmatprep.mubr.bf16.mxu0 %v4245
    %4691 = vmatmul.mubr.bf16.gmra.mxu0 %v4244
    %v4692 = vpop.f32.mrf.mxu0
    %v4693 = vadd.f32 %v4596, %v4692
    %v4694 = vpop.f32.mrf.mxu0
    %v4695 = vpop.f32.mrf.mxu0
    %v4696 = vadd.f32 %v4599, %v4695
    %v4697 = vpop.f32.mrf.mxu0
    %4698 = vmatprep.mubr.bf16.mxu0 %v4249
    %4699 = vmatmul.mubr.bf16.gmra.mxu0 %v4248
    %v4700 = vpop.f32.mrf.mxu0
    %v4701 = vadd.f32 %v4604, %v4700
    %v4702 = vpop.f32.mrf.mxu0
    %v4703 = vpop.f32.mrf.mxu0
    %v4704 = vadd.f32 %v4607, %v4703
    %v4705 = vpop.f32.mrf.mxu0
    %4706 = vdwg.mxu0
    %v4707 = vadd.f32 %v3468, %v4645
    %v4708 = vadd.f32 %v3469, %v4648
    %v4709 = vadd.f32 %v3470, %v4653
    %v4710 = vadd.f32 %v3471, %v4656
    %v4711 = vadd.f32 %v3472, %v4661
    %v4712 = vadd.f32 %v3473, %v4664
    %v4713 = vadd.f32 %v3474, %v4669
    %v4714 = vadd.f32 %v3475, %v4672
    %v4715 = vadd.f32 %v3476, %v4677
    %v4716 = vadd.f32 %v3477, %v4680
    %v4717 = vadd.f32 %v3478, %v4685
    %v4718 = vadd.f32 %v3479, %v4688
    %v4719 = vadd.f32 %v3480, %v4693
    %v4720 = vadd.f32 %v3481, %v4696
    %v4721 = vadd.f32 %v3482, %v4701
    %v4722 = vadd.f32 %v3483, %v4704
    %4723 = vst [vmem:[#allocation13] sm:$0xff] %v4707
    %4724 = vst [vmem:[#allocation13 + $0x8] sm:$0xff] %v4708
    %4725 = vst [vmem:[#allocation13 + $0x10] sm:$0xff] %v4709
    %4726 = vst [vmem:[#allocation13 + $0x18] sm:$0xff] %v4710
    %4727 = vst [vmem:[#allocation13 + $0x20] sm:$0xff] %v4711
    %4728 = vst [vmem:[#allocation13 + $0x28] sm:$0xff] %v4712
    %4729 = vst [vmem:[#allocation13 + $0x30] sm:$0xff] %v4713
    %4730 = vst [vmem:[#allocation13 + $0x38] sm:$0xff] %v4714
    %4731 = vst [vmem:[#allocation13 + $0x40] sm:$0xff] %v4715
    %4732 = vst [vmem:[#allocation13 + $0x48] sm:$0xff] %v4716
    %4733 = vst [vmem:[#allocation13 + $0x50] sm:$0xff] %v4717
    %4734 = vst [vmem:[#allocation13 + $0x58] sm:$0xff] %v4718
    %4735 = vst [vmem:[#allocation13 + $0x60] sm:$0xff] %v4719
    %4736 = vst [vmem:[#allocation13 + $0x68] sm:$0xff] %v4720
    %4737 = vst [vmem:[#allocation13 + $0x70] sm:$0xff] %v4721
    %4738 = vst [vmem:[#allocation13 + $0x78] sm:$0xff] %v4722
    // Predicated region
    $region78: #{tpu_custom_call.1} parent=1 // pred_check
      _
    $region79: #{tpu_custom_call.1} parent=1 // pred_check_branch
      %4740 = sbr.rel (0) target = $region81
    $region80: #{tpu_custom_call.1} parent=1 // pred_region
      %s4742 = ssub.s32 2048, 2048
      %4743 = vsyncadd [#allocation4], %s4742
      %s4744 = sshll.u32 [#allocation13], 4
      %s4745 = int_to_ptr.vmem [resolvable:$true] %s4744
      %4750 = dma.vmem_to_hbm [thread:$0]  %s4745, 2048, %s13, [#allocation4], 128, 128, 8
    $region81: #{tpu_custom_call.1} parent=1 // pred_fallthru
      _
    // Predicated region
    $region82: #{tpu_custom_call.1} parent=1 // pred_check
      _
    $region83: #{tpu_custom_call.1} parent=1 // pred_check_branch
      %4752 = sbr.rel (0) target = $region85
    $region84: #{tpu_custom_call.1} parent=1 // pred_region
      %4753 = dma.done [#allocation4], 2048
    $region85: #{tpu_custom_call.1} parent=1 // pred_fallthru
      _
    %4754 = vsyncpa [#allocation3], 1
    %4755 = vsyncpa [#allocation6], 1
    %4756 = vsyncpa [#allocation9], 1
    %4757 = vsyncpa [#allocation12], 1
    %4758 = vsyncpa [#allocation4], 1

</llo_original>
